<compile_context>
chip_gen: v6e
topology: v6e:2x2x1
jax: 0.10.0
libtpu: 0.0.40
codegen_flags: <defaults>
</compile_context>

<pallas_src>
import functools

import jax
import jax.numpy as jnp
from jax import lax
from jax.experimental import pallas as pl
from jax.experimental.pallas import tpu as pltpu


def pixel_attention_kernel(x_ref, w_ref, o_ref, *, tb, n, approx):
    # x_ref: (C, TB*N)    w_ref: (2C, C) = [Wq; Wk; Wv]    o_ref: (C, TB*N)
    c = x_ref.shape[0]
    ch = c // 2
    cdtype = x_ref.dtype

    x = x_ref[...]
    w = w_ref[...]

    # Fused q/k/v projection: a single lane-dense MXU matmul, f32 accumulation.
    qkv = jnp.dot(w, x, preferred_element_type=jnp.float32)          # (2C, TB*N)
    # Per-batch matmuls consume compute-dtype operands (bf16 path runs the MXU
    # at full rate on v6e/v7x); accumulation stays f32 via preferred_element_type.
    qkv = qkv.astype(cdtype)

    if n % 128 == 0:
        # Lane-aligned path: per-batch slices and stores land on vreg
        # boundaries (unmasked vst); storing inside the loop bounds live ranges.
        for b in range(tb):
            lo = b * n
            qkv_b = qkv[:, lo:lo + n]
            qb, kb, vb = qkv_b[:ch, :], qkv_b[ch:c, :], qkv_b[c:, :]
            # attention = q @ k^T, contracting over pixels (no explicit k.T).
            att = lax.dot_general(qb, kb, (((1,), (1,)), ((), ())),
                                  preferred_element_type=jnp.float32)
            m = jnp.max(att, axis=0, keepdims=True)
            e = jnp.exp(att - m)
            p = e * pl.reciprocal(jnp.sum(e, axis=0, keepdims=True), approx=approx)
            out_b = jnp.dot(vb, p.astype(cdtype), preferred_element_type=jnp.float32)
            o_ref[:, lo:lo + n] = out_b.astype(o_ref.dtype)
    else:
        # Narrow-N path (shipped case, N < 128): avoid masked partial stores
        # and tb tiny softmax reductions.  One lane window of qkv per batch
        # (q/k/v sublane splits at multiples of 8 are free vreg selections),
        # softmax batched across the lane-concatenated att blocks, and a
        # single full-width output store per grid step.
        atts, vs = [], []
        for b in range(tb):
            lo = b * n
            qkv_b = qkv[:, lo:lo + n]                 # one lane window / batch
            vs.append(qkv_b[c:, :])
            atts.append(lax.dot_general(qkv_b[:ch, :], qkv_b[ch:c, :],
                                        (((1,), (1,)), ((), ())),
                                        preferred_element_type=jnp.float32))
        att = jnp.concatenate(atts, axis=1)            # (ch, tb*ch)

        # nn.Softmax(dim=1) on the batched (B, c, c) tensor == softmax over
        # axis 0 of each per-batch (c, c) block; one full-vreg pass for all tb.
        m = jnp.max(att, axis=0, keepdims=True)
        e = jnp.exp(att - m)
        p = e * pl.reciprocal(jnp.sum(e, axis=0, keepdims=True), approx=approx)
        p = p.astype(cdtype)

        # PA_x = v @ attention -> (C, ch) == (C, N) since N == ch; concatenate
        # along lanes and store once (full-width, unmasked).
        outs = [jnp.dot(vs[b], p[:, b * ch:(b + 1) * ch],
                        preferred_element_type=jnp.float32)
                for b in range(tb)]
        o_ref[...] = jnp.concatenate(outs, axis=1).astype(o_ref.dtype)


def _vmem_capacity_bytes():
    # Generation-aware VMEM cap (v5e/v6e: 128 MiB physical, v7x: 64 MiB / TC).
    try:
        cap = getattr(pltpu.get_tpu_info(), "vmem_capacity_bytes", None)
        if cap:
            return int(cap)
    except Exception:
        pass
    return 64 * 1024 * 1024


def pixel_attention_slab(xf, w_all, *, batch, n, out_dtype, tb=None):
    """Packed entry point: xf is the lane-dense (C, batch*n) slab, w_all is
    [Wq; Wk; Wv] of shape (2C, C).  Returns the (C, batch*n) output slab.
    Layout-aware callers should use this directly and skip the NCHW repack."""
    C, total = xf.shape
    assert total == batch * n
    ch = C // 2
    assert n == ch, "this attention chain is only well-formed when H*W == band//2"

    in_itemsize = jnp.dtype(xf.dtype).itemsize
    out_itemsize = jnp.dtype(out_dtype).itemsize
    vmem_cap = _vmem_capacity_bytes()

    def step_vmem_bytes(t):
        width = t * n
        blocks = 2 * C * width * in_itemsize        # double-buffered x tile
        blocks += 2 * C * width * out_itemsize      # double-buffered out tile
        blocks += 2 * 2 * C * C * in_itemsize       # fused [Wq;Wk;Wv] (tiny)
        interm = 2 * C * width * 4                  # f32 qkv accumulator
        interm += 2 * C * width * in_itemsize       # compute-dtype qkv copy
        interm += C * width * 4                     # f32 att / concatenated out
        return blocks + interm

    if tb is None:
        budget = vmem_cap // 2
        divisors = [t for t in range(1, batch + 1) if batch % t == 0]
        # A tile that does not span the whole batch must keep the block lane
        # width a multiple of 128 (BlockSpec (8,128) constraint).
        legal = [t for t in divisors if t == batch or (t * n) % 128 == 0]

        def reg_ok(t):
            # The narrow-N path holds the concatenated f32 output in registers.
            return (n % 128 == 0) or (C * t * n * 4 <= 128 * 1024)

        fitting = [t for t in legal if step_vmem_bytes(t) <= budget and reg_ok(t)]
        if fitting:
            tb = max(fitting)
        else:
            # Nothing fits the budget: pick the layout-legal tile with the
            # smallest footprint (never blindly fall back to the whole batch)
            # and rely on the raised vmem_limit_bytes below.
            tb = min(legal, key=step_vmem_bytes)
    assert batch % tb == 0
    assert tb == batch or (tb * n) % 128 == 0

    vmem_limit = int(min(vmem_cap, max(2 * step_vmem_bytes(tb), 16 * 1024 * 1024)))

    flops = batch * (2 * (2 * C) * C * n + 2 * ch * ch * n + 2 * C * ch * n)
    transcendentals = batch * (ch * ch + ch)
    bytes_accessed = (2 * C * C * in_itemsize
                      + batch * C * n * in_itemsize
                      + batch * C * n * out_itemsize)

    approx = jnp.dtype(xf.dtype) != jnp.dtype(jnp.float32)
    kernel = functools.partial(pixel_attention_kernel, tb=tb, n=n, approx=approx)

    return pl.pallas_call(
        kernel,
        out_shape=jax.ShapeDtypeStruct((C, batch * n), out_dtype),
        grid_spec=pltpu.PrefetchScalarGridSpec(
            num_scalar_prefetch=0,
            grid=(batch // tb,),
            in_specs=[
                pl.BlockSpec((C, tb * n), lambda i: (0, i)),      # x slab tile
                pl.BlockSpec((2 * C, C), lambda i: (0, 0)),       # [Wq;Wk;Wv]
            ],
            out_specs=pl.BlockSpec((C, tb * n), lambda i: (0, i)),
        ),
        compiler_params=pltpu.CompilerParams(
            dimension_semantics=("parallel",),
            vmem_limit_bytes=vmem_limit),
        cost_estimate=pl.CostEstimate(flops=flops,
                                      transcendentals=transcendentals,
                                      bytes_accessed=bytes_accessed),
    )(xf, w_all)


def pixel_attention(x, wq, wk, wv, *, tb=None, compute_dtype=None):
    """x: (B, C, H, W) NCHW.  wq/wk: (C//2, C), wv: (C, C).  Returns (B, C, H, W)."""
    B, C, H, W = x.shape
    N = H * W
    assert N == C // 2, "this attention chain is only well-formed when H*W == band//2"

    in_dtype = jnp.dtype(compute_dtype) if compute_dtype is not None else jnp.dtype(x.dtype)

    # TODO(synk): this NCHW -> (C, B*N) repack and its inverse are two extra
    # HBM passes as separate XLA ops; callers that can produce/consume the
    # packed layout should call pixel_attention_slab directly.
    xf = x.reshape(B, C, N).transpose(1, 0, 2).reshape(C, B * N).astype(in_dtype)
    w_all = jnp.concatenate([wq, wk, wv], axis=0).astype(in_dtype)    # (2C, C)

    out = pixel_attention_slab(xf, w_all, batch=B, n=N, out_dtype=x.dtype, tb=tb)
    return out.reshape(C, B, N).transpose(1, 0, 2).reshape(B, C, H, W)


def pixel_attention_reference(x, wq, wk, wv):
    """Plain-JAX reference of the same op sequence (for a correctness check)."""
    B, C, H, W = x.shape
    N = H * W
    xf = x.reshape(B, C, N)
    q = jnp.einsum("oc,bcn->bon", wq, xf)                 # (B, C//2, N)
    k = jnp.einsum("oc,bcn->bon", wk, xf)                 # (B, C//2, N)
    v = jnp.einsum("oc,bcn->bon", wv, xf)                 # (B, C,    N)
    att = jnp.einsum("bin,bjn->bij", q, k)                # (B, C//2, C//2)
    att = jax.nn.softmax(att, axis=1)                     # softmax(dim=1)
    o = jnp.einsum("bcn,bnm->bcm", v, att)                # (B, C, C//2) == (B, C, N)
    return o.reshape(B, C, H, W)


if __name__ == "__main__":
    root = jax.random.PRNGKey(0)

    def make_inputs(key, band, batch, H, W):
        kx, kq, kk, kv = jax.random.split(key, 4)
        x = jax.random.normal(kx, (batch, band, H, W), dtype=jnp.float32)
        # deterministic kaiming-uniform-style init for the 1x1 convs (bias=False)
        bound = 1.0 / (band ** 0.5)
        wq = jax.random.uniform(kq, (band // 2, band), jnp.float32, -bound, bound)
        wk = jax.random.uniform(kk, (band // 2, band), jnp.float32, -bound, bound)
        wv = jax.random.uniform(kv, (band, band), jnp.float32, -bound, bound)
        return x, wq, wk, wv

    k1, k2 = jax.random.split(root)

    # Shipped case: band=32, H*W=16 == band//2, batch=16.  N < 128 -> single
    # grid step (tb = B), lane-concatenated softmax + one full-width store.
    x, wq, wk, wv = make_inputs(k1, band=32, batch=16, H=4, W=4)
    ref = pixel_attention_reference(x, wq, wk, wv)

    out = jax.block_until_ready(pixel_attention(x, wq, wk, wv))
    assert out.shape == x.shape
    assert jnp.allclose(out, ref, atol=1e-4, rtol=1e-4)

    # bf16 compute path (v6e/v7x full-rate MXU): f32 accumulation + f32
    # softmax inside, EUP approx reciprocal.
    out_bf16 = jax.block_until_ready(
        pixel_attention(x, wq, wk, wv, compute_dtype=jnp.bfloat16))
    assert out_bf16.shape == x.shape
    assert jnp.allclose(out_bf16, ref, atol=1e-1, rtol=1e-1)

    # Lane-aligned case: band=256, H*W=128 == band//2, batch=4.  N % 128 == 0
    # exercises the per-batch direct-store path (unmasked, vreg-aligned).
    x2, wq2, wk2, wv2 = make_inputs(k2, band=256, batch=4, H=16, W=8)
    ref2 = pixel_attention_reference(x2, wq2, wk2, wv2)
    out2 = jax.block_until_ready(pixel_attention(x2, wq2, wk2, wv2))
    assert out2.shape == x2.shape
    assert jnp.allclose(out2, ref2, atol=1e-3, rtol=1e-3)

    print("KERNEL_OK")
</pallas_src>

<mosaic_0001>
module attributes {stable_mosaic.version = 11 : i64} {
  func.func @pixel_attention_kernel(%arg0: i32, %arg1: memref<32x256xf32, #tpu.memory_space<vmem>>, %arg2: memref<64x32xf32, #tpu.memory_space<vmem>>, %arg3: memref<32x256xf32, #tpu.memory_space<vmem>>) attributes {dimension_semantics = [#tpu.dimension_semantics<parallel>], iteration_bounds = array<i64: 1>, scalar_prefetch = 0 : i64, scratch_operands = 0 : i64, tpu.core_type = #tpu.core_type<tc>, window_params = [{transform_indices = @transform_0, window_bounds = array<i64: 32, 256>}, {pipeline_mode = #tpu.pipeline_mode<synchronous>, transform_indices = @transform_1, window_bounds = array<i64: 64, 32>}, {transform_indices = @transform_2, window_bounds = array<i64: 32, 256>}]} {
    %c0 = arith.constant 0 : index
    %c0_0 = arith.constant 0 : index
    %0 = vector.load %arg1[%c0, %c0_0] : memref<32x256xf32, #tpu.memory_space<vmem>>, vector<32x256xf32>
    %c0_1 = arith.constant 0 : index
    %c0_2 = arith.constant 0 : index
    %1 = vector.load %arg2[%c0_1, %c0_2] : memref<64x32xf32, #tpu.memory_space<vmem>>, vector<64x32xf32>
    %cst = arith.constant dense<0.000000e+00> : vector<64x256xf32>
    %2 = tpu.matmul %1, %0, %cst {dimension_numbers = #tpu.dot_dimension_numbers<[1], [0], [0], [1], [0, 0, 1, 1], [], []>} : vector<64x32xf32>, vector<32x256xf32>, vector<64x256xf32> -> vector<64x256xf32>
    %3 = vector.extract_strided_slice %2 {offsets = [0, 0], sizes = [64, 16], strides = [1, 1]} : vector<64x256xf32> to vector<64x16xf32>
    %4 = vector.extract_strided_slice %3 {offsets = [32, 0], sizes = [32, 16], strides = [1, 1]} : vector<64x16xf32> to vector<32x16xf32>
    %5 = vector.extract_strided_slice %3 {offsets = [0, 0], sizes = [16, 16], strides = [1, 1]} : vector<64x16xf32> to vector<16x16xf32>
    %6 = vector.extract_strided_slice %3 {offsets = [16, 0], sizes = [16, 16], strides = [1, 1]} : vector<64x16xf32> to vector<16x16xf32>
    %cst_3 = arith.constant dense<0.000000e+00> : vector<16x16xf32>
    %7 = tpu.matmul %5, %6, %cst_3 {dimension_numbers = #tpu.dot_dimension_numbers<[1], [1], [0], [0], [0, 0, 1, 0], [], []>} : vector<16x16xf32>, vector<16x16xf32>, vector<16x16xf32> -> vector<16x16xf32>
    %8 = vector.extract_strided_slice %2 {offsets = [0, 16], sizes = [64, 16], strides = [1, 1]} : vector<64x256xf32> to vector<64x16xf32>
    %9 = vector.extract_strided_slice %8 {offsets = [32, 0], sizes = [32, 16], strides = [1, 1]} : vector<64x16xf32> to vector<32x16xf32>
    %10 = vector.extract_strided_slice %8 {offsets = [0, 0], sizes = [16, 16], strides = [1, 1]} : vector<64x16xf32> to vector<16x16xf32>
    %11 = vector.extract_strided_slice %8 {offsets = [16, 0], sizes = [16, 16], strides = [1, 1]} : vector<64x16xf32> to vector<16x16xf32>
    %cst_4 = arith.constant dense<0.000000e+00> : vector<16x16xf32>
    %12 = tpu.matmul %10, %11, %cst_4 {dimension_numbers = #tpu.dot_dimension_numbers<[1], [1], [0], [0], [0, 0, 1, 0], [], []>} : vector<16x16xf32>, vector<16x16xf32>, vector<16x16xf32> -> vector<16x16xf32>
    %13 = vector.extract_strided_slice %2 {offsets = [0, 32], sizes = [64, 16], strides = [1, 1]} : vector<64x256xf32> to vector<64x16xf32>
    %14 = vector.extract_strided_slice %13 {offsets = [32, 0], sizes = [32, 16], strides = [1, 1]} : vector<64x16xf32> to vector<32x16xf32>
    %15 = vector.extract_strided_slice %13 {offsets = [0, 0], sizes = [16, 16], strides = [1, 1]} : vector<64x16xf32> to vector<16x16xf32>
    %16 = vector.extract_strided_slice %13 {offsets = [16, 0], sizes = [16, 16], strides = [1, 1]} : vector<64x16xf32> to vector<16x16xf32>
    %cst_5 = arith.constant dense<0.000000e+00> : vector<16x16xf32>
    %17 = tpu.matmul %15, %16, %cst_5 {dimension_numbers = #tpu.dot_dimension_numbers<[1], [1], [0], [0], [0, 0, 1, 0], [], []>} : vector<16x16xf32>, vector<16x16xf32>, vector<16x16xf32> -> vector<16x16xf32>
    %18 = vector.extract_strided_slice %2 {offsets = [0, 48], sizes = [64, 16], strides = [1, 1]} : vector<64x256xf32> to vector<64x16xf32>
    %19 = vector.extract_strided_slice %18 {offsets = [32, 0], sizes = [32, 16], strides = [1, 1]} : vector<64x16xf32> to vector<32x16xf32>
    %20 = vector.extract_strided_slice %18 {offsets = [0, 0], sizes = [16, 16], strides = [1, 1]} : vector<64x16xf32> to vector<16x16xf32>
    %21 = vector.extract_strided_slice %18 {offsets = [16, 0], sizes = [16, 16], strides = [1, 1]} : vector<64x16xf32> to vector<16x16xf32>
    %cst_6 = arith.constant dense<0.000000e+00> : vector<16x16xf32>
    %22 = tpu.matmul %20, %21, %cst_6 {dimension_numbers = #tpu.dot_dimension_numbers<[1], [1], [0], [0], [0, 0, 1, 0], [], []>} : vector<16x16xf32>, vector<16x16xf32>, vector<16x16xf32> -> vector<16x16xf32>
    %23 = vector.extract_strided_slice %2 {offsets = [0, 64], sizes = [64, 16], strides = [1, 1]} : vector<64x256xf32> to vector<64x16xf32>
    %24 = vector.extract_strided_slice %23 {offsets = [32, 0], sizes = [32, 16], strides = [1, 1]} : vector<64x16xf32> to vector<32x16xf32>
    %25 = vector.extract_strided_slice %23 {offsets = [0, 0], sizes = [16, 16], strides = [1, 1]} : vector<64x16xf32> to vector<16x16xf32>
    %26 = vector.extract_strided_slice %23 {offsets = [16, 0], sizes = [16, 16], strides = [1, 1]} : vector<64x16xf32> to vector<16x16xf32>
    %cst_7 = arith.constant dense<0.000000e+00> : vector<16x16xf32>
    %27 = tpu.matmul %25, %26, %cst_7 {dimension_numbers = #tpu.dot_dimension_numbers<[1], [1], [0], [0], [0, 0, 1, 0], [], []>} : vector<16x16xf32>, vector<16x16xf32>, vector<16x16xf32> -> vector<16x16xf32>
    %28 = vector.extract_strided_slice %2 {offsets = [0, 80], sizes = [64, 16], strides = [1, 1]} : vector<64x256xf32> to vector<64x16xf32>
    %29 = vector.extract_strided_slice %28 {offsets = [32, 0], sizes = [32, 16], strides = [1, 1]} : vector<64x16xf32> to vector<32x16xf32>
    %30 = vector.extract_strided_slice %28 {offsets = [0, 0], sizes = [16, 16], strides = [1, 1]} : vector<64x16xf32> to vector<16x16xf32>
    %31 = vector.extract_strided_slice %28 {offsets = [16, 0], sizes = [16, 16], strides = [1, 1]} : vector<64x16xf32> to vector<16x16xf32>
    %cst_8 = arith.constant dense<0.000000e+00> : vector<16x16xf32>
    %32 = tpu.matmul %30, %31, %cst_8 {dimension_numbers = #tpu.dot_dimension_numbers<[1], [1], [0], [0], [0, 0, 1, 0], [], []>} : vector<16x16xf32>, vector<16x16xf32>, vector<16x16xf32> -> vector<16x16xf32>
    %33 = vector.extract_strided_slice %2 {offsets = [0, 96], sizes = [64, 16], strides = [1, 1]} : vector<64x256xf32> to vector<64x16xf32>
    %34 = vector.extract_strided_slice %33 {offsets = [32, 0], sizes = [32, 16], strides = [1, 1]} : vector<64x16xf32> to vector<32x16xf32>
    %35 = vector.extract_strided_slice %33 {offsets = [0, 0], sizes = [16, 16], strides = [1, 1]} : vector<64x16xf32> to vector<16x16xf32>
    %36 = vector.extract_strided_slice %33 {offsets = [16, 0], sizes = [16, 16], strides = [1, 1]} : vector<64x16xf32> to vector<16x16xf32>
    %cst_9 = arith.constant dense<0.000000e+00> : vector<16x16xf32>
    %37 = tpu.matmul %35, %36, %cst_9 {dimension_numbers = #tpu.dot_dimension_numbers<[1], [1], [0], [0], [0, 0, 1, 0], [], []>} : vector<16x16xf32>, vector<16x16xf32>, vector<16x16xf32> -> vector<16x16xf32>
    %38 = vector.extract_strided_slice %2 {offsets = [0, 112], sizes = [64, 16], strides = [1, 1]} : vector<64x256xf32> to vector<64x16xf32>
    %39 = vector.extract_strided_slice %38 {offsets = [32, 0], sizes = [32, 16], strides = [1, 1]} : vector<64x16xf32> to vector<32x16xf32>
    %40 = vector.extract_strided_slice %38 {offsets = [0, 0], sizes = [16, 16], strides = [1, 1]} : vector<64x16xf32> to vector<16x16xf32>
    %41 = vector.extract_strided_slice %38 {offsets = [16, 0], sizes = [16, 16], strides = [1, 1]} : vector<64x16xf32> to vector<16x16xf32>
    %cst_10 = arith.constant dense<0.000000e+00> : vector<16x16xf32>
    %42 = tpu.matmul %40, %41, %cst_10 {dimension_numbers = #tpu.dot_dimension_numbers<[1], [1], [0], [0], [0, 0, 1, 0], [], []>} : vector<16x16xf32>, vector<16x16xf32>, vector<16x16xf32> -> vector<16x16xf32>
    %43 = vector.extract_strided_slice %2 {offsets = [0, 128], sizes = [64, 16], strides = [1, 1]} : vector<64x256xf32> to vector<64x16xf32>
    %44 = vector.extract_strided_slice %43 {offsets = [32, 0], sizes = [32, 16], strides = [1, 1]} : vector<64x16xf32> to vector<32x16xf32>
    %45 = vector.extract_strided_slice %43 {offsets = [0, 0], sizes = [16, 16], strides = [1, 1]} : vector<64x16xf32> to vector<16x16xf32>
    %46 = vector.extract_strided_slice %43 {offsets = [16, 0], sizes = [16, 16], strides = [1, 1]} : vector<64x16xf32> to vector<16x16xf32>
    %cst_11 = arith.constant dense<0.000000e+00> : vector<16x16xf32>
    %47 = tpu.matmul %45, %46, %cst_11 {dimension_numbers = #tpu.dot_dimension_numbers<[1], [1], [0], [0], [0, 0, 1, 0], [], []>} : vector<16x16xf32>, vector<16x16xf32>, vector<16x16xf32> -> vector<16x16xf32>
    %48 = vector.extract_strided_slice %2 {offsets = [0, 144], sizes = [64, 16], strides = [1, 1]} : vector<64x256xf32> to vector<64x16xf32>
    %49 = vector.extract_strided_slice %48 {offsets = [32, 0], sizes = [32, 16], strides = [1, 1]} : vector<64x16xf32> to vector<32x16xf32>
    %50 = vector.extract_strided_slice %48 {offsets = [0, 0], sizes = [16, 16], strides = [1, 1]} : vector<64x16xf32> to vector<16x16xf32>
    %51 = vector.extract_strided_slice %48 {offsets = [16, 0], sizes = [16, 16], strides = [1, 1]} : vector<64x16xf32> to vector<16x16xf32>
    %cst_12 = arith.constant dense<0.000000e+00> : vector<16x16xf32>
    %52 = tpu.matmul %50, %51, %cst_12 {dimension_numbers = #tpu.dot_dimension_numbers<[1], [1], [0], [0], [0, 0, 1, 0], [], []>} : vector<16x16xf32>, vector<16x16xf32>, vector<16x16xf32> -> vector<16x16xf32>
    %53 = vector.extract_strided_slice %2 {offsets = [0, 160], sizes = [64, 16], strides = [1, 1]} : vector<64x256xf32> to vector<64x16xf32>
    %54 = vector.extract_strided_slice %53 {offsets = [32, 0], sizes = [32, 16], strides = [1, 1]} : vector<64x16xf32> to vector<32x16xf32>
    %55 = vector.extract_strided_slice %53 {offsets = [0, 0], sizes = [16, 16], strides = [1, 1]} : vector<64x16xf32> to vector<16x16xf32>
    %56 = vector.extract_strided_slice %53 {offsets = [16, 0], sizes = [16, 16], strides = [1, 1]} : vector<64x16xf32> to vector<16x16xf32>
    %cst_13 = arith.constant dense<0.000000e+00> : vector<16x16xf32>
    %57 = tpu.matmul %55, %56, %cst_13 {dimension_numbers = #tpu.dot_dimension_numbers<[1], [1], [0], [0], [0, 0, 1, 0], [], []>} : vector<16x16xf32>, vector<16x16xf32>, vector<16x16xf32> -> vector<16x16xf32>
    %58 = vector.extract_strided_slice %2 {offsets = [0, 176], sizes = [64, 16], strides = [1, 1]} : vector<64x256xf32> to vector<64x16xf32>
    %59 = vector.extract_strided_slice %58 {offsets = [32, 0], sizes = [32, 16], strides = [1, 1]} : vector<64x16xf32> to vector<32x16xf32>
    %60 = vector.extract_strided_slice %58 {offsets = [0, 0], sizes = [16, 16], strides = [1, 1]} : vector<64x16xf32> to vector<16x16xf32>
    %61 = vector.extract_strided_slice %58 {offsets = [16, 0], sizes = [16, 16], strides = [1, 1]} : vector<64x16xf32> to vector<16x16xf32>
    %cst_14 = arith.constant dense<0.000000e+00> : vector<16x16xf32>
    %62 = tpu.matmul %60, %61, %cst_14 {dimension_numbers = #tpu.dot_dimension_numbers<[1], [1], [0], [0], [0, 0, 1, 0], [], []>} : vector<16x16xf32>, vector<16x16xf32>, vector<16x16xf32> -> vector<16x16xf32>
    %63 = vector.extract_strided_slice %2 {offsets = [0, 192], sizes = [64, 16], strides = [1, 1]} : vector<64x256xf32> to vector<64x16xf32>
    %64 = vector.extract_strided_slice %63 {offsets = [32, 0], sizes = [32, 16], strides = [1, 1]} : vector<64x16xf32> to vector<32x16xf32>
    %65 = vector.extract_strided_slice %63 {offsets = [0, 0], sizes = [16, 16], strides = [1, 1]} : vector<64x16xf32> to vector<16x16xf32>
    %66 = vector.extract_strided_slice %63 {offsets = [16, 0], sizes = [16, 16], strides = [1, 1]} : vector<64x16xf32> to vector<16x16xf32>
    %cst_15 = arith.constant dense<0.000000e+00> : vector<16x16xf32>
    %67 = tpu.matmul %65, %66, %cst_15 {dimension_numbers = #tpu.dot_dimension_numbers<[1], [1], [0], [0], [0, 0, 1, 0], [], []>} : vector<16x16xf32>, vector<16x16xf32>, vector<16x16xf32> -> vector<16x16xf32>
    %68 = vector.extract_strided_slice %2 {offsets = [0, 208], sizes = [64, 16], strides = [1, 1]} : vector<64x256xf32> to vector<64x16xf32>
    %69 = vector.extract_strided_slice %68 {offsets = [32, 0], sizes = [32, 16], strides = [1, 1]} : vector<64x16xf32> to vector<32x16xf32>
    %70 = vector.extract_strided_slice %68 {offsets = [0, 0], sizes = [16, 16], strides = [1, 1]} : vector<64x16xf32> to vector<16x16xf32>
    %71 = vector.extract_strided_slice %68 {offsets = [16, 0], sizes = [16, 16], strides = [1, 1]} : vector<64x16xf32> to vector<16x16xf32>
    %cst_16 = arith.constant dense<0.000000e+00> : vector<16x16xf32>
    %72 = tpu.matmul %70, %71, %cst_16 {dimension_numbers = #tpu.dot_dimension_numbers<[1], [1], [0], [0], [0, 0, 1, 0], [], []>} : vector<16x16xf32>, vector<16x16xf32>, vector<16x16xf32> -> vector<16x16xf32>
    %73 = vector.extract_strided_slice %2 {offsets = [0, 224], sizes = [64, 16], strides = [1, 1]} : vector<64x256xf32> to vector<64x16xf32>
    %74 = vector.extract_strided_slice %73 {offsets = [32, 0], sizes = [32, 16], strides = [1, 1]} : vector<64x16xf32> to vector<32x16xf32>
    %75 = vector.extract_strided_slice %73 {offsets = [0, 0], sizes = [16, 16], strides = [1, 1]} : vector<64x16xf32> to vector<16x16xf32>
    %76 = vector.extract_strided_slice %73 {offsets = [16, 0], sizes = [16, 16], strides = [1, 1]} : vector<64x16xf32> to vector<16x16xf32>
    %cst_17 = arith.constant dense<0.000000e+00> : vector<16x16xf32>
    %77 = tpu.matmul %75, %76, %cst_17 {dimension_numbers = #tpu.dot_dimension_numbers<[1], [1], [0], [0], [0, 0, 1, 0], [], []>} : vector<16x16xf32>, vector<16x16xf32>, vector<16x16xf32> -> vector<16x16xf32>
    %78 = vector.extract_strided_slice %2 {offsets = [0, 240], sizes = [64, 16], strides = [1, 1]} : vector<64x256xf32> to vector<64x16xf32>
    %79 = vector.extract_strided_slice %78 {offsets = [32, 0], sizes = [32, 16], strides = [1, 1]} : vector<64x16xf32> to vector<32x16xf32>
    %80 = vector.extract_strided_slice %78 {offsets = [0, 0], sizes = [16, 16], strides = [1, 1]} : vector<64x16xf32> to vector<16x16xf32>
    %81 = vector.extract_strided_slice %78 {offsets = [16, 0], sizes = [16, 16], strides = [1, 1]} : vector<64x16xf32> to vector<16x16xf32>
    %cst_18 = arith.constant dense<0.000000e+00> : vector<16x16xf32>
    %82 = tpu.matmul %80, %81, %cst_18 {dimension_numbers = #tpu.dot_dimension_numbers<[1], [1], [0], [0], [0, 0, 1, 0], [], []>} : vector<16x16xf32>, vector<16x16xf32>, vector<16x16xf32> -> vector<16x16xf32>
    %83 = tpu.concatenate %7, %12, %17, %22, %27, %32, %37, %42, %47, %52, %57, %62, %67, %72, %77, %82 in 1 : vector<16x16xf32>, vector<16x16xf32>, vector<16x16xf32>, vector<16x16xf32>, vector<16x16xf32>, vector<16x16xf32>, vector<16x16xf32>, vector<16x16xf32>, vector<16x16xf32>, vector<16x16xf32>, vector<16x16xf32>, vector<16x16xf32>, vector<16x16xf32>, vector<16x16xf32>, vector<16x16xf32>, vector<16x16xf32> -> vector<16x256xf32>
    %cst_19 = arith.constant dense<0xFF800000> : vector<256xf32>
    %84 = vector.multi_reduction <maximumf>, %83, %cst_19 [0] : vector<16x256xf32> to vector<256xf32>
    %85 = vector.shape_cast %84 : vector<256xf32> to vector<1x256xf32>
    %86 = vector.broadcast %85 : vector<1x256xf32> to vector<16x256xf32>
    %87 = arith.subf %83, %86 : vector<16x256xf32>
    %88 = math.exp %87 : vector<16x256xf32>
    %cst_20 = arith.constant dense<0.000000e+00> : vector<256xf32>
    %89 = vector.multi_reduction <add>, %88, %cst_20 [0] : vector<16x256xf32> to vector<256xf32>
    %90 = vector.shape_cast %89 : vector<256xf32> to vector<1x256xf32>
    %91 = tpu.reciprocal %90 : vector<1x256xf32> -> vector<1x256xf32>
    %92 = vector.broadcast %91 : vector<1x256xf32> to vector<16x256xf32>
    %93 = arith.mulf %88, %92 : vector<16x256xf32>
    %94 = vector.extract_strided_slice %93 {offsets = [0, 0], sizes = [16, 16], strides = [1, 1]} : vector<16x256xf32> to vector<16x16xf32>
    %cst_21 = arith.constant dense<0.000000e+00> : vector<32x16xf32>
    %95 = tpu.matmul %4, %94, %cst_21 {dimension_numbers = #tpu.dot_dimension_numbers<[1], [0], [0], [1], [0, 0, 1, 1], [], []>} : vector<32x16xf32>, vector<16x16xf32>, vector<32x16xf32> -> vector<32x16xf32>
    %96 = vector.extract_strided_slice %93 {offsets = [0, 16], sizes = [16, 16], strides = [1, 1]} : vector<16x256xf32> to vector<16x16xf32>
    %cst_22 = arith.constant dense<0.000000e+00> : vector<32x16xf32>
    %97 = tpu.matmul %9, %96, %cst_22 {dimension_numbers = #tpu.dot_dimension_numbers<[1], [0], [0], [1], [0, 0, 1, 1], [], []>} : vector<32x16xf32>, vector<16x16xf32>, vector<32x16xf32> -> vector<32x16xf32>
    %98 = vector.extract_strided_slice %93 {offsets = [0, 32], sizes = [16, 16], strides = [1, 1]} : vector<16x256xf32> to vector<16x16xf32>
    %cst_23 = arith.constant dense<0.000000e+00> : vector<32x16xf32>
    %99 = tpu.matmul %14, %98, %cst_23 {dimension_numbers = #tpu.dot_dimension_numbers<[1], [0], [0], [1], [0, 0, 1, 1], [], []>} : vector<32x16xf32>, vector<16x16xf32>, vector<32x16xf32> -> vector<32x16xf32>
    %100 = vector.extract_strided_slice %93 {offsets = [0, 48], sizes = [16, 16], strides = [1, 1]} : vector<16x256xf32> to vector<16x16xf32>
    %cst_24 = arith.constant dense<0.000000e+00> : vector<32x16xf32>
    %101 = tpu.matmul %19, %100, %cst_24 {dimension_numbers = #tpu.dot_dimension_numbers<[1], [0], [0], [1], [0, 0, 1, 1], [], []>} : vector<32x16xf32>, vector<16x16xf32>, vector<32x16xf32> -> vector<32x16xf32>
    %102 = vector.extract_strided_slice %93 {offsets = [0, 64], sizes = [16, 16], strides = [1, 1]} : vector<16x256xf32> to vector<16x16xf32>
    %cst_25 = arith.constant dense<0.000000e+00> : vector<32x16xf32>
    %103 = tpu.matmul %24, %102, %cst_25 {dimension_numbers = #tpu.dot_dimension_numbers<[1], [0], [0], [1], [0, 0, 1, 1], [], []>} : vector<32x16xf32>, vector<16x16xf32>, vector<32x16xf32> -> vector<32x16xf32>
    %104 = vector.extract_strided_slice %93 {offsets = [0, 80], sizes = [16, 16], strides = [1, 1]} : vector<16x256xf32> to vector<16x16xf32>
    %cst_26 = arith.constant dense<0.000000e+00> : vector<32x16xf32>
    %105 = tpu.matmul %29, %104, %cst_26 {dimension_numbers = #tpu.dot_dimension_numbers<[1], [0], [0], [1], [0, 0, 1, 1], [], []>} : vector<32x16xf32>, vector<16x16xf32>, vector<32x16xf32> -> vector<32x16xf32>
    %106 = vector.extract_strided_slice %93 {offsets = [0, 96], sizes = [16, 16], strides = [1, 1]} : vector<16x256xf32> to vector<16x16xf32>
    %cst_27 = arith.constant dense<0.000000e+00> : vector<32x16xf32>
    %107 = tpu.matmul %34, %106, %cst_27 {dimension_numbers = #tpu.dot_dimension_numbers<[1], [0], [0], [1], [0, 0, 1, 1], [], []>} : vector<32x16xf32>, vector<16x16xf32>, vector<32x16xf32> -> vector<32x16xf32>
    %108 = vector.extract_strided_slice %93 {offsets = [0, 112], sizes = [16, 16], strides = [1, 1]} : vector<16x256xf32> to vector<16x16xf32>
    %cst_28 = arith.constant dense<0.000000e+00> : vector<32x16xf32>
    %109 = tpu.matmul %39, %108, %cst_28 {dimension_numbers = #tpu.dot_dimension_numbers<[1], [0], [0], [1], [0, 0, 1, 1], [], []>} : vector<32x16xf32>, vector<16x16xf32>, vector<32x16xf32> -> vector<32x16xf32>
    %110 = vector.extract_strided_slice %93 {offsets = [0, 128], sizes = [16, 16], strides = [1, 1]} : vector<16x256xf32> to vector<16x16xf32>
    %cst_29 = arith.constant dense<0.000000e+00> : vector<32x16xf32>
    %111 = tpu.matmul %44, %110, %cst_29 {dimension_numbers = #tpu.dot_dimension_numbers<[1], [0], [0], [1], [0, 0, 1, 1], [], []>} : vector<32x16xf32>, vector<16x16xf32>, vector<32x16xf32> -> vector<32x16xf32>
    %112 = vector.extract_strided_slice %93 {offsets = [0, 144], sizes = [16, 16], strides = [1, 1]} : vector<16x256xf32> to vector<16x16xf32>
    %cst_30 = arith.constant dense<0.000000e+00> : vector<32x16xf32>
    %113 = tpu.matmul %49, %112, %cst_30 {dimension_numbers = #tpu.dot_dimension_numbers<[1], [0], [0], [1], [0, 0, 1, 1], [], []>} : vector<32x16xf32>, vector<16x16xf32>, vector<32x16xf32> -> vector<32x16xf32>
    %114 = vector.extract_strided_slice %93 {offsets = [0, 160], sizes = [16, 16], strides = [1, 1]} : vector<16x256xf32> to vector<16x16xf32>
    %cst_31 = arith.constant dense<0.000000e+00> : vector<32x16xf32>
    %115 = tpu.matmul %54, %114, %cst_31 {dimension_numbers = #tpu.dot_dimension_numbers<[1], [0], [0], [1], [0, 0, 1, 1], [], []>} : vector<32x16xf32>, vector<16x16xf32>, vector<32x16xf32> -> vector<32x16xf32>
    %116 = vector.extract_strided_slice %93 {offsets = [0, 176], sizes = [16, 16], strides = [1, 1]} : vector<16x256xf32> to vector<16x16xf32>
    %cst_32 = arith.constant dense<0.000000e+00> : vector<32x16xf32>
    %117 = tpu.matmul %59, %116, %cst_32 {dimension_numbers = #tpu.dot_dimension_numbers<[1], [0], [0], [1], [0, 0, 1, 1], [], []>} : vector<32x16xf32>, vector<16x16xf32>, vector<32x16xf32> -> vector<32x16xf32>
    %118 = vector.extract_strided_slice %93 {offsets = [0, 192], sizes = [16, 16], strides = [1, 1]} : vector<16x256xf32> to vector<16x16xf32>
    %cst_33 = arith.constant dense<0.000000e+00> : vector<32x16xf32>
    %119 = tpu.matmul %64, %118, %cst_33 {dimension_numbers = #tpu.dot_dimension_numbers<[1], [0], [0], [1], [0, 0, 1, 1], [], []>} : vector<32x16xf32>, vector<16x16xf32>, vector<32x16xf32> -> vector<32x16xf32>
    %120 = vector.extract_strided_slice %93 {offsets = [0, 208], sizes = [16, 16], strides = [1, 1]} : vector<16x256xf32> to vector<16x16xf32>
    %cst_34 = arith.constant dense<0.000000e+00> : vector<32x16xf32>
    %121 = tpu.matmul %69, %120, %cst_34 {dimension_numbers = #tpu.dot_dimension_numbers<[1], [0], [0], [1], [0, 0, 1, 1], [], []>} : vector<32x16xf32>, vector<16x16xf32>, vector<32x16xf32> -> vector<32x16xf32>
    %122 = vector.extract_strided_slice %93 {offsets = [0, 224], sizes = [16, 16], strides = [1, 1]} : vector<16x256xf32> to vector<16x16xf32>
    %cst_35 = arith.constant dense<0.000000e+00> : vector<32x16xf32>
    %123 = tpu.matmul %74, %122, %cst_35 {dimension_numbers = #tpu.dot_dimension_numbers<[1], [0], [0], [1], [0, 0, 1, 1], [], []>} : vector<32x16xf32>, vector<16x16xf32>, vector<32x16xf32> -> vector<32x16xf32>
    %124 = vector.extract_strided_slice %93 {offsets = [0, 240], sizes = [16, 16], strides = [1, 1]} : vector<16x256xf32> to vector<16x16xf32>
    %cst_36 = arith.constant dense<0.000000e+00> : vector<32x16xf32>
    %125 = tpu.matmul %79, %124, %cst_36 {dimension_numbers = #tpu.dot_dimension_numbers<[1], [0], [0], [1], [0, 0, 1, 1], [], []>} : vector<32x16xf32>, vector<16x16xf32>, vector<32x16xf32> -> vector<32x16xf32>
    %126 = tpu.concatenate %95, %97, %99, %101, %103, %105, %107, %109, %111, %113, %115, %117, %119, %121, %123, %125 in 1 : vector<32x16xf32>, vector<32x16xf32>, vector<32x16xf32>, vector<32x16xf32>, vector<32x16xf32>, vector<32x16xf32>, vector<32x16xf32>, vector<32x16xf32>, vector<32x16xf32>, vector<32x16xf32>, vector<32x16xf32>, vector<32x16xf32>, vector<32x16xf32>, vector<32x16xf32>, vector<32x16xf32>, vector<32x16xf32> -> vector<32x256xf32>
    %c0_37 = arith.constant 0 : index
    %c0_38 = arith.constant 0 : index
    %127 = vector.load %arg3[%c0_37, %c0_38] : memref<32x256xf32, #tpu.memory_space<vmem>>, vector<32x256xf32>
    tpu.vector_store %arg3[%c0_37, %c0_38], %126 {strides = array<i32>} : memref<32x256xf32, #tpu.memory_space<vmem>>, vector<32x256xf32>,
    return
  }
  func.func @transform_0(%arg0: i32) -> (i32, i32) {
    %c0_i32 = arith.constant 0 : i32
    %c0_i32_0 = arith.constant 0 : i32
    return %c0_i32, %arg0 : i32, i32
  }
  func.func @transform_1(%arg0: i32) -> (i32, i32) {
    %c0_i32 = arith.constant 0 : i32
    %c0_i32_0 = arith.constant 0 : i32
    %c0_i32_1 = arith.constant 0 : i32
    return %c0_i32, %c0_i32_0 : i32, i32
  }
  func.func @transform_2(%arg0: i32) -> (i32, i32) {
    %c0_i32 = arith.constant 0 : i32
    %c0_i32_0 = arith.constant 0 : i32
    return %c0_i32, %arg0 : i32, i32
  }
}

</mosaic_0001>

<llo_original>
// kernel: tpu_custom_call.1
$region0: #{tpu_custom_call.1}
  #allocation0 [shape = 'u32[]', space=smem, size = 0x4, offset = 0x4, fixed_abs, tag = 'smem constant byte address 0x4 - core index']
  #allocation1 [shape = 'u32[144,128]{1,0:T(1,128)}', space=vmem, size = 0x12000, scoped, tag = 'internal scratch']
  %s0 = inlined_call_operand.vmem [shape: f32[32,256], index: 0, kind: input, shape index: {}]
  %s1 = inlined_call_operand.vmem [shape: f32[64,32], index: 1, kind: input, shape index: {}]
  %s2 = inlined_call_operand.hbm [shape: f32[32,256], index: 2, kind: output, shape index: {}]
  %s3 = sld [smem:[#allocation0]]
  $region18: #{tpu_custom_call.1} parent=0
    _
  %s5 = ssub.s32 1, %s3
  %s6 = scalar_select 0, %s5, %s3
  $region1: #{tpu_custom_call.1} parent=0
    #allocation2 [shape = 'u8[32768]{0}', space=vmem, size = 0x8000, scoped, tag = 'output window, operand 0, single buffered']
    #allocation3 [shape = 's32[1]{0}', space=sflag, size = 0x4, scoped, tag = 'scoped memory for tpu_custom_call.1']
    %7 = vsyncpa [#allocation3], 0
    // Predicated region
    $region2: #{tpu_custom_call.1} parent=1 // pred_check
      _
    $region3: #{tpu_custom_call.1} parent=1 // pred_check_branch
      %9 = sbr.rel (0) target = $region5
    $region4: #{tpu_custom_call.1} parent=1 // pred_region
      _
    $region5: #{tpu_custom_call.1} parent=1 // pred_fallthru
      _
    // Predicated region
    $region6: #{tpu_custom_call.1} parent=1 // pred_check
      _
    $region7: #{tpu_custom_call.1} parent=1 // pred_check_branch
      %11 = sbr.rel (0) target = $region9
    $region8: #{tpu_custom_call.1} parent=1 // pred_region
      _
    $region9: #{tpu_custom_call.1} parent=1 // pred_fallthru
      _
    %v12 = vld [vmem:[%s0] sm:$0xff]
    %v13 = vld [vmem:[%s0 + $0x8] sm:$0xff]
    %v14 = vld [vmem:[%s0 + $0x10] sm:$0xff]
    %v15 = vld [vmem:[%s0 + $0x18] sm:$0xff]
    %v16 = vld [vmem:[%s0 + $0x20] sm:$0xff]
    %v17 = vld [vmem:[%s0 + $0x28] sm:$0xff]
    %v18 = vld [vmem:[%s0 + $0x30] sm:$0xff]
    %v19 = vld [vmem:[%s0 + $0x38] sm:$0xff]
    %v20 = vld [vmem:[%s1] sm:$0xff]
    %v21 = vld [vmem:[%s1 + $0x8] sm:$0xff]
    %v22 = vld [vmem:[%s1 + $0x10] sm:$0xff]
    %v23 = vld [vmem:[%s1 + $0x18] sm:$0xff]
    %v24 = vld [vmem:[%s1 + $0x20] sm:$0xff]
    %v25 = vld [vmem:[%s1 + $0x28] sm:$0xff]
    %v26 = vld [vmem:[%s1 + $0x30] sm:$0xff]
    %v27 = vld [vmem:[%s1 + $0x38] sm:$0xff]
    %vm28 = vcmask 261120
    %v30 = vsel %vm28, %v20, 0
    %v33 = vsel %vm28, %v21, 0
    %v36 = vsel %vm28, %v22, 0
    %v39 = vsel %vm28, %v23, 0
    %v42 = vsel %vm28, %v24, 0
    %v45 = vsel %vm28, %v25, 0
    %v48 = vsel %vm28, %v26, 0
    %v51 = vsel %vm28, %v27, 0
    %53 = vmatprep.subr.mxu0 0.0
    %54 = vmatpush1.msra.mxu0 0.0
    %55 = vmatprep.subr.mxu0 0.0
    %56 = vmatpush1.msra.mxu0 0.0
    %57 = vmatprep.subr.mxu0 0.0
    %58 = vmatpush1.msra.mxu0 0.0
    %59 = vmatprep.subr.mxu0 0.0
    %60 = vmatpush1.msra.mxu0 0.0
    %61 = vmatprep.subr.mxu0 0.0
    %62 = vmatpush1.msra.mxu0 0.0
    %63 = vmatprep.subr.mxu0 0.0
    %64 = vmatpush1.msra.mxu0 0.0
    %65 = vmatprep.subr.mxu0 0.0
    %66 = vmatpush1.msra.mxu0 0.0
    %67 = vmatprep.subr.mxu0 0.0
    %68 = vmatpush1.msra.mxu0 0.0
    %69 = vmatprep.subr.mxu0 0.0
    %70 = vmatpush1.msra.mxu0 0.0
    %71 = vmatprep.subr.mxu0 0.0
    %72 = vmatpush1.msra.mxu0 0.0
    %73 = vmatprep.subr.mxu0 0.0
    %74 = vmatpush1.msra.mxu0 0.0
    %75 = vmatprep.subr.mxu0 0.0
    %76 = vmatpush1.msra.mxu0 0.0
    %77 = vmatprep.subr.mxu0 %v19
    %78 = vmatpush1.msra.mxu0 %v18
    %79 = vmatprep.subr.mxu0 %v17
    %80 = vmatpush1.msra.mxu0 %v16
    %81 = vmatprep.subr.mxu0 %v15
    %82 = vmatpush1.msra.mxu0 %v14
    %83 = vmatprep.subr.mxu0 %v13
    %84 = vmatpush1.msra.mxu0 %v12
    %85 = vmatprep.subr.mxu0 0.0
    %86 = vmatpush2.msra.mxu0 0.0
    %87 = vmatprep.subr.mxu0 0.0
    %88 = vmatpush2.msra.mxu0 0.0
    %89 = vmatprep.subr.mxu0 0.0
    %90 = vmatpush2.msra.mxu0 0.0
    %91 = vmatprep.subr.mxu0 0.0
    %92 = vmatpush2.msra.mxu0 0.0
    %93 = vmatprep.subr.mxu0 0.0
    %94 = vmatpush2.msra.mxu0 0.0
    %95 = vmatprep.subr.mxu0 0.0
    %96 = vmatpush2.msra.mxu0 0.0
    %97 = vmatprep.subr.mxu0 0.0
    %98 = vmatpush2.msra.mxu0 0.0
    %99 = vmatprep.subr.mxu0 0.0
    %100 = vmatpush2.msra.mxu0 0.0
    %101 = vmatprep.subr.mxu0 0.0
    %102 = vmatpush2.msra.mxu0 0.0
    %103 = vmatprep.subr.mxu0 0.0
    %104 = vmatpush2.msra.mxu0 0.0
    %105 = vmatprep.subr.mxu0 0.0
    %106 = vmatpush2.msra.mxu0 0.0
    %107 = vmatprep.subr.mxu0 0.0
    %108 = vmatpush2.msra.mxu0 0.0
    %109 = vmatprep.subr.mxu0 0.0
    %110 = vmatpush2.msra.mxu0 0.0
    %111 = vmatprep.subr.mxu0 0.0
    %112 = vmatpush2.msra.mxu0 0.0
    %113 = vmatprep.subr.mxu0 0.0
    %114 = vmatpush2.msra.mxu0 0.0
    %115 = vmatprep.subr.mxu0 0.0
    %116 = vmatpush2.msra.mxu0 0.0
    %117 = vmatprep.mubr.f32.mxu0 0.0
    %118 = vmatmul.mubr.f32.gmra.mxu0 %v30
    %v119 = vpop.f32.mrf.mxu0
    %v120 = vadd.f32 0.0, %v119
    %v121 = vpop.f32.mrf.mxu0
    %v122 = vadd.f32 0.0, %v121
    %123 = vmatprep.mubr.f32.mxu0 0.0
    %124 = vmatmul.mubr.f32.gmra.mxu0 %v33
    %v125 = vpop.f32.mrf.mxu0
    %v126 = vadd.f32 0.0, %v125
    %v127 = vpop.f32.mrf.mxu0
    %v128 = vadd.f32 0.0, %v127
    %129 = vmatprep.mubr.f32.mxu0 0.0
    %130 = vmatmul.mubr.f32.gmra.mxu0 %v36
    %v131 = vpop.f32.mrf.mxu0
    %v132 = vadd.f32 0.0, %v131
    %v133 = vpop.f32.mrf.mxu0
    %v134 = vadd.f32 0.0, %v133
    %135 = vmatprep.mubr.f32.mxu0 0.0
    %136 = vmatmul.mubr.f32.gmra.mxu0 %v39
    %v137 = vpop.f32.mrf.mxu0
    %v138 = vadd.f32 0.0, %v137
    %v139 = vpop.f32.mrf.mxu0
    %v140 = vadd.f32 0.0, %v139
    %141 = vmatprep.mubr.f32.mxu0 0.0
    %142 = vmatmul.mubr.f32.gmra.mxu0 %v42
    %v143 = vpop.f32.mrf.mxu0
    %v144 = vadd.f32 0.0, %v143
    %v145 = vpop.f32.mrf.mxu0
    %v146 = vadd.f32 0.0, %v145
    %147 = vmatprep.mubr.f32.mxu0 0.0
    %148 = vmatmul.mubr.f32.gmra.mxu0 %v45
    %v149 = vpop.f32.mrf.mxu0
    %v150 = vadd.f32 0.0, %v149
    %v151 = vpop.f32.mrf.mxu0
    %v152 = vadd.f32 0.0, %v151
    %153 = vmatprep.mubr.f32.mxu0 0.0
    %154 = vmatmul.mubr.f32.gmra.mxu0 %v48
    %v155 = vpop.f32.mrf.mxu0
    %v156 = vadd.f32 0.0, %v155
    %v157 = vpop.f32.mrf.mxu0
    %v158 = vadd.f32 0.0, %v157
    %159 = vmatprep.mubr.f32.mxu0 0.0
    %160 = vmatmul.mubr.f32.gmra.mxu0 %v51
    %v161 = vpop.f32.mrf.mxu0
    %v162 = vadd.f32 0.0, %v161
    %v163 = vpop.f32.mrf.mxu0
    %v164 = vadd.f32 0.0, %v163
    %165 = vdwg.mxu0
    %vm166 = vcmask 130048
    %v168 = vsel %vm166, %v120, 0
    %v171 = vsel %vm166, %v126, 0
    %v174 = vsel %vm166, %v132, 0
    %v177 = vsel %vm166, %v138, 0
    %179 = vmatprep.subr.mxu0 0.0
    %180 = vmatpush1.xpose.msra.mxu0 0.0
    %181 = vmatprep.subr.mxu0 0.0
    %182 = vmatpush1.xpose.msra.mxu0 0.0
    %183 = vmatprep.subr.mxu0 0.0
    %184 = vmatpush1.xpose.msra.mxu0 0.0
    %185 = vmatprep.subr.mxu0 0.0
    %186 = vmatpush1.xpose.msra.mxu0 0.0
    %187 = vmatprep.subr.mxu0 0.0
    %188 = vmatpush1.xpose.msra.mxu0 0.0
    %189 = vmatprep.subr.mxu0 0.0
    %190 = vmatpush1.xpose.msra.mxu0 0.0
    %191 = vmatprep.subr.mxu0 0.0
    %192 = vmatpush1.xpose.msra.mxu0 0.0
    %193 = vmatprep.subr.mxu0 0.0
    %194 = vmatpush1.xpose.msra.mxu0 0.0
    %195 = vmatprep.subr.mxu0 0.0
    %196 = vmatpush1.xpose.msra.mxu0 0.0
    %197 = vmatprep.subr.mxu0 0.0
    %198 = vmatpush1.xpose.msra.mxu0 0.0
    %199 = vmatprep.subr.mxu0 0.0
    %200 = vmatpush1.xpose.msra.mxu0 0.0
    %201 = vmatprep.subr.mxu0 0.0
    %202 = vmatpush1.xpose.msra.mxu0 0.0
    %203 = vmatprep.subr.mxu0 0.0
    %204 = vmatpush1.xpose.msra.mxu0 0.0
    %205 = vmatprep.subr.mxu0 0.0
    %206 = vmatpush1.xpose.msra.mxu0 0.0
    %207 = vmatprep.subr.mxu0 0.0
    %208 = vmatpush1.xpose.msra.mxu0 %v177
    %209 = vmatprep.subr.mxu0 0.0
    %210 = vmatpush1.xpose.msra.mxu0 %v174
    %211 = vmatprep.subr.mxu0 0.0
    %212 = vmatpush2.xpose.msra.mxu0 0.0
    %213 = vmatprep.subr.mxu0 0.0
    %214 = vmatpush2.xpose.msra.mxu0 0.0
    %215 = vmatprep.subr.mxu0 0.0
    %216 = vmatpush2.xpose.msra.mxu0 0.0
    %217 = vmatprep.subr.mxu0 0.0
    %218 = vmatpush2.xpose.msra.mxu0 0.0
    %219 = vmatprep.subr.mxu0 0.0
    %220 = vmatpush2.xpose.msra.mxu0 0.0
    %221 = vmatprep.subr.mxu0 0.0
    %222 = vmatpush2.xpose.msra.mxu0 0.0
    %223 = vmatprep.subr.mxu0 0.0
    %224 = vmatpush2.xpose.msra.mxu0 0.0
    %225 = vmatprep.subr.mxu0 0.0
    %226 = vmatpush2.xpose.msra.mxu0 0.0
    %227 = vmatprep.subr.mxu0 0.0
    %228 = vmatpush2.xpose.msra.mxu0 0.0
    %229 = vmatprep.subr.mxu0 0.0
    %230 = vmatpush2.xpose.msra.mxu0 0.0
    %231 = vmatprep.subr.mxu0 0.0
    %232 = vmatpush2.xpose.msra.mxu0 0.0
    %233 = vmatprep.subr.mxu0 0.0
    %234 = vmatpush2.xpose.msra.mxu0 0.0
    %235 = vmatprep.subr.mxu0 0.0
    %236 = vmatpush2.xpose.msra.mxu0 0.0
    %237 = vmatprep.subr.mxu0 0.0
    %238 = vmatpush2.xpose.msra.mxu0 0.0
    %239 = vmatprep.subr.mxu0 0.0
    %240 = vmatpush2.xpose.msra.mxu0 0.0
    %241 = vmatprep.subr.mxu0 0.0
    %242 = vmatpush2.xpose.msra.mxu0 0.0
    %243 = vmatprep.mubr.f32.mxu0 0.0
    %244 = vmatmul.mubr.f32.gmra.mxu0 %v168
    %v245 = vpop.f32.mrf.mxu0
    %v246 = vadd.f32 0.0, %v245
    %v247 = vpop.f32.mrf.mxu0
    %248 = vmatprep.mubr.f32.mxu0 0.0
    %249 = vmatmul.mubr.f32.gmra.mxu0 %v171
    %v250 = vpop.f32.mrf.mxu0
    %v251 = vadd.f32 0.0, %v250
    %v252 = vpop.f32.mrf.mxu0
    %253 = vdwg.mxu0
    %254 = vrot.lane.b32.xlu0 %v120, 112
    %v255 = vpop.permute.xlu0 %254
    %256 = vrot.lane.b32.xlu0 %v126, 112
    %v257 = vpop.permute.xlu0 %256
    %258 = vrot.lane.b32.xlu0 %v132, 112
    %v259 = vpop.permute.xlu0 %258
    %260 = vrot.lane.b32.xlu0 %v138, 112
    %v261 = vpop.permute.xlu0 %260
    %v262 = vsel %vm166, %v255, 0
    %v264 = vsel %vm166, %v257, 0
    %v266 = vsel %vm166, %v259, 0
    %v268 = vsel %vm166, %v261, 0
    %270 = vmatprep.subr.mxu0 0.0
    %271 = vmatpush1.xpose.msra.mxu0 0.0
    %272 = vmatprep.subr.mxu0 0.0
    %273 = vmatpush1.xpose.msra.mxu0 0.0
    %274 = vmatprep.subr.mxu0 0.0
    %275 = vmatpush1.xpose.msra.mxu0 0.0
    %276 = vmatprep.subr.mxu0 0.0
    %277 = vmatpush1.xpose.msra.mxu0 0.0
    %278 = vmatprep.subr.mxu0 0.0
    %279 = vmatpush1.xpose.msra.mxu0 0.0
    %280 = vmatprep.subr.mxu0 0.0
    %281 = vmatpush1.xpose.msra.mxu0 0.0
    %282 = vmatprep.subr.mxu0 0.0
    %283 = vmatpush1.xpose.msra.mxu0 0.0
    %284 = vmatprep.subr.mxu0 0.0
    %285 = vmatpush1.xpose.msra.mxu0 0.0
    %286 = vmatprep.subr.mxu0 0.0
    %287 = vmatpush1.xpose.msra.mxu0 0.0
    %288 = vmatprep.subr.mxu0 0.0
    %289 = vmatpush1.xpose.msra.mxu0 0.0
    %290 = vmatprep.subr.mxu0 0.0
    %291 = vmatpush1.xpose.msra.mxu0 0.0
    %292 = vmatprep.subr.mxu0 0.0
    %293 = vmatpush1.xpose.msra.mxu0 0.0
    %294 = vmatprep.subr.mxu0 0.0
    %295 = vmatpush1.xpose.msra.mxu0 0.0
    %296 = vmatprep.subr.mxu0 0.0
    %297 = vmatpush1.xpose.msra.mxu0 0.0
    %298 = vmatprep.subr.mxu0 0.0
    %299 = vmatpush1.xpose.msra.mxu0 %v268
    %300 = vmatprep.subr.mxu0 0.0
    %301 = vmatpush1.xpose.msra.mxu0 %v266
    %302 = vmatprep.subr.mxu0 0.0
    %303 = vmatpush2.xpose.msra.mxu0 0.0
    %304 = vmatprep.subr.mxu0 0.0
    %305 = vmatpush2.xpose.msra.mxu0 0.0
    %306 = vmatprep.subr.mxu0 0.0
    %307 = vmatpush2.xpose.msra.mxu0 0.0
    %308 = vmatprep.subr.mxu0 0.0
    %309 = vmatpush2.xpose.msra.mxu0 0.0
    %310 = vmatprep.subr.mxu0 0.0
    %311 = vmatpush2.xpose.msra.mxu0 0.0
    %312 = vmatprep.subr.mxu0 0.0
    %313 = vmatpush2.xpose.msra.mxu0 0.0
    %314 = vmatprep.subr.mxu0 0.0
    %315 = vmatpush2.xpose.msra.mxu0 0.0
    %316 = vmatprep.subr.mxu0 0.0
    %317 = vmatpush2.xpose.msra.mxu0 0.0
    %318 = vmatprep.subr.mxu0 0.0
    %319 = vmatpush2.xpose.msra.mxu0 0.0
    %320 = vmatprep.subr.mxu0 0.0
    %321 = vmatpush2.xpose.msra.mxu0 0.0
    %322 = vmatprep.subr.mxu0 0.0
    %323 = vmatpush2.xpose.msra.mxu0 0.0
    %324 = vmatprep.subr.mxu0 0.0
    %325 = vmatpush2.xpose.msra.mxu0 0.0
    %326 = vmatprep.subr.mxu0 0.0
    %327 = vmatpush2.xpose.msra.mxu0 0.0
    %328 = vmatprep.subr.mxu0 0.0
    %329 = vmatpush2.xpose.msra.mxu0 0.0
    %330 = vmatprep.subr.mxu0 0.0
    %331 = vmatpush2.xpose.msra.mxu0 0.0
    %332 = vmatprep.subr.mxu0 0.0
    %333 = vmatpush2.xpose.msra.mxu0 0.0
    %334 = vmatprep.mubr.f32.mxu0 0.0
    %335 = vmatmul.mubr.f32.gmra.mxu0 %v262
    %v336 = vpop.f32.mrf.mxu0
    %v337 = vadd.f32 0.0, %v336
    %v338 = vpop.f32.mrf.mxu0
    %339 = vmatprep.mubr.f32.mxu0 0.0
    %340 = vmatmul.mubr.f32.gmra.mxu0 %v264
    %v341 = vpop.f32.mrf.mxu0
    %v342 = vadd.f32 0.0, %v341
    %v343 = vpop.f32.mrf.mxu0
    %344 = vdwg.mxu0
    %345 = vrot.lane.b32.xlu0 %v120, 96
    %v346 = vpop.permute.xlu0 %345
    %347 = vrot.lane.b32.xlu0 %v126, 96
    %v348 = vpop.permute.xlu0 %347
    %349 = vrot.lane.b32.xlu0 %v132, 96
    %v350 = vpop.permute.xlu0 %349
    %351 = vrot.lane.b32.xlu0 %v138, 96
    %v352 = vpop.permute.xlu0 %351
    %v353 = vsel %vm166, %v346, 0
    %v355 = vsel %vm166, %v348, 0
    %v357 = vsel %vm166, %v350, 0
    %v359 = vsel %vm166, %v352, 0
    %361 = vmatprep.subr.mxu0 0.0
    %362 = vmatpush1.xpose.msra.mxu0 0.0
    %363 = vmatprep.subr.mxu0 0.0
    %364 = vmatpush1.xpose.msra.mxu0 0.0
    %365 = vmatprep.subr.mxu0 0.0
    %366 = vmatpush1.xpose.msra.mxu0 0.0
    %367 = vmatprep.subr.mxu0 0.0
    %368 = vmatpush1.xpose.msra.mxu0 0.0
    %369 = vmatprep.subr.mxu0 0.0
    %370 = vmatpush1.xpose.msra.mxu0 0.0
    %371 = vmatprep.subr.mxu0 0.0
    %372 = vmatpush1.xpose.msra.mxu0 0.0
    %373 = vmatprep.subr.mxu0 0.0
    %374 = vmatpush1.xpose.msra.mxu0 0.0
    %375 = vmatprep.subr.mxu0 0.0
    %376 = vmatpush1.xpose.msra.mxu0 0.0
    %377 = vmatprep.subr.mxu0 0.0
    %378 = vmatpush1.xpose.msra.mxu0 0.0
    %379 = vmatprep.subr.mxu0 0.0
    %380 = vmatpush1.xpose.msra.mxu0 0.0
    %381 = vmatprep.subr.mxu0 0.0
    %382 = vmatpush1.xpose.msra.mxu0 0.0
    %383 = vmatprep.subr.mxu0 0.0
    %384 = vmatpush1.xpose.msra.mxu0 0.0
    %385 = vmatprep.subr.mxu0 0.0
    %386 = vmatpush1.xpose.msra.mxu0 0.0
    %387 = vmatprep.subr.mxu0 0.0
    %388 = vmatpush1.xpose.msra.mxu0 0.0
    %389 = vmatprep.subr.mxu0 0.0
    %390 = vmatpush1.xpose.msra.mxu0 %v359
    %391 = vmatprep.subr.mxu0 0.0
    %392 = vmatpush1.xpose.msra.mxu0 %v357
    %393 = vmatprep.subr.mxu0 0.0
    %394 = vmatpush2.xpose.msra.mxu0 0.0
    %395 = vmatprep.subr.mxu0 0.0
    %396 = vmatpush2.xpose.msra.mxu0 0.0
    %397 = vmatprep.subr.mxu0 0.0
    %398 = vmatpush2.xpose.msra.mxu0 0.0
    %399 = vmatprep.subr.mxu0 0.0
    %400 = vmatpush2.xpose.msra.mxu0 0.0
    %401 = vmatprep.subr.mxu0 0.0
    %402 = vmatpush2.xpose.msra.mxu0 0.0
    %403 = vmatprep.subr.mxu0 0.0
    %404 = vmatpush2.xpose.msra.mxu0 0.0
    %405 = vmatprep.subr.mxu0 0.0
    %406 = vmatpush2.xpose.msra.mxu0 0.0
    %407 = vmatprep.subr.mxu0 0.0
    %408 = vmatpush2.xpose.msra.mxu0 0.0
    %409 = vmatprep.subr.mxu0 0.0
    %410 = vmatpush2.xpose.msra.mxu0 0.0
    %411 = vmatprep.subr.mxu0 0.0
    %412 = vmatpush2.xpose.msra.mxu0 0.0
    %413 = vmatprep.subr.mxu0 0.0
    %414 = vmatpush2.xpose.msra.mxu0 0.0
    %415 = vmatprep.subr.mxu0 0.0
    %416 = vmatpush2.xpose.msra.mxu0 0.0
    %417 = vmatprep.subr.mxu0 0.0
    %418 = vmatpush2.xpose.msra.mxu0 0.0
    %419 = vmatprep.subr.mxu0 0.0
    %420 = vmatpush2.xpose.msra.mxu0 0.0
    %421 = vmatprep.subr.mxu0 0.0
    %422 = vmatpush2.xpose.msra.mxu0 0.0
    %423 = vmatprep.subr.mxu0 0.0
    %424 = vmatpush2.xpose.msra.mxu0 0.0
    %425 = vmatprep.mubr.f32.mxu0 0.0
    %426 = vmatmul.mubr.f32.gmra.mxu0 %v353
    %v427 = vpop.f32.mrf.mxu0
    %v428 = vadd.f32 0.0, %v427
    %v429 = vpop.f32.mrf.mxu0
    %430 = vmatprep.mubr.f32.mxu0 0.0
    %431 = vmatmul.mubr.f32.gmra.mxu0 %v355
    %v432 = vpop.f32.mrf.mxu0
    %v433 = vadd.f32 0.0, %v432
    %v434 = vpop.f32.mrf.mxu0
    %435 = vdwg.mxu0
    %436 = vrot.lane.b32.xlu0 %v120, 80
    %v437 = vpop.permute.xlu0 %436
    %438 = vrot.lane.b32.xlu0 %v126, 80
    %v439 = vpop.permute.xlu0 %438
    %440 = vrot.lane.b32.xlu0 %v132, 80
    %v441 = vpop.permute.xlu0 %440
    %442 = vrot.lane.b32.xlu0 %v138, 80
    %v443 = vpop.permute.xlu0 %442
    %v444 = vsel %vm166, %v437, 0
    %v446 = vsel %vm166, %v439, 0
    %v448 = vsel %vm166, %v441, 0
    %v450 = vsel %vm166, %v443, 0
    %452 = vmatprep.subr.mxu0 0.0
    %453 = vmatpush1.xpose.msra.mxu0 0.0
    %454 = vmatprep.subr.mxu0 0.0
    %455 = vmatpush1.xpose.msra.mxu0 0.0
    %456 = vmatprep.subr.mxu0 0.0
    %457 = vmatpush1.xpose.msra.mxu0 0.0
    %458 = vmatprep.subr.mxu0 0.0
    %459 = vmatpush1.xpose.msra.mxu0 0.0
    %460 = vmatprep.subr.mxu0 0.0
    %461 = vmatpush1.xpose.msra.mxu0 0.0
    %462 = vmatprep.subr.mxu0 0.0
    %463 = vmatpush1.xpose.msra.mxu0 0.0
    %464 = vmatprep.subr.mxu0 0.0
    %465 = vmatpush1.xpose.msra.mxu0 0.0
    %466 = vmatprep.subr.mxu0 0.0
    %467 = vmatpush1.xpose.msra.mxu0 0.0
    %468 = vmatprep.subr.mxu0 0.0
    %469 = vmatpush1.xpose.msra.mxu0 0.0
    %470 = vmatprep.subr.mxu0 0.0
    %471 = vmatpush1.xpose.msra.mxu0 0.0
    %472 = vmatprep.subr.mxu0 0.0
    %473 = vmatpush1.xpose.msra.mxu0 0.0
    %474 = vmatprep.subr.mxu0 0.0
    %475 = vmatpush1.xpose.msra.mxu0 0.0
    %476 = vmatprep.subr.mxu0 0.0
    %477 = vmatpush1.xpose.msra.mxu0 0.0
    %478 = vmatprep.subr.mxu0 0.0
    %479 = vmatpush1.xpose.msra.mxu0 0.0
    %480 = vmatprep.subr.mxu0 0.0
    %481 = vmatpush1.xpose.msra.mxu0 %v450
    %482 = vmatprep.subr.mxu0 0.0
    %483 = vmatpush1.xpose.msra.mxu0 %v448
    %484 = vmatprep.subr.mxu0 0.0
    %485 = vmatpush2.xpose.msra.mxu0 0.0
    %486 = vmatprep.subr.mxu0 0.0
    %487 = vmatpush2.xpose.msra.mxu0 0.0
    %488 = vmatprep.subr.mxu0 0.0
    %489 = vmatpush2.xpose.msra.mxu0 0.0
    %490 = vmatprep.subr.mxu0 0.0
    %491 = vmatpush2.xpose.msra.mxu0 0.0
    %492 = vmatprep.subr.mxu0 0.0
    %493 = vmatpush2.xpose.msra.mxu0 0.0
    %494 = vmatprep.subr.mxu0 0.0
    %495 = vmatpush2.xpose.msra.mxu0 0.0
    %496 = vmatprep.subr.mxu0 0.0
    %497 = vmatpush2.xpose.msra.mxu0 0.0
    %498 = vmatprep.subr.mxu0 0.0
    %499 = vmatpush2.xpose.msra.mxu0 0.0
    %500 = vmatprep.subr.mxu0 0.0
    %501 = vmatpush2.xpose.msra.mxu0 0.0
    %502 = vmatprep.subr.mxu0 0.0
    %503 = vmatpush2.xpose.msra.mxu0 0.0
    %504 = vmatprep.subr.mxu0 0.0
    %505 = vmatpush2.xpose.msra.mxu0 0.0
    %506 = vmatprep.subr.mxu0 0.0
    %507 = vmatpush2.xpose.msra.mxu0 0.0
    %508 = vmatprep.subr.mxu0 0.0
    %509 = vmatpush2.xpose.msra.mxu0 0.0
    %510 = vmatprep.subr.mxu0 0.0
    %511 = vmatpush2.xpose.msra.mxu0 0.0
    %512 = vmatprep.subr.mxu0 0.0
    %513 = vmatpush2.xpose.msra.mxu0 0.0
    %514 = vmatprep.subr.mxu0 0.0
    %515 = vmatpush2.xpose.msra.mxu0 0.0
    %516 = vmatprep.mubr.f32.mxu0 0.0
    %517 = vmatmul.mubr.f32.gmra.mxu0 %v444
    %v518 = vpop.f32.mrf.mxu0
    %v519 = vadd.f32 0.0, %v518
    %v520 = vpop.f32.mrf.mxu0
    %521 = vmatprep.mubr.f32.mxu0 0.0
    %522 = vmatmul.mubr.f32.gmra.mxu0 %v446
    %v523 = vpop.f32.mrf.mxu0
    %v524 = vadd.f32 0.0, %v523
    %v525 = vpop.f32.mrf.mxu0
    %526 = vdwg.mxu0
    %527 = vrot.lane.b32.xlu0 %v120, 64
    %v528 = vpop.permute.xlu0 %527
    %529 = vrot.lane.b32.xlu0 %v126, 64
    %v530 = vpop.permute.xlu0 %529
    %531 = vrot.lane.b32.xlu0 %v132, 64
    %v532 = vpop.permute.xlu0 %531
    %533 = vrot.lane.b32.xlu0 %v138, 64
    %v534 = vpop.permute.xlu0 %533
    %v535 = vsel %vm166, %v528, 0
    %v537 = vsel %vm166, %v530, 0
    %v539 = vsel %vm166, %v532, 0
    %v541 = vsel %vm166, %v534, 0
    %543 = vmatprep.subr.mxu0 0.0
    %544 = vmatpush1.xpose.msra.mxu0 0.0
    %545 = vmatprep.subr.mxu0 0.0
    %546 = vmatpush1.xpose.msra.mxu0 0.0
    %547 = vmatprep.subr.mxu0 0.0
    %548 = vmatpush1.xpose.msra.mxu0 0.0
    %549 = vmatprep.subr.mxu0 0.0
    %550 = vmatpush1.xpose.msra.mxu0 0.0
    %551 = vmatprep.subr.mxu0 0.0
    %552 = vmatpush1.xpose.msra.mxu0 0.0
    %553 = vmatprep.subr.mxu0 0.0
    %554 = vmatpush1.xpose.msra.mxu0 0.0
    %555 = vmatprep.subr.mxu0 0.0
    %556 = vmatpush1.xpose.msra.mxu0 0.0
    %557 = vmatprep.subr.mxu0 0.0
    %558 = vmatpush1.xpose.msra.mxu0 0.0
    %559 = vmatprep.subr.mxu0 0.0
    %560 = vmatpush1.xpose.msra.mxu0 0.0
    %561 = vmatprep.subr.mxu0 0.0
    %562 = vmatpush1.xpose.msra.mxu0 0.0
    %563 = vmatprep.subr.mxu0 0.0
    %564 = vmatpush1.xpose.msra.mxu0 0.0
    %565 = vmatprep.subr.mxu0 0.0
    %566 = vmatpush1.xpose.msra.mxu0 0.0
    %567 = vmatprep.subr.mxu0 0.0
    %568 = vmatpush1.xpose.msra.mxu0 0.0
    %569 = vmatprep.subr.mxu0 0.0
    %570 = vmatpush1.xpose.msra.mxu0 0.0
    %571 = vmatprep.subr.mxu0 0.0
    %572 = vmatpush1.xpose.msra.mxu0 %v541
    %573 = vmatprep.subr.mxu0 0.0
    %574 = vmatpush1.xpose.msra.mxu0 %v539
    %575 = vmatprep.subr.mxu0 0.0
    %576 = vmatpush2.xpose.msra.mxu0 0.0
    %577 = vmatprep.subr.mxu0 0.0
    %578 = vmatpush2.xpose.msra.mxu0 0.0
    %579 = vmatprep.subr.mxu0 0.0
    %580 = vmatpush2.xpose.msra.mxu0 0.0
    %581 = vmatprep.subr.mxu0 0.0
    %582 = vmatpush2.xpose.msra.mxu0 0.0
    %583 = vmatprep.subr.mxu0 0.0
    %584 = vmatpush2.xpose.msra.mxu0 0.0
    %585 = vmatprep.subr.mxu0 0.0
    %586 = vmatpush2.xpose.msra.mxu0 0.0
    %587 = vmatprep.subr.mxu0 0.0
    %588 = vmatpush2.xpose.msra.mxu0 0.0
    %589 = vmatprep.subr.mxu0 0.0
    %590 = vmatpush2.xpose.msra.mxu0 0.0
    %591 = vmatprep.subr.mxu0 0.0
    %592 = vmatpush2.xpose.msra.mxu0 0.0
    %593 = vmatprep.subr.mxu0 0.0
    %594 = vmatpush2.xpose.msra.mxu0 0.0
    %595 = vmatprep.subr.mxu0 0.0
    %596 = vmatpush2.xpose.msra.mxu0 0.0
    %597 = vmatprep.subr.mxu0 0.0
    %598 = vmatpush2.xpose.msra.mxu0 0.0
    %599 = vmatprep.subr.mxu0 0.0
    %600 = vmatpush2.xpose.msra.mxu0 0.0
    %601 = vmatprep.subr.mxu0 0.0
    %602 = vmatpush2.xpose.msra.mxu0 0.0
    %603 = vmatprep.subr.mxu0 0.0
    %604 = vmatpush2.xpose.msra.mxu0 0.0
    %605 = vmatprep.subr.mxu0 0.0
    %606 = vmatpush2.xpose.msra.mxu0 0.0
    %607 = vmatprep.mubr.f32.mxu0 0.0
    %608 = vmatmul.mubr.f32.gmra.mxu0 %v535
    %v609 = vpop.f32.mrf.mxu0
    %v610 = vadd.f32 0.0, %v609
    %v611 = vpop.f32.mrf.mxu0
    %612 = vmatprep.mubr.f32.mxu0 0.0
    %613 = vmatmul.mubr.f32.gmra.mxu0 %v537
    %v614 = vpop.f32.mrf.mxu0
    %v615 = vadd.f32 0.0, %v614
    %v616 = vpop.f32.mrf.mxu0
    %617 = vdwg.mxu0
    %618 = vrot.lane.b32.xlu0 %v120, 48
    %v619 = vpop.permute.xlu0 %618
    %620 = vrot.lane.b32.xlu0 %v126, 48
    %v621 = vpop.permute.xlu0 %620
    %622 = vrot.lane.b32.xlu0 %v132, 48
    %v623 = vpop.permute.xlu0 %622
    %624 = vrot.lane.b32.xlu0 %v138, 48
    %v625 = vpop.permute.xlu0 %624
    %v626 = vsel %vm166, %v619, 0
    %v628 = vsel %vm166, %v621, 0
    %v630 = vsel %vm166, %v623, 0
    %v632 = vsel %vm166, %v625, 0
    %634 = vmatprep.subr.mxu0 0.0
    %635 = vmatpush1.xpose.msra.mxu0 0.0
    %636 = vmatprep.subr.mxu0 0.0
    %637 = vmatpush1.xpose.msra.mxu0 0.0
    %638 = vmatprep.subr.mxu0 0.0
    %639 = vmatpush1.xpose.msra.mxu0 0.0
    %640 = vmatprep.subr.mxu0 0.0
    %641 = vmatpush1.xpose.msra.mxu0 0.0
    %642 = vmatprep.subr.mxu0 0.0
    %643 = vmatpush1.xpose.msra.mxu0 0.0
    %644 = vmatprep.subr.mxu0 0.0
    %645 = vmatpush1.xpose.msra.mxu0 0.0
    %646 = vmatprep.subr.mxu0 0.0
    %647 = vmatpush1.xpose.msra.mxu0 0.0
    %648 = vmatprep.subr.mxu0 0.0
    %649 = vmatpush1.xpose.msra.mxu0 0.0
    %650 = vmatprep.subr.mxu0 0.0
    %651 = vmatpush1.xpose.msra.mxu0 0.0
    %652 = vmatprep.subr.mxu0 0.0
    %653 = vmatpush1.xpose.msra.mxu0 0.0
    %654 = vmatprep.subr.mxu0 0.0
    %655 = vmatpush1.xpose.msra.mxu0 0.0
    %656 = vmatprep.subr.mxu0 0.0
    %657 = vmatpush1.xpose.msra.mxu0 0.0
    %658 = vmatprep.subr.mxu0 0.0
    %659 = vmatpush1.xpose.msra.mxu0 0.0
    %660 = vmatprep.subr.mxu0 0.0
    %661 = vmatpush1.xpose.msra.mxu0 0.0
    %662 = vmatprep.subr.mxu0 0.0
    %663 = vmatpush1.xpose.msra.mxu0 %v632
    %664 = vmatprep.subr.mxu0 0.0
    %665 = vmatpush1.xpose.msra.mxu0 %v630
    %666 = vmatprep.subr.mxu0 0.0
    %667 = vmatpush2.xpose.msra.mxu0 0.0
    %668 = vmatprep.subr.mxu0 0.0
    %669 = vmatpush2.xpose.msra.mxu0 0.0
    %670 = vmatprep.subr.mxu0 0.0
    %671 = vmatpush2.xpose.msra.mxu0 0.0
    %672 = vmatprep.subr.mxu0 0.0
    %673 = vmatpush2.xpose.msra.mxu0 0.0
    %674 = vmatprep.subr.mxu0 0.0
    %675 = vmatpush2.xpose.msra.mxu0 0.0
    %676 = vmatprep.subr.mxu0 0.0
    %677 = vmatpush2.xpose.msra.mxu0 0.0
    %678 = vmatprep.subr.mxu0 0.0
    %679 = vmatpush2.xpose.msra.mxu0 0.0
    %680 = vmatprep.subr.mxu0 0.0
    %681 = vmatpush2.xpose.msra.mxu0 0.0
    %682 = vmatprep.subr.mxu0 0.0
    %683 = vmatpush2.xpose.msra.mxu0 0.0
    %684 = vmatprep.subr.mxu0 0.0
    %685 = vmatpush2.xpose.msra.mxu0 0.0
    %686 = vmatprep.subr.mxu0 0.0
    %687 = vmatpush2.xpose.msra.mxu0 0.0
    %688 = vmatprep.subr.mxu0 0.0
    %689 = vmatpush2.xpose.msra.mxu0 0.0
    %690 = vmatprep.subr.mxu0 0.0
    %691 = vmatpush2.xpose.msra.mxu0 0.0
    %692 = vmatprep.subr.mxu0 0.0
    %693 = vmatpush2.xpose.msra.mxu0 0.0
    %694 = vmatprep.subr.mxu0 0.0
    %695 = vmatpush2.xpose.msra.mxu0 0.0
    %696 = vmatprep.subr.mxu0 0.0
    %697 = vmatpush2.xpose.msra.mxu0 0.0
    %698 = vmatprep.mubr.f32.mxu0 0.0
    %699 = vmatmul.mubr.f32.gmra.mxu0 %v626
    %v700 = vpop.f32.mrf.mxu0
    %v701 = vadd.f32 0.0, %v700
    %v702 = vpop.f32.mrf.mxu0
    %703 = vmatprep.mubr.f32.mxu0 0.0
    %704 = vmatmul.mubr.f32.gmra.mxu0 %v628
    %v705 = vpop.f32.mrf.mxu0
    %v706 = vadd.f32 0.0, %v705
    %v707 = vpop.f32.mrf.mxu0
    %708 = vdwg.mxu0
    %709 = vrot.lane.b32.xlu0 %v120, 32
    %v710 = vpop.permute.xlu0 %709
    %711 = vrot.lane.b32.xlu0 %v126, 32
    %v712 = vpop.permute.xlu0 %711
    %713 = vrot.lane.b32.xlu0 %v132, 32
    %v714 = vpop.permute.xlu0 %713
    %715 = vrot.lane.b32.xlu0 %v138, 32
    %v716 = vpop.permute.xlu0 %715
    %v717 = vsel %vm166, %v710, 0
    %v719 = vsel %vm166, %v712, 0
    %v721 = vsel %vm166, %v714, 0
    %v723 = vsel %vm166, %v716, 0
    %725 = vmatprep.subr.mxu0 0.0
    %726 = vmatpush1.xpose.msra.mxu0 0.0
    %727 = vmatprep.subr.mxu0 0.0
    %728 = vmatpush1.xpose.msra.mxu0 0.0
    %729 = vmatprep.subr.mxu0 0.0
    %730 = vmatpush1.xpose.msra.mxu0 0.0
    %731 = vmatprep.subr.mxu0 0.0
    %732 = vmatpush1.xpose.msra.mxu0 0.0
    %733 = vmatprep.subr.mxu0 0.0
    %734 = vmatpush1.xpose.msra.mxu0 0.0
    %735 = vmatprep.subr.mxu0 0.0
    %736 = vmatpush1.xpose.msra.mxu0 0.0
    %737 = vmatprep.subr.mxu0 0.0
    %738 = vmatpush1.xpose.msra.mxu0 0.0
    %739 = vmatprep.subr.mxu0 0.0
    %740 = vmatpush1.xpose.msra.mxu0 0.0
    %741 = vmatprep.subr.mxu0 0.0
    %742 = vmatpush1.xpose.msra.mxu0 0.0
    %743 = vmatprep.subr.mxu0 0.0
    %744 = vmatpush1.xpose.msra.mxu0 0.0
    %745 = vmatprep.subr.mxu0 0.0
    %746 = vmatpush1.xpose.msra.mxu0 0.0
    %747 = vmatprep.subr.mxu0 0.0
    %748 = vmatpush1.xpose.msra.mxu0 0.0
    %749 = vmatprep.subr.mxu0 0.0
    %750 = vmatpush1.xpose.msra.mxu0 0.0
    %751 = vmatprep.subr.mxu0 0.0
    %752 = vmatpush1.xpose.msra.mxu0 0.0
    %753 = vmatprep.subr.mxu0 0.0
    %754 = vmatpush1.xpose.msra.mxu0 %v723
    %755 = vmatprep.subr.mxu0 0.0
    %756 = vmatpush1.xpose.msra.mxu0 %v721
    %757 = vmatprep.subr.mxu0 0.0
    %758 = vmatpush2.xpose.msra.mxu0 0.0
    %759 = vmatprep.subr.mxu0 0.0
    %760 = vmatpush2.xpose.msra.mxu0 0.0
    %761 = vmatprep.subr.mxu0 0.0
    %762 = vmatpush2.xpose.msra.mxu0 0.0
    %763 = vmatprep.subr.mxu0 0.0
    %764 = vmatpush2.xpose.msra.mxu0 0.0
    %765 = vmatprep.subr.mxu0 0.0
    %766 = vmatpush2.xpose.msra.mxu0 0.0
    %767 = vmatprep.subr.mxu0 0.0
    %768 = vmatpush2.xpose.msra.mxu0 0.0
    %769 = vmatprep.subr.mxu0 0.0
    %770 = vmatpush2.xpose.msra.mxu0 0.0
    %771 = vmatprep.subr.mxu0 0.0
    %772 = vmatpush2.xpose.msra.mxu0 0.0
    %773 = vmatprep.subr.mxu0 0.0
    %774 = vmatpush2.xpose.msra.mxu0 0.0
    %775 = vmatprep.subr.mxu0 0.0
    %776 = vmatpush2.xpose.msra.mxu0 0.0
    %777 = vmatprep.subr.mxu0 0.0
    %778 = vmatpush2.xpose.msra.mxu0 0.0
    %779 = vmatprep.subr.mxu0 0.0
    %780 = vmatpush2.xpose.msra.mxu0 0.0
    %781 = vmatprep.subr.mxu0 0.0
    %782 = vmatpush2.xpose.msra.mxu0 0.0
    %783 = vmatprep.subr.mxu0 0.0
    %784 = vmatpush2.xpose.msra.mxu0 0.0
    %785 = vmatprep.subr.mxu0 0.0
    %786 = vmatpush2.xpose.msra.mxu0 0.0
    %787 = vmatprep.subr.mxu0 0.0
    %788 = vmatpush2.xpose.msra.mxu0 0.0
    %789 = vmatprep.mubr.f32.mxu0 0.0
    %790 = vmatmul.mubr.f32.gmra.mxu0 %v717
    %v791 = vpop.f32.mrf.mxu0
    %v792 = vadd.f32 0.0, %v791
    %v793 = vpop.f32.mrf.mxu0
    %794 = vmatprep.mubr.f32.mxu0 0.0
    %795 = vmatmul.mubr.f32.gmra.mxu0 %v719
    %v796 = vpop.f32.mrf.mxu0
    %v797 = vadd.f32 0.0, %v796
    %v798 = vpop.f32.mrf.mxu0
    %799 = vdwg.mxu0
    %800 = vrot.lane.b32.xlu0 %v120, 16
    %v801 = vpop.permute.xlu0 %800
    %802 = vrot.lane.b32.xlu0 %v126, 16
    %v803 = vpop.permute.xlu0 %802
    %804 = vrot.lane.b32.xlu0 %v132, 16
    %v805 = vpop.permute.xlu0 %804
    %806 = vrot.lane.b32.xlu0 %v138, 16
    %v807 = vpop.permute.xlu0 %806
    %v808 = vsel %vm166, %v801, 0
    %v810 = vsel %vm166, %v803, 0
    %v812 = vsel %vm166, %v805, 0
    %v814 = vsel %vm166, %v807, 0
    %816 = vmatprep.subr.mxu0 0.0
    %817 = vmatpush1.xpose.msra.mxu0 0.0
    %818 = vmatprep.subr.mxu0 0.0
    %819 = vmatpush1.xpose.msra.mxu0 0.0
    %820 = vmatprep.subr.mxu0 0.0
    %821 = vmatpush1.xpose.msra.mxu0 0.0
    %822 = vmatprep.subr.mxu0 0.0
    %823 = vmatpush1.xpose.msra.mxu0 0.0
    %824 = vmatprep.subr.mxu0 0.0
    %825 = vmatpush1.xpose.msra.mxu0 0.0
    %826 = vmatprep.subr.mxu0 0.0
    %827 = vmatpush1.xpose.msra.mxu0 0.0
    %828 = vmatprep.subr.mxu0 0.0
    %829 = vmatpush1.xpose.msra.mxu0 0.0
    %830 = vmatprep.subr.mxu0 0.0
    %831 = vmatpush1.xpose.msra.mxu0 0.0
    %832 = vmatprep.subr.mxu0 0.0
    %833 = vmatpush1.xpose.msra.mxu0 0.0
    %834 = vmatprep.subr.mxu0 0.0
    %835 = vmatpush1.xpose.msra.mxu0 0.0
    %836 = vmatprep.subr.mxu0 0.0
    %837 = vmatpush1.xpose.msra.mxu0 0.0
    %838 = vmatprep.subr.mxu0 0.0
    %839 = vmatpush1.xpose.msra.mxu0 0.0
    %840 = vmatprep.subr.mxu0 0.0
    %841 = vmatpush1.xpose.msra.mxu0 0.0
    %842 = vmatprep.subr.mxu0 0.0
    %843 = vmatpush1.xpose.msra.mxu0 0.0
    %844 = vmatprep.subr.mxu0 0.0
    %845 = vmatpush1.xpose.msra.mxu0 %v814
    %846 = vmatprep.subr.mxu0 0.0
    %847 = vmatpush1.xpose.msra.mxu0 %v812
    %848 = vmatprep.subr.mxu0 0.0
    %849 = vmatpush2.xpose.msra.mxu0 0.0
    %850 = vmatprep.subr.mxu0 0.0
    %851 = vmatpush2.xpose.msra.mxu0 0.0
    %852 = vmatprep.subr.mxu0 0.0
    %853 = vmatpush2.xpose.msra.mxu0 0.0
    %854 = vmatprep.subr.mxu0 0.0
    %855 = vmatpush2.xpose.msra.mxu0 0.0
    %856 = vmatprep.subr.mxu0 0.0
    %857 = vmatpush2.xpose.msra.mxu0 0.0
    %858 = vmatprep.subr.mxu0 0.0
    %859 = vmatpush2.xpose.msra.mxu0 0.0
    %860 = vmatprep.subr.mxu0 0.0
    %861 = vmatpush2.xpose.msra.mxu0 0.0
    %862 = vmatprep.subr.mxu0 0.0
    %863 = vmatpush2.xpose.msra.mxu0 0.0
    %864 = vmatprep.subr.mxu0 0.0
    %865 = vmatpush2.xpose.msra.mxu0 0.0
    %866 = vmatprep.subr.mxu0 0.0
    %867 = vmatpush2.xpose.msra.mxu0 0.0
    %868 = vmatprep.subr.mxu0 0.0
    %869 = vmatpush2.xpose.msra.mxu0 0.0
    %870 = vmatprep.subr.mxu0 0.0
    %871 = vmatpush2.xpose.msra.mxu0 0.0
    %872 = vmatprep.subr.mxu0 0.0
    %873 = vmatpush2.xpose.msra.mxu0 0.0
    %874 = vmatprep.subr.mxu0 0.0
    %875 = vmatpush2.xpose.msra.mxu0 0.0
    %876 = vmatprep.subr.mxu0 0.0
    %877 = vmatpush2.xpose.msra.mxu0 0.0
    %878 = vmatprep.subr.mxu0 0.0
    %879 = vmatpush2.xpose.msra.mxu0 0.0
    %880 = vmatprep.mubr.f32.mxu0 0.0
    %881 = vmatmul.mubr.f32.gmra.mxu0 %v808
    %v882 = vpop.f32.mrf.mxu0
    %v883 = vadd.f32 0.0, %v882
    %v884 = vpop.f32.mrf.mxu0
    %885 = vmatprep.mubr.f32.mxu0 0.0
    %886 = vmatmul.mubr.f32.gmra.mxu0 %v810
    %v887 = vpop.f32.mrf.mxu0
    %v888 = vadd.f32 0.0, %v887
    %v889 = vpop.f32.mrf.mxu0
    %890 = vdwg.mxu0
    %v892 = vsel %vm166, %v122, 0
    %v895 = vsel %vm166, %v128, 0
    %v898 = vsel %vm166, %v134, 0
    %v901 = vsel %vm166, %v140, 0
    %903 = vmatprep.subr.mxu0 0.0
    %904 = vmatpush1.xpose.msra.mxu0 0.0
    %905 = vmatprep.subr.mxu0 0.0
    %906 = vmatpush1.xpose.msra.mxu0 0.0
    %907 = vmatprep.subr.mxu0 0.0
    %908 = vmatpush1.xpose.msra.mxu0 0.0
    %909 = vmatprep.subr.mxu0 0.0
    %910 = vmatpush1.xpose.msra.mxu0 0.0
    %911 = vmatprep.subr.mxu0 0.0
    %912 = vmatpush1.xpose.msra.mxu0 0.0
    %913 = vmatprep.subr.mxu0 0.0
    %914 = vmatpush1.xpose.msra.mxu0 0.0
    %915 = vmatprep.subr.mxu0 0.0
    %916 = vmatpush1.xpose.msra.mxu0 0.0
    %917 = vmatprep.subr.mxu0 0.0
    %918 = vmatpush1.xpose.msra.mxu0 0.0
    %919 = vmatprep.subr.mxu0 0.0
    %920 = vmatpush1.xpose.msra.mxu0 0.0
    %921 = vmatprep.subr.mxu0 0.0
    %922 = vmatpush1.xpose.msra.mxu0 0.0
    %923 = vmatprep.subr.mxu0 0.0
    %924 = vmatpush1.xpose.msra.mxu0 0.0
    %925 = vmatprep.subr.mxu0 0.0
    %926 = vmatpush1.xpose.msra.mxu0 0.0
    %927 = vmatprep.subr.mxu0 0.0
    %928 = vmatpush1.xpose.msra.mxu0 0.0
    %929 = vmatprep.subr.mxu0 0.0
    %930 = vmatpush1.xpose.msra.mxu0 0.0
    %931 = vmatprep.subr.mxu0 0.0
    %932 = vmatpush1.xpose.msra.mxu0 %v901
    %933 = vmatprep.subr.mxu0 0.0
    %934 = vmatpush1.xpose.msra.mxu0 %v898
    %935 = vmatprep.subr.mxu0 0.0
    %936 = vmatpush2.xpose.msra.mxu0 0.0
    %937 = vmatprep.subr.mxu0 0.0
    %938 = vmatpush2.xpose.msra.mxu0 0.0
    %939 = vmatprep.subr.mxu0 0.0
    %940 = vmatpush2.xpose.msra.mxu0 0.0
    %941 = vmatprep.subr.mxu0 0.0
    %942 = vmatpush2.xpose.msra.mxu0 0.0
    %943 = vmatprep.subr.mxu0 0.0
    %944 = vmatpush2.xpose.msra.mxu0 0.0
    %945 = vmatprep.subr.mxu0 0.0
    %946 = vmatpush2.xpose.msra.mxu0 0.0
    %947 = vmatprep.subr.mxu0 0.0
    %948 = vmatpush2.xpose.msra.mxu0 0.0
    %949 = vmatprep.subr.mxu0 0.0
    %950 = vmatpush2.xpose.msra.mxu0 0.0
    %951 = vmatprep.subr.mxu0 0.0
    %952 = vmatpush2.xpose.msra.mxu0 0.0
    %953 = vmatprep.subr.mxu0 0.0
    %954 = vmatpush2.xpose.msra.mxu0 0.0
    %955 = vmatprep.subr.mxu0 0.0
    %956 = vmatpush2.xpose.msra.mxu0 0.0
    %957 = vmatprep.subr.mxu0 0.0
    %958 = vmatpush2.xpose.msra.mxu0 0.0
    %959 = vmatprep.subr.mxu0 0.0
    %960 = vmatpush2.xpose.msra.mxu0 0.0
    %961 = vmatprep.subr.mxu0 0.0
    %962 = vmatpush2.xpose.msra.mxu0 0.0
    %963 = vmatprep.subr.mxu0 0.0
    %964 = vmatpush2.xpose.msra.mxu0 0.0
    %965 = vmatprep.subr.mxu0 0.0
    %966 = vmatpush2.xpose.msra.mxu0 0.0
    %967 = vmatprep.mubr.f32.mxu0 0.0
    %968 = vmatmul.mubr.f32.gmra.mxu0 %v892
    %v969 = vpop.f32.mrf.mxu0
    %v970 = vadd.f32 0.0, %v969
    %v971 = vpop.f32.mrf.mxu0
    %972 = vmatprep.mubr.f32.mxu0 0.0
    %973 = vmatmul.mubr.f32.gmra.mxu0 %v895
    %v974 = vpop.f32.mrf.mxu0
    %v975 = vadd.f32 0.0, %v974
    %v976 = vpop.f32.mrf.mxu0
    %977 = vdwg.mxu0
    %978 = vrot.lane.b32.xlu0 %v122, 112
    %v979 = vpop.permute.xlu0 %978
    %980 = vrot.lane.b32.xlu0 %v128, 112
    %v981 = vpop.permute.xlu0 %980
    %982 = vrot.lane.b32.xlu0 %v134, 112
    %v983 = vpop.permute.xlu0 %982
    %984 = vrot.lane.b32.xlu0 %v140, 112
    %v985 = vpop.permute.xlu0 %984
    %v986 = vsel %vm166, %v979, 0
    %v988 = vsel %vm166, %v981, 0
    %v990 = vsel %vm166, %v983, 0
    %v992 = vsel %vm166, %v985, 0
    %994 = vmatprep.subr.mxu0 0.0
    %995 = vmatpush1.xpose.msra.mxu0 0.0
    %996 = vmatprep.subr.mxu0 0.0
    %997 = vmatpush1.xpose.msra.mxu0 0.0
    %998 = vmatprep.subr.mxu0 0.0
    %999 = vmatpush1.xpose.msra.mxu0 0.0
    %1000 = vmatprep.subr.mxu0 0.0
    %1001 = vmatpush1.xpose.msra.mxu0 0.0
    %1002 = vmatprep.subr.mxu0 0.0
    %1003 = vmatpush1.xpose.msra.mxu0 0.0
    %1004 = vmatprep.subr.mxu0 0.0
    %1005 = vmatpush1.xpose.msra.mxu0 0.0
    %1006 = vmatprep.subr.mxu0 0.0
    %1007 = vmatpush1.xpose.msra.mxu0 0.0
    %1008 = vmatprep.subr.mxu0 0.0
    %1009 = vmatpush1.xpose.msra.mxu0 0.0
    %1010 = vmatprep.subr.mxu0 0.0
    %1011 = vmatpush1.xpose.msra.mxu0 0.0
    %1012 = vmatprep.subr.mxu0 0.0
    %1013 = vmatpush1.xpose.msra.mxu0 0.0
    %1014 = vmatprep.subr.mxu0 0.0
    %1015 = vmatpush1.xpose.msra.mxu0 0.0
    %1016 = vmatprep.subr.mxu0 0.0
    %1017 = vmatpush1.xpose.msra.mxu0 0.0
    %1018 = vmatprep.subr.mxu0 0.0
    %1019 = vmatpush1.xpose.msra.mxu0 0.0
    %1020 = vmatprep.subr.mxu0 0.0
    %1021 = vmatpush1.xpose.msra.mxu0 0.0
    %1022 = vmatprep.subr.mxu0 0.0
    %1023 = vmatpush1.xpose.msra.mxu0 %v992
    %1024 = vmatprep.subr.mxu0 0.0
    %1025 = vmatpush1.xpose.msra.mxu0 %v990
    %1026 = vmatprep.subr.mxu0 0.0
    %1027 = vmatpush2.xpose.msra.mxu0 0.0
    %1028 = vmatprep.subr.mxu0 0.0
    %1029 = vmatpush2.xpose.msra.mxu0 0.0
    %1030 = vmatprep.subr.mxu0 0.0
    %1031 = vmatpush2.xpose.msra.mxu0 0.0
    %1032 = vmatprep.subr.mxu0 0.0
    %1033 = vmatpush2.xpose.msra.mxu0 0.0
    %1034 = vmatprep.subr.mxu0 0.0
    %1035 = vmatpush2.xpose.msra.mxu0 0.0
    %1036 = vmatprep.subr.mxu0 0.0
    %1037 = vmatpush2.xpose.msra.mxu0 0.0
    %1038 = vmatprep.subr.mxu0 0.0
    %1039 = vmatpush2.xpose.msra.mxu0 0.0
    %1040 = vmatprep.subr.mxu0 0.0
    %1041 = vmatpush2.xpose.msra.mxu0 0.0
    %1042 = vmatprep.subr.mxu0 0.0
    %1043 = vmatpush2.xpose.msra.mxu0 0.0
    %1044 = vmatprep.subr.mxu0 0.0
    %1045 = vmatpush2.xpose.msra.mxu0 0.0
    %1046 = vmatprep.subr.mxu0 0.0
    %1047 = vmatpush2.xpose.msra.mxu0 0.0
    %1048 = vmatprep.subr.mxu0 0.0
    %1049 = vmatpush2.xpose.msra.mxu0 0.0
    %1050 = vmatprep.subr.mxu0 0.0
    %1051 = vmatpush2.xpose.msra.mxu0 0.0
    %1052 = vmatprep.subr.mxu0 0.0
    %1053 = vmatpush2.xpose.msra.mxu0 0.0
    %1054 = vmatprep.subr.mxu0 0.0
    %1055 = vmatpush2.xpose.msra.mxu0 0.0
    %1056 = vmatprep.subr.mxu0 0.0
    %1057 = vmatpush2.xpose.msra.mxu0 0.0
    %1058 = vmatprep.mubr.f32.mxu0 0.0
    %1059 = vmatmul.mubr.f32.gmra.mxu0 %v986
    %v1060 = vpop.f32.mrf.mxu0
    %v1061 = vadd.f32 0.0, %v1060
    %v1062 = vpop.f32.mrf.mxu0
    %1063 = vmatprep.mubr.f32.mxu0 0.0
    %1064 = vmatmul.mubr.f32.gmra.mxu0 %v988
    %v1065 = vpop.f32.mrf.mxu0
    %v1066 = vadd.f32 0.0, %v1065
    %v1067 = vpop.f32.mrf.mxu0
    %1068 = vdwg.mxu0
    %1069 = vrot.lane.b32.xlu0 %v122, 96
    %v1070 = vpop.permute.xlu0 %1069
    %1071 = vrot.lane.b32.xlu0 %v128, 96
    %v1072 = vpop.permute.xlu0 %1071
    %1073 = vrot.lane.b32.xlu0 %v134, 96
    %v1074 = vpop.permute.xlu0 %1073
    %1075 = vrot.lane.b32.xlu0 %v140, 96
    %v1076 = vpop.permute.xlu0 %1075
    %v1077 = vsel %vm166, %v1070, 0
    %v1079 = vsel %vm166, %v1072, 0
    %v1081 = vsel %vm166, %v1074, 0
    %v1083 = vsel %vm166, %v1076, 0
    %1085 = vmatprep.subr.mxu0 0.0
    %1086 = vmatpush1.xpose.msra.mxu0 0.0
    %1087 = vmatprep.subr.mxu0 0.0
    %1088 = vmatpush1.xpose.msra.mxu0 0.0
    %1089 = vmatprep.subr.mxu0 0.0
    %1090 = vmatpush1.xpose.msra.mxu0 0.0
    %1091 = vmatprep.subr.mxu0 0.0
    %1092 = vmatpush1.xpose.msra.mxu0 0.0
    %1093 = vmatprep.subr.mxu0 0.0
    %1094 = vmatpush1.xpose.msra.mxu0 0.0
    %1095 = vmatprep.subr.mxu0 0.0
    %1096 = vmatpush1.xpose.msra.mxu0 0.0
    %1097 = vmatprep.subr.mxu0 0.0
    %1098 = vmatpush1.xpose.msra.mxu0 0.0
    %1099 = vmatprep.subr.mxu0 0.0
    %1100 = vmatpush1.xpose.msra.mxu0 0.0
    %1101 = vmatprep.subr.mxu0 0.0
    %1102 = vmatpush1.xpose.msra.mxu0 0.0
    %1103 = vmatprep.subr.mxu0 0.0
    %1104 = vmatpush1.xpose.msra.mxu0 0.0
    %1105 = vmatprep.subr.mxu0 0.0
    %1106 = vmatpush1.xpose.msra.mxu0 0.0
    %1107 = vmatprep.subr.mxu0 0.0
    %1108 = vmatpush1.xpose.msra.mxu0 0.0
    %1109 = vmatprep.subr.mxu0 0.0
    %1110 = vmatpush1.xpose.msra.mxu0 0.0
    %1111 = vmatprep.subr.mxu0 0.0
    %1112 = vmatpush1.xpose.msra.mxu0 0.0
    %1113 = vmatprep.subr.mxu0 0.0
    %1114 = vmatpush1.xpose.msra.mxu0 %v1083
    %1115 = vmatprep.subr.mxu0 0.0
    %1116 = vmatpush1.xpose.msra.mxu0 %v1081
    %1117 = vmatprep.subr.mxu0 0.0
    %1118 = vmatpush2.xpose.msra.mxu0 0.0
    %1119 = vmatprep.subr.mxu0 0.0
    %1120 = vmatpush2.xpose.msra.mxu0 0.0
    %1121 = vmatprep.subr.mxu0 0.0
    %1122 = vmatpush2.xpose.msra.mxu0 0.0
    %1123 = vmatprep.subr.mxu0 0.0
    %1124 = vmatpush2.xpose.msra.mxu0 0.0
    %1125 = vmatprep.subr.mxu0 0.0
    %1126 = vmatpush2.xpose.msra.mxu0 0.0
    %1127 = vmatprep.subr.mxu0 0.0
    %1128 = vmatpush2.xpose.msra.mxu0 0.0
    %1129 = vmatprep.subr.mxu0 0.0
    %1130 = vmatpush2.xpose.msra.mxu0 0.0
    %1131 = vmatprep.subr.mxu0 0.0
    %1132 = vmatpush2.xpose.msra.mxu0 0.0
    %1133 = vmatprep.subr.mxu0 0.0
    %1134 = vmatpush2.xpose.msra.mxu0 0.0
    %1135 = vmatprep.subr.mxu0 0.0
    %1136 = vmatpush2.xpose.msra.mxu0 0.0
    %1137 = vmatprep.subr.mxu0 0.0
    %1138 = vmatpush2.xpose.msra.mxu0 0.0
    %1139 = vmatprep.subr.mxu0 0.0
    %1140 = vmatpush2.xpose.msra.mxu0 0.0
    %1141 = vmatprep.subr.mxu0 0.0
    %1142 = vmatpush2.xpose.msra.mxu0 0.0
    %1143 = vmatprep.subr.mxu0 0.0
    %1144 = vmatpush2.xpose.msra.mxu0 0.0
    %1145 = vmatprep.subr.mxu0 0.0
    %1146 = vmatpush2.xpose.msra.mxu0 0.0
    %1147 = vmatprep.subr.mxu0 0.0
    %1148 = vmatpush2.xpose.msra.mxu0 0.0
    %1149 = vmatprep.mubr.f32.mxu0 0.0
    %1150 = vmatmul.mubr.f32.gmra.mxu0 %v1077
    %v1151 = vpop.f32.mrf.mxu0
    %v1152 = vadd.f32 0.0, %v1151
    %v1153 = vpop.f32.mrf.mxu0
    %1154 = vmatprep.mubr.f32.mxu0 0.0
    %1155 = vmatmul.mubr.f32.gmra.mxu0 %v1079
    %v1156 = vpop.f32.mrf.mxu0
    %v1157 = vadd.f32 0.0, %v1156
    %v1158 = vpop.f32.mrf.mxu0
    %1159 = vdwg.mxu0
    %1160 = vrot.lane.b32.xlu0 %v122, 80
    %v1161 = vpop.permute.xlu0 %1160
    %1162 = vrot.lane.b32.xlu0 %v128, 80
    %v1163 = vpop.permute.xlu0 %1162
    %1164 = vrot.lane.b32.xlu0 %v134, 80
    %v1165 = vpop.permute.xlu0 %1164
    %1166 = vrot.lane.b32.xlu0 %v140, 80
    %v1167 = vpop.permute.xlu0 %1166
    %v1168 = vsel %vm166, %v1161, 0
    %v1170 = vsel %vm166, %v1163, 0
    %v1172 = vsel %vm166, %v1165, 0
    %v1174 = vsel %vm166, %v1167, 0
    %1176 = vmatprep.subr.mxu0 0.0
    %1177 = vmatpush1.xpose.msra.mxu0 0.0
    %1178 = vmatprep.subr.mxu0 0.0
    %1179 = vmatpush1.xpose.msra.mxu0 0.0
    %1180 = vmatprep.subr.mxu0 0.0
    %1181 = vmatpush1.xpose.msra.mxu0 0.0
    %1182 = vmatprep.subr.mxu0 0.0
    %1183 = vmatpush1.xpose.msra.mxu0 0.0
    %1184 = vmatprep.subr.mxu0 0.0
    %1185 = vmatpush1.xpose.msra.mxu0 0.0
    %1186 = vmatprep.subr.mxu0 0.0
    %1187 = vmatpush1.xpose.msra.mxu0 0.0
    %1188 = vmatprep.subr.mxu0 0.0
    %1189 = vmatpush1.xpose.msra.mxu0 0.0
    %1190 = vmatprep.subr.mxu0 0.0
    %1191 = vmatpush1.xpose.msra.mxu0 0.0
    %1192 = vmatprep.subr.mxu0 0.0
    %1193 = vmatpush1.xpose.msra.mxu0 0.0
    %1194 = vmatprep.subr.mxu0 0.0
    %1195 = vmatpush1.xpose.msra.mxu0 0.0
    %1196 = vmatprep.subr.mxu0 0.0
    %1197 = vmatpush1.xpose.msra.mxu0 0.0
    %1198 = vmatprep.subr.mxu0 0.0
    %1199 = vmatpush1.xpose.msra.mxu0 0.0
    %1200 = vmatprep.subr.mxu0 0.0
    %1201 = vmatpush1.xpose.msra.mxu0 0.0
    %1202 = vmatprep.subr.mxu0 0.0
    %1203 = vmatpush1.xpose.msra.mxu0 0.0
    %1204 = vmatprep.subr.mxu0 0.0
    %1205 = vmatpush1.xpose.msra.mxu0 %v1174
    %1206 = vmatprep.subr.mxu0 0.0
    %1207 = vmatpush1.xpose.msra.mxu0 %v1172
    %1208 = vmatprep.subr.mxu0 0.0
    %1209 = vmatpush2.xpose.msra.mxu0 0.0
    %1210 = vmatprep.subr.mxu0 0.0
    %1211 = vmatpush2.xpose.msra.mxu0 0.0
    %1212 = vmatprep.subr.mxu0 0.0
    %1213 = vmatpush2.xpose.msra.mxu0 0.0
    %1214 = vmatprep.subr.mxu0 0.0
    %1215 = vmatpush2.xpose.msra.mxu0 0.0
    %1216 = vmatprep.subr.mxu0 0.0
    %1217 = vmatpush2.xpose.msra.mxu0 0.0
    %1218 = vmatprep.subr.mxu0 0.0
    %1219 = vmatpush2.xpose.msra.mxu0 0.0
    %1220 = vmatprep.subr.mxu0 0.0
    %1221 = vmatpush2.xpose.msra.mxu0 0.0
    %1222 = vmatprep.subr.mxu0 0.0
    %1223 = vmatpush2.xpose.msra.mxu0 0.0
    %1224 = vmatprep.subr.mxu0 0.0
    %1225 = vmatpush2.xpose.msra.mxu0 0.0
    %1226 = vmatprep.subr.mxu0 0.0
    %1227 = vmatpush2.xpose.msra.mxu0 0.0
    %1228 = vmatprep.subr.mxu0 0.0
    %1229 = vmatpush2.xpose.msra.mxu0 0.0
    %1230 = vmatprep.subr.mxu0 0.0
    %1231 = vmatpush2.xpose.msra.mxu0 0.0
    %1232 = vmatprep.subr.mxu0 0.0
    %1233 = vmatpush2.xpose.msra.mxu0 0.0
    %1234 = vmatprep.subr.mxu0 0.0
    %1235 = vmatpush2.xpose.msra.mxu0 0.0
    %1236 = vmatprep.subr.mxu0 0.0
    %1237 = vmatpush2.xpose.msra.mxu0 0.0
    %1238 = vmatprep.subr.mxu0 0.0
    %1239 = vmatpush2.xpose.msra.mxu0 0.0
    %1240 = vmatprep.mubr.f32.mxu0 0.0
    %1241 = vmatmul.mubr.f32.gmra.mxu0 %v1168
    %v1242 = vpop.f32.mrf.mxu0
    %v1243 = vadd.f32 0.0, %v1242
    %v1244 = vpop.f32.mrf.mxu0
    %1245 = vmatprep.mubr.f32.mxu0 0.0
    %1246 = vmatmul.mubr.f32.gmra.mxu0 %v1170
    %v1247 = vpop.f32.mrf.mxu0
    %v1248 = vadd.f32 0.0, %v1247
    %v1249 = vpop.f32.mrf.mxu0
    %1250 = vdwg.mxu0
    %1251 = vrot.lane.b32.xlu0 %v122, 64
    %v1252 = vpop.permute.xlu0 %1251
    %1253 = vrot.lane.b32.xlu0 %v128, 64
    %v1254 = vpop.permute.xlu0 %1253
    %1255 = vrot.lane.b32.xlu0 %v134, 64
    %v1256 = vpop.permute.xlu0 %1255
    %1257 = vrot.lane.b32.xlu0 %v140, 64
    %v1258 = vpop.permute.xlu0 %1257
    %v1259 = vsel %vm166, %v1252, 0
    %v1261 = vsel %vm166, %v1254, 0
    %v1263 = vsel %vm166, %v1256, 0
    %v1265 = vsel %vm166, %v1258, 0
    %1267 = vmatprep.subr.mxu0 0.0
    %1268 = vmatpush1.xpose.msra.mxu0 0.0
    %1269 = vmatprep.subr.mxu0 0.0
    %1270 = vmatpush1.xpose.msra.mxu0 0.0
    %1271 = vmatprep.subr.mxu0 0.0
    %1272 = vmatpush1.xpose.msra.mxu0 0.0
    %1273 = vmatprep.subr.mxu0 0.0
    %1274 = vmatpush1.xpose.msra.mxu0 0.0
    %1275 = vmatprep.subr.mxu0 0.0
    %1276 = vmatpush1.xpose.msra.mxu0 0.0
    %1277 = vmatprep.subr.mxu0 0.0
    %1278 = vmatpush1.xpose.msra.mxu0 0.0
    %1279 = vmatprep.subr.mxu0 0.0
    %1280 = vmatpush1.xpose.msra.mxu0 0.0
    %1281 = vmatprep.subr.mxu0 0.0
    %1282 = vmatpush1.xpose.msra.mxu0 0.0
    %1283 = vmatprep.subr.mxu0 0.0
    %1284 = vmatpush1.xpose.msra.mxu0 0.0
    %1285 = vmatprep.subr.mxu0 0.0
    %1286 = vmatpush1.xpose.msra.mxu0 0.0
    %1287 = vmatprep.subr.mxu0 0.0
    %1288 = vmatpush1.xpose.msra.mxu0 0.0
    %1289 = vmatprep.subr.mxu0 0.0
    %1290 = vmatpush1.xpose.msra.mxu0 0.0
    %1291 = vmatprep.subr.mxu0 0.0
    %1292 = vmatpush1.xpose.msra.mxu0 0.0
    %1293 = vmatprep.subr.mxu0 0.0
    %1294 = vmatpush1.xpose.msra.mxu0 0.0
    %1295 = vmatprep.subr.mxu0 0.0
    %1296 = vmatpush1.xpose.msra.mxu0 %v1265
    %1297 = vmatprep.subr.mxu0 0.0
    %1298 = vmatpush1.xpose.msra.mxu0 %v1263
    %1299 = vmatprep.subr.mxu0 0.0
    %1300 = vmatpush2.xpose.msra.mxu0 0.0
    %1301 = vmatprep.subr.mxu0 0.0
    %1302 = vmatpush2.xpose.msra.mxu0 0.0
    %1303 = vmatprep.subr.mxu0 0.0
    %1304 = vmatpush2.xpose.msra.mxu0 0.0
    %1305 = vmatprep.subr.mxu0 0.0
    %1306 = vmatpush2.xpose.msra.mxu0 0.0
    %1307 = vmatprep.subr.mxu0 0.0
    %1308 = vmatpush2.xpose.msra.mxu0 0.0
    %1309 = vmatprep.subr.mxu0 0.0
    %1310 = vmatpush2.xpose.msra.mxu0 0.0
    %1311 = vmatprep.subr.mxu0 0.0
    %1312 = vmatpush2.xpose.msra.mxu0 0.0
    %1313 = vmatprep.subr.mxu0 0.0
    %1314 = vmatpush2.xpose.msra.mxu0 0.0
    %1315 = vmatprep.subr.mxu0 0.0
    %1316 = vmatpush2.xpose.msra.mxu0 0.0
    %1317 = vmatprep.subr.mxu0 0.0
    %1318 = vmatpush2.xpose.msra.mxu0 0.0
    %1319 = vmatprep.subr.mxu0 0.0
    %1320 = vmatpush2.xpose.msra.mxu0 0.0
    %1321 = vmatprep.subr.mxu0 0.0
    %1322 = vmatpush2.xpose.msra.mxu0 0.0
    %1323 = vmatprep.subr.mxu0 0.0
    %1324 = vmatpush2.xpose.msra.mxu0 0.0
    %1325 = vmatprep.subr.mxu0 0.0
    %1326 = vmatpush2.xpose.msra.mxu0 0.0
    %1327 = vmatprep.subr.mxu0 0.0
    %1328 = vmatpush2.xpose.msra.mxu0 0.0
    %1329 = vmatprep.subr.mxu0 0.0
    %1330 = vmatpush2.xpose.msra.mxu0 0.0
    %1331 = vmatprep.mubr.f32.mxu0 0.0
    %1332 = vmatmul.mubr.f32.gmra.mxu0 %v1259
    %v1333 = vpop.f32.mrf.mxu0
    %v1334 = vadd.f32 0.0, %v1333
    %v1335 = vpop.f32.mrf.mxu0
    %1336 = vmatprep.mubr.f32.mxu0 0.0
    %1337 = vmatmul.mubr.f32.gmra.mxu0 %v1261
    %v1338 = vpop.f32.mrf.mxu0
    %v1339 = vadd.f32 0.0, %v1338
    %v1340 = vpop.f32.mrf.mxu0
    %1341 = vdwg.mxu0
    %1342 = vrot.lane.b32.xlu0 %v122, 48
    %v1343 = vpop.permute.xlu0 %1342
    %1344 = vrot.lane.b32.xlu0 %v128, 48
    %v1345 = vpop.permute.xlu0 %1344
    %1346 = vrot.lane.b32.xlu0 %v134, 48
    %v1347 = vpop.permute.xlu0 %1346
    %1348 = vrot.lane.b32.xlu0 %v140, 48
    %v1349 = vpop.permute.xlu0 %1348
    %v1350 = vsel %vm166, %v1343, 0
    %v1352 = vsel %vm166, %v1345, 0
    %v1354 = vsel %vm166, %v1347, 0
    %v1356 = vsel %vm166, %v1349, 0
    %1358 = vmatprep.subr.mxu0 0.0
    %1359 = vmatpush1.xpose.msra.mxu0 0.0
    %1360 = vmatprep.subr.mxu0 0.0
    %1361 = vmatpush1.xpose.msra.mxu0 0.0
    %1362 = vmatprep.subr.mxu0 0.0
    %1363 = vmatpush1.xpose.msra.mxu0 0.0
    %1364 = vmatprep.subr.mxu0 0.0
    %1365 = vmatpush1.xpose.msra.mxu0 0.0
    %1366 = vmatprep.subr.mxu0 0.0
    %1367 = vmatpush1.xpose.msra.mxu0 0.0
    %1368 = vmatprep.subr.mxu0 0.0
    %1369 = vmatpush1.xpose.msra.mxu0 0.0
    %1370 = vmatprep.subr.mxu0 0.0
    %1371 = vmatpush1.xpose.msra.mxu0 0.0
    %1372 = vmatprep.subr.mxu0 0.0
    %1373 = vmatpush1.xpose.msra.mxu0 0.0
    %1374 = vmatprep.subr.mxu0 0.0
    %1375 = vmatpush1.xpose.msra.mxu0 0.0
    %1376 = vmatprep.subr.mxu0 0.0
    %1377 = vmatpush1.xpose.msra.mxu0 0.0
    %1378 = vmatprep.subr.mxu0 0.0
    %1379 = vmatpush1.xpose.msra.mxu0 0.0
    %1380 = vmatprep.subr.mxu0 0.0
    %1381 = vmatpush1.xpose.msra.mxu0 0.0
    %1382 = vmatprep.subr.mxu0 0.0
    %1383 = vmatpush1.xpose.msra.mxu0 0.0
    %1384 = vmatprep.subr.mxu0 0.0
    %1385 = vmatpush1.xpose.msra.mxu0 0.0
    %1386 = vmatprep.subr.mxu0 0.0
    %1387 = vmatpush1.xpose.msra.mxu0 %v1356
    %1388 = vmatprep.subr.mxu0 0.0
    %1389 = vmatpush1.xpose.msra.mxu0 %v1354
    %1390 = vmatprep.subr.mxu0 0.0
    %1391 = vmatpush2.xpose.msra.mxu0 0.0
    %1392 = vmatprep.subr.mxu0 0.0
    %1393 = vmatpush2.xpose.msra.mxu0 0.0
    %1394 = vmatprep.subr.mxu0 0.0
    %1395 = vmatpush2.xpose.msra.mxu0 0.0
    %1396 = vmatprep.subr.mxu0 0.0
    %1397 = vmatpush2.xpose.msra.mxu0 0.0
    %1398 = vmatprep.subr.mxu0 0.0
    %1399 = vmatpush2.xpose.msra.mxu0 0.0
    %1400 = vmatprep.subr.mxu0 0.0
    %1401 = vmatpush2.xpose.msra.mxu0 0.0
    %1402 = vmatprep.subr.mxu0 0.0
    %1403 = vmatpush2.xpose.msra.mxu0 0.0
    %1404 = vmatprep.subr.mxu0 0.0
    %1405 = vmatpush2.xpose.msra.mxu0 0.0
    %1406 = vmatprep.subr.mxu0 0.0
    %1407 = vmatpush2.xpose.msra.mxu0 0.0
    %1408 = vmatprep.subr.mxu0 0.0
    %1409 = vmatpush2.xpose.msra.mxu0 0.0
    %1410 = vmatprep.subr.mxu0 0.0
    %1411 = vmatpush2.xpose.msra.mxu0 0.0
    %1412 = vmatprep.subr.mxu0 0.0
    %1413 = vmatpush2.xpose.msra.mxu0 0.0
    %1414 = vmatprep.subr.mxu0 0.0
    %1415 = vmatpush2.xpose.msra.mxu0 0.0
    %1416 = vmatprep.subr.mxu0 0.0
    %1417 = vmatpush2.xpose.msra.mxu0 0.0
    %1418 = vmatprep.subr.mxu0 0.0
    %1419 = vmatpush2.xpose.msra.mxu0 0.0
    %1420 = vmatprep.subr.mxu0 0.0
    %1421 = vmatpush2.xpose.msra.mxu0 0.0
    %1422 = vmatprep.mubr.f32.mxu0 0.0
    %1423 = vmatmul.mubr.f32.gmra.mxu0 %v1350
    %v1424 = vpop.f32.mrf.mxu0
    %v1425 = vadd.f32 0.0, %v1424
    %v1426 = vpop.f32.mrf.mxu0
    %1427 = vmatprep.mubr.f32.mxu0 0.0
    %1428 = vmatmul.mubr.f32.gmra.mxu0 %v1352
    %v1429 = vpop.f32.mrf.mxu0
    %v1430 = vadd.f32 0.0, %v1429
    %v1431 = vpop.f32.mrf.mxu0
    %1432 = vdwg.mxu0
    %1433 = vrot.lane.b32.xlu0 %v122, 32
    %v1434 = vpop.permute.xlu0 %1433
    %1435 = vrot.lane.b32.xlu0 %v128, 32
    %v1436 = vpop.permute.xlu0 %1435
    %1437 = vrot.lane.b32.xlu0 %v134, 32
    %v1438 = vpop.permute.xlu0 %1437
    %1439 = vrot.lane.b32.xlu0 %v140, 32
    %v1440 = vpop.permute.xlu0 %1439
    %v1441 = vsel %vm166, %v1434, 0
    %v1443 = vsel %vm166, %v1436, 0
    %v1445 = vsel %vm166, %v1438, 0
    %v1447 = vsel %vm166, %v1440, 0
    %1449 = vmatprep.subr.mxu0 0.0
    %1450 = vmatpush1.xpose.msra.mxu0 0.0
    %1451 = vmatprep.subr.mxu0 0.0
    %1452 = vmatpush1.xpose.msra.mxu0 0.0
    %1453 = vmatprep.subr.mxu0 0.0
    %1454 = vmatpush1.xpose.msra.mxu0 0.0
    %1455 = vmatprep.subr.mxu0 0.0
    %1456 = vmatpush1.xpose.msra.mxu0 0.0
    %1457 = vmatprep.subr.mxu0 0.0
    %1458 = vmatpush1.xpose.msra.mxu0 0.0
    %1459 = vmatprep.subr.mxu0 0.0
    %1460 = vmatpush1.xpose.msra.mxu0 0.0
    %1461 = vmatprep.subr.mxu0 0.0
    %1462 = vmatpush1.xpose.msra.mxu0 0.0
    %1463 = vmatprep.subr.mxu0 0.0
    %1464 = vmatpush1.xpose.msra.mxu0 0.0
    %1465 = vmatprep.subr.mxu0 0.0
    %1466 = vmatpush1.xpose.msra.mxu0 0.0
    %1467 = vmatprep.subr.mxu0 0.0
    %1468 = vmatpush1.xpose.msra.mxu0 0.0
    %1469 = vmatprep.subr.mxu0 0.0
    %1470 = vmatpush1.xpose.msra.mxu0 0.0
    %1471 = vmatprep.subr.mxu0 0.0
    %1472 = vmatpush1.xpose.msra.mxu0 0.0
    %1473 = vmatprep.subr.mxu0 0.0
    %1474 = vmatpush1.xpose.msra.mxu0 0.0
    %1475 = vmatprep.subr.mxu0 0.0
    %1476 = vmatpush1.xpose.msra.mxu0 0.0
    %1477 = vmatprep.subr.mxu0 0.0
    %1478 = vmatpush1.xpose.msra.mxu0 %v1447
    %1479 = vmatprep.subr.mxu0 0.0
    %1480 = vmatpush1.xpose.msra.mxu0 %v1445
    %1481 = vmatprep.subr.mxu0 0.0
    %1482 = vmatpush2.xpose.msra.mxu0 0.0
    %1483 = vmatprep.subr.mxu0 0.0
    %1484 = vmatpush2.xpose.msra.mxu0 0.0
    %1485 = vmatprep.subr.mxu0 0.0
    %1486 = vmatpush2.xpose.msra.mxu0 0.0
    %1487 = vmatprep.subr.mxu0 0.0
    %1488 = vmatpush2.xpose.msra.mxu0 0.0
    %1489 = vmatprep.subr.mxu0 0.0
    %1490 = vmatpush2.xpose.msra.mxu0 0.0
    %1491 = vmatprep.subr.mxu0 0.0
    %1492 = vmatpush2.xpose.msra.mxu0 0.0
    %1493 = vmatprep.subr.mxu0 0.0
    %1494 = vmatpush2.xpose.msra.mxu0 0.0
    %1495 = vmatprep.subr.mxu0 0.0
    %1496 = vmatpush2.xpose.msra.mxu0 0.0
    %1497 = vmatprep.subr.mxu0 0.0
    %1498 = vmatpush2.xpose.msra.mxu0 0.0
    %1499 = vmatprep.subr.mxu0 0.0
    %1500 = vmatpush2.xpose.msra.mxu0 0.0
    %1501 = vmatprep.subr.mxu0 0.0
    %1502 = vmatpush2.xpose.msra.mxu0 0.0
    %1503 = vmatprep.subr.mxu0 0.0
    %1504 = vmatpush2.xpose.msra.mxu0 0.0
    %1505 = vmatprep.subr.mxu0 0.0
    %1506 = vmatpush2.xpose.msra.mxu0 0.0
    %1507 = vmatprep.subr.mxu0 0.0
    %1508 = vmatpush2.xpose.msra.mxu0 0.0
    %1509 = vmatprep.subr.mxu0 0.0
    %1510 = vmatpush2.xpose.msra.mxu0 0.0
    %1511 = vmatprep.subr.mxu0 0.0
    %1512 = vmatpush2.xpose.msra.mxu0 0.0
    %1513 = vmatprep.mubr.f32.mxu0 0.0
    %1514 = vmatmul.mubr.f32.gmra.mxu0 %v1441
    %v1515 = vpop.f32.mrf.mxu0
    %v1516 = vadd.f32 0.0, %v1515
    %v1517 = vpop.f32.mrf.mxu0
    %1518 = vmatprep.mubr.f32.mxu0 0.0
    %1519 = vmatmul.mubr.f32.gmra.mxu0 %v1443
    %v1520 = vpop.f32.mrf.mxu0
    %v1521 = vadd.f32 0.0, %v1520
    %v1522 = vpop.f32.mrf.mxu0
    %1523 = vdwg.mxu0
    %1524 = vrot.lane.b32.xlu0 %v122, 16
    %v1525 = vpop.permute.xlu0 %1524
    %1526 = vrot.lane.b32.xlu0 %v128, 16
    %v1527 = vpop.permute.xlu0 %1526
    %1528 = vrot.lane.b32.xlu0 %v134, 16
    %v1529 = vpop.permute.xlu0 %1528
    %1530 = vrot.lane.b32.xlu0 %v140, 16
    %v1531 = vpop.permute.xlu0 %1530
    %v1532 = vsel %vm166, %v1525, 0
    %v1534 = vsel %vm166, %v1527, 0
    %v1536 = vsel %vm166, %v1529, 0
    %v1538 = vsel %vm166, %v1531, 0
    %1540 = vmatprep.subr.mxu0 0.0
    %1541 = vmatpush1.xpose.msra.mxu0 0.0
    %1542 = vmatprep.subr.mxu0 0.0
    %1543 = vmatpush1.xpose.msra.mxu0 0.0
    %1544 = vmatprep.subr.mxu0 0.0
    %1545 = vmatpush1.xpose.msra.mxu0 0.0
    %1546 = vmatprep.subr.mxu0 0.0
    %1547 = vmatpush1.xpose.msra.mxu0 0.0
    %1548 = vmatprep.subr.mxu0 0.0
    %1549 = vmatpush1.xpose.msra.mxu0 0.0
    %1550 = vmatprep.subr.mxu0 0.0
    %1551 = vmatpush1.xpose.msra.mxu0 0.0
    %1552 = vmatprep.subr.mxu0 0.0
    %1553 = vmatpush1.xpose.msra.mxu0 0.0
    %1554 = vmatprep.subr.mxu0 0.0
    %1555 = vmatpush1.xpose.msra.mxu0 0.0
    %1556 = vmatprep.subr.mxu0 0.0
    %1557 = vmatpush1.xpose.msra.mxu0 0.0
    %1558 = vmatprep.subr.mxu0 0.0
    %1559 = vmatpush1.xpose.msra.mxu0 0.0
    %1560 = vmatprep.subr.mxu0 0.0
    %1561 = vmatpush1.xpose.msra.mxu0 0.0
    %1562 = vmatprep.subr.mxu0 0.0
    %1563 = vmatpush1.xpose.msra.mxu0 0.0
    %1564 = vmatprep.subr.mxu0 0.0
    %1565 = vmatpush1.xpose.msra.mxu0 0.0
    %1566 = vmatprep.subr.mxu0 0.0
    %1567 = vmatpush1.xpose.msra.mxu0 0.0
    %1568 = vmatprep.subr.mxu0 0.0
    %1569 = vmatpush1.xpose.msra.mxu0 %v1538
    %1570 = vmatprep.subr.mxu0 0.0
    %1571 = vmatpush1.xpose.msra.mxu0 %v1536
    %1572 = vmatprep.subr.mxu0 0.0
    %1573 = vmatpush2.xpose.msra.mxu0 0.0
    %1574 = vmatprep.subr.mxu0 0.0
    %1575 = vmatpush2.xpose.msra.mxu0 0.0
    %1576 = vmatprep.subr.mxu0 0.0
    %1577 = vmatpush2.xpose.msra.mxu0 0.0
    %1578 = vmatprep.subr.mxu0 0.0
    %1579 = vmatpush2.xpose.msra.mxu0 0.0
    %1580 = vmatprep.subr.mxu0 0.0
    %1581 = vmatpush2.xpose.msra.mxu0 0.0
    %1582 = vmatprep.subr.mxu0 0.0
    %1583 = vmatpush2.xpose.msra.mxu0 0.0
    %1584 = vmatprep.subr.mxu0 0.0
    %1585 = vmatpush2.xpose.msra.mxu0 0.0
    %1586 = vmatprep.subr.mxu0 0.0
    %1587 = vmatpush2.xpose.msra.mxu0 0.0
    %1588 = vmatprep.subr.mxu0 0.0
    %1589 = vmatpush2.xpose.msra.mxu0 0.0
    %1590 = vmatprep.subr.mxu0 0.0
    %1591 = vmatpush2.xpose.msra.mxu0 0.0
    %1592 = vmatprep.subr.mxu0 0.0
    %1593 = vmatpush2.xpose.msra.mxu0 0.0
    %1594 = vmatprep.subr.mxu0 0.0
    %1595 = vmatpush2.xpose.msra.mxu0 0.0
    %1596 = vmatprep.subr.mxu0 0.0
    %1597 = vmatpush2.xpose.msra.mxu0 0.0
    %1598 = vmatprep.subr.mxu0 0.0
    %1599 = vmatpush2.xpose.msra.mxu0 0.0
    %1600 = vmatprep.subr.mxu0 0.0
    %1601 = vmatpush2.xpose.msra.mxu0 0.0
    %1602 = vmatprep.subr.mxu0 0.0
    %1603 = vmatpush2.xpose.msra.mxu0 0.0
    %1604 = vmatprep.mubr.f32.mxu0 0.0
    %1605 = vmatmul.mubr.f32.gmra.mxu0 %v1532
    %v1606 = vpop.f32.mrf.mxu0
    %v1607 = vadd.f32 0.0, %v1606
    %v1608 = vpop.f32.mrf.mxu0
    %1609 = vmatprep.mubr.f32.mxu0 0.0
    %1610 = vmatmul.mubr.f32.gmra.mxu0 %v1534
    %v1611 = vpop.f32.mrf.mxu0
    %v1612 = vadd.f32 0.0, %v1611
    %v1613 = vpop.f32.mrf.mxu0
    %1614 = vdwg.mxu0
    %1617 = vrot.lane.b32.xlu0 %v337, 16
    %v1618 = vpop.permute.xlu0 %1617
    %1619 = vrot.lane.b32.xlu0 %v342, 16
    %v1620 = vpop.permute.xlu0 %1619
    %1625 = vrot.lane.b32.xlu0 %v428, 32
    %v1626 = vpop.permute.xlu0 %1625
    %1627 = vrot.lane.b32.xlu0 %v433, 32
    %v1628 = vpop.permute.xlu0 %1627
    %1633 = vrot.lane.b32.xlu0 %v519, 48
    %v1634 = vpop.permute.xlu0 %1633
    %1635 = vrot.lane.b32.xlu0 %v524, 48
    %v1636 = vpop.permute.xlu0 %1635
    %1641 = vrot.lane.b32.xlu0 %v610, 64
    %v1642 = vpop.permute.xlu0 %1641
    %1643 = vrot.lane.b32.xlu0 %v615, 64
    %v1644 = vpop.permute.xlu0 %1643
    %1649 = vrot.lane.b32.xlu0 %v701, 80
    %v1650 = vpop.permute.xlu0 %1649
    %1651 = vrot.lane.b32.xlu0 %v706, 80
    %v1652 = vpop.permute.xlu0 %1651
    %1657 = vrot.lane.b32.xlu0 %v792, 96
    %v1658 = vpop.permute.xlu0 %1657
    %1659 = vrot.lane.b32.xlu0 %v797, 96
    %v1660 = vpop.permute.xlu0 %1659
    %1665 = vrot.lane.b32.xlu0 %v883, 112
    %v1666 = vpop.permute.xlu0 %1665
    %1667 = vrot.lane.b32.xlu0 %v888, 112
    %v1668 = vpop.permute.xlu0 %1667
    %1673 = vrot.lane.b32.xlu0 %v1061, 16
    %v1674 = vpop.permute.xlu0 %1673
    %1675 = vrot.lane.b32.xlu0 %v1066, 16
    %v1676 = vpop.permute.xlu0 %1675
    %1681 = vrot.lane.b32.xlu0 %v1152, 32
    %v1682 = vpop.permute.xlu0 %1681
    %1683 = vrot.lane.b32.xlu0 %v1157, 32
    %v1684 = vpop.permute.xlu0 %1683
    %1689 = vrot.lane.b32.xlu0 %v1243, 48
    %v1690 = vpop.permute.xlu0 %1689
    %1691 = vrot.lane.b32.xlu0 %v1248, 48
    %v1692 = vpop.permute.xlu0 %1691
    %1697 = vrot.lane.b32.xlu0 %v1334, 64
    %v1698 = vpop.permute.xlu0 %1697
    %1699 = vrot.lane.b32.xlu0 %v1339, 64
    %v1700 = vpop.permute.xlu0 %1699
    %1705 = vrot.lane.b32.xlu0 %v1425, 80
    %v1706 = vpop.permute.xlu0 %1705
    %1707 = vrot.lane.b32.xlu0 %v1430, 80
    %v1708 = vpop.permute.xlu0 %1707
    %1713 = vrot.lane.b32.xlu0 %v1516, 96
    %v1714 = vpop.permute.xlu0 %1713
    %1715 = vrot.lane.b32.xlu0 %v1521, 96
    %v1716 = vpop.permute.xlu0 %1715
    %1721 = vrot.lane.b32.xlu0 %v1607, 112
    %v1722 = vpop.permute.xlu0 %1721
    %1723 = vrot.lane.b32.xlu0 %v1612, 112
    %v1724 = vpop.permute.xlu0 %1723
    %v1727 = vsel %vm166, %v246, %v1618
    %v1728 = vsel %vm166, %v251, %v1620
    %v1729 = vsel %vm28, %v1727, %v1626
    %v1730 = vsel %vm28, %v1728, %v1628
    %vm1731 = vcmask 392192
    %v1732 = vsel %vm1731, %v1729, %v1634
    %v1733 = vsel %vm1731, %v1730, %v1636
    %vm1734 = vcmask 523264
    %v1735 = vsel %vm1734, %v1732, %v1642
    %v1736 = vsel %vm1734, %v1733, %v1644
    %vm1737 = vcmask 654336
    %v1738 = vsel %vm1737, %v1735, %v1650
    %v1739 = vsel %vm1737, %v1736, %v1652
    %vm1740 = vcmask 785408
    %v1741 = vsel %vm1740, %v1738, %v1658
    %v1742 = vsel %vm1740, %v1739, %v1660
    %vm1743 = vcmask 916480
    %v1744 = vsel %vm1743, %v1741, %v1666
    %v1745 = vsel %vm1743, %v1742, %v1668
    %v1746 = vsel %vm166, %v970, %v1674
    %v1747 = vsel %vm166, %v975, %v1676
    %v1748 = vsel %vm28, %v1746, %v1682
    %v1749 = vsel %vm28, %v1747, %v1684
    %v1750 = vsel %vm1731, %v1748, %v1690
    %v1751 = vsel %vm1731, %v1749, %v1692
    %v1752 = vsel %vm1734, %v1750, %v1698
    %v1753 = vsel %vm1734, %v1751, %v1700
    %v1754 = vsel %vm1737, %v1752, %v1706
    %v1755 = vsel %vm1737, %v1753, %v1708
    %v1756 = vsel %vm1740, %v1754, %v1714
    %v1757 = vsel %vm1740, %v1755, %v1716
    %v1758 = vsel %vm1743, %v1756, %v1722
    %v1759 = vsel %vm1743, %v1757, %v1724
    %v1760 = vmax.f32 %v1744, %v1745
    %v1761 = vrot.slane %v1760, 4
    %v1762 = vmax.f32 %v1760, %v1761
    %v1763 = vrot.slane %v1762, 2
    %v1764 = vmax.f32 %v1762, %v1763
    %v1765 = vrot.slane %v1764, 1
    %v1766 = vmax.f32 %v1764, %v1765
    %v1767 = vmax.f32 %v1758, %v1759
    %v1768 = vrot.slane %v1767, 4
    %v1769 = vmax.f32 %v1767, %v1768
    %v1770 = vrot.slane %v1769, 2
    %v1771 = vmax.f32 %v1769, %v1770
    %v1772 = vrot.slane %v1771, 1
    %v1773 = vmax.f32 %v1771, %v1772
    %v1774 = vsub.f32 %v1744, %v1766
    %v1775 = vsub.f32 %v1758, %v1773
    %v1776 = vsub.f32 %v1745, %v1766
    %v1777 = vsub.f32 %v1759, %v1773
    %v1778 = vmul.f32 %v1774, 1.442695
    %v1779 = vpow.pop %v1778
    %v1780 = vmul.f32 %v1775, 1.442695
    %v1781 = vpow.pop %v1780
    %v1782 = vmul.f32 %v1776, 1.442695
    %v1783 = vpow.pop %v1782
    %v1784 = vmul.f32 %v1777, 1.442695
    %v1785 = vpow.pop %v1784
    %v1786 = vadd.f32 %v1779, %v1783
    %v1787 = vrot.slane %v1786, 4
    %v1788 = vadd.f32 %v1786, %v1787
    %v1789 = vrot.slane %v1788, 2
    %v1790 = vadd.f32 %v1788, %v1789
    %v1791 = vrot.slane %v1790, 1
    %v1792 = vadd.f32 %v1790, %v1791
    %v1793 = vadd.f32 %v1781, %v1785
    %v1794 = vrot.slane %v1793, 4
    %v1795 = vadd.f32 %v1793, %v1794
    %v1796 = vrot.slane %v1795, 2
    %v1797 = vadd.f32 %v1795, %v1796
    %v1798 = vrot.slane %v1797, 1
    %v1799 = vadd.f32 %v1797, %v1798
    %v1800 = vrcp.pop %v1792
    %v1801 = vrcp.pop %v1799
    %v1802 = vmul.f32 %v1779, %v1800
    %v1803 = vmul.f32 %v1781, %v1801
    %v1804 = vmul.f32 %v1783, %v1800
    %v1805 = vmul.f32 %v1785, %v1801
    %v1807 = vsel %vm166, %v144, 0
    %v1810 = vsel %vm166, %v150, 0
    %v1813 = vsel %vm166, %v156, 0
    %v1816 = vsel %vm166, %v162, 0
    %1818 = vmatprep.subr.mxu0 0.0
    %1819 = vmatpush1.msra.mxu0 0.0
    %1820 = vmatprep.subr.mxu0 0.0
    %1821 = vmatpush1.msra.mxu0 0.0
    %1822 = vmatprep.subr.mxu0 0.0
    %1823 = vmatpush1.msra.mxu0 0.0
    %1824 = vmatprep.subr.mxu0 0.0
    %1825 = vmatpush1.msra.mxu0 0.0
    %1826 = vmatprep.subr.mxu0 0.0
    %1827 = vmatpush1.msra.mxu0 0.0
    %1828 = vmatprep.subr.mxu0 0.0
    %1829 = vmatpush1.msra.mxu0 0.0
    %1830 = vmatprep.subr.mxu0 0.0
    %1831 = vmatpush1.msra.mxu0 0.0
    %1832 = vmatprep.subr.mxu0 0.0
    %1833 = vmatpush1.msra.mxu0 0.0
    %1834 = vmatprep.subr.mxu0 0.0
    %1835 = vmatpush1.msra.mxu0 0.0
    %1836 = vmatprep.subr.mxu0 0.0
    %1837 = vmatpush1.msra.mxu0 0.0
    %1838 = vmatprep.subr.mxu0 0.0
    %1839 = vmatpush1.msra.mxu0 0.0
    %1840 = vmatprep.subr.mxu0 0.0
    %1841 = vmatpush1.msra.mxu0 0.0
    %1842 = vmatprep.subr.mxu0 0.0
    %1843 = vmatpush1.msra.mxu0 0.0
    %1844 = vmatprep.subr.mxu0 0.0
    %1845 = vmatpush1.msra.mxu0 0.0
    %1846 = vmatprep.subr.mxu0 0.0
    %1847 = vmatpush1.msra.mxu0 %v1804
    %1848 = vmatprep.subr.mxu0 0.0
    %1849 = vmatpush1.msra.mxu0 %v1802
    %1850 = vmatprep.subr.mxu0 0.0
    %1851 = vmatpush2.msra.mxu0 0.0
    %1852 = vmatprep.subr.mxu0 0.0
    %1853 = vmatpush2.msra.mxu0 0.0
    %1854 = vmatprep.subr.mxu0 0.0
    %1855 = vmatpush2.msra.mxu0 0.0
    %1856 = vmatprep.subr.mxu0 0.0
    %1857 = vmatpush2.msra.mxu0 0.0
    %1858 = vmatprep.subr.mxu0 0.0
    %1859 = vmatpush2.msra.mxu0 0.0
    %1860 = vmatprep.subr.mxu0 0.0
    %1861 = vmatpush2.msra.mxu0 0.0
    %1862 = vmatprep.subr.mxu0 0.0
    %1863 = vmatpush2.msra.mxu0 0.0
    %1864 = vmatprep.subr.mxu0 0.0
    %1865 = vmatpush2.msra.mxu0 0.0
    %1866 = vmatprep.subr.mxu0 0.0
    %1867 = vmatpush2.msra.mxu0 0.0
    %1868 = vmatprep.subr.mxu0 0.0
    %1869 = vmatpush2.msra.mxu0 0.0
    %1870 = vmatprep.subr.mxu0 0.0
    %1871 = vmatpush2.msra.mxu0 0.0
    %1872 = vmatprep.subr.mxu0 0.0
    %1873 = vmatpush2.msra.mxu0 0.0
    %1874 = vmatprep.subr.mxu0 0.0
    %1875 = vmatpush2.msra.mxu0 0.0
    %1876 = vmatprep.subr.mxu0 0.0
    %1877 = vmatpush2.msra.mxu0 0.0
    %1878 = vmatprep.subr.mxu0 0.0
    %1879 = vmatpush2.msra.mxu0 0.0
    %1880 = vmatprep.subr.mxu0 0.0
    %1881 = vmatpush2.msra.mxu0 0.0
    %1882 = vmatprep.mubr.f32.mxu0 0.0
    %1883 = vmatmul.mubr.f32.gmra.mxu0 %v1807
    %v1884 = vpop.f32.mrf.mxu0
    %v1885 = vadd.f32 0.0, %v1884
    %v1886 = vpop.f32.mrf.mxu0
    %1887 = vmatprep.mubr.f32.mxu0 0.0
    %1888 = vmatmul.mubr.f32.gmra.mxu0 %v1810
    %v1889 = vpop.f32.mrf.mxu0
    %v1890 = vadd.f32 0.0, %v1889
    %v1891 = vpop.f32.mrf.mxu0
    %1892 = vmatprep.mubr.f32.mxu0 0.0
    %1893 = vmatmul.mubr.f32.gmra.mxu0 %v1813
    %v1894 = vpop.f32.mrf.mxu0
    %v1895 = vadd.f32 0.0, %v1894
    %v1896 = vpop.f32.mrf.mxu0
    %1897 = vmatprep.mubr.f32.mxu0 0.0
    %1898 = vmatmul.mubr.f32.gmra.mxu0 %v1816
    %v1899 = vpop.f32.mrf.mxu0
    %v1900 = vadd.f32 0.0, %v1899
    %v1901 = vpop.f32.mrf.mxu0
    %1902 = vdwg.mxu0
    %1903 = vrot.lane.b32.xlu0 %v144, 112
    %v1904 = vpop.permute.xlu0 %1903
    %1905 = vrot.lane.b32.xlu0 %v150, 112
    %v1906 = vpop.permute.xlu0 %1905
    %1907 = vrot.lane.b32.xlu0 %v156, 112
    %v1908 = vpop.permute.xlu0 %1907
    %1909 = vrot.lane.b32.xlu0 %v162, 112
    %v1910 = vpop.permute.xlu0 %1909
    %1913 = vrot.lane.b32.xlu0 %v1802, 112
    %v1914 = vpop.permute.xlu0 %1913
    %1915 = vrot.lane.b32.xlu0 %v1804, 112
    %v1916 = vpop.permute.xlu0 %1915
    %v1919 = vsel %vm166, %v1904, 0
    %v1921 = vsel %vm166, %v1906, 0
    %v1923 = vsel %vm166, %v1908, 0
    %v1925 = vsel %vm166, %v1910, 0
    %1927 = vmatprep.subr.mxu0 0.0
    %1928 = vmatpush1.msra.mxu0 0.0
    %1929 = vmatprep.subr.mxu0 0.0
    %1930 = vmatpush1.msra.mxu0 0.0
    %1931 = vmatprep.subr.mxu0 0.0
    %1932 = vmatpush1.msra.mxu0 0.0
    %1933 = vmatprep.subr.mxu0 0.0
    %1934 = vmatpush1.msra.mxu0 0.0
    %1935 = vmatprep.subr.mxu0 0.0
    %1936 = vmatpush1.msra.mxu0 0.0
    %1937 = vmatprep.subr.mxu0 0.0
    %1938 = vmatpush1.msra.mxu0 0.0
    %1939 = vmatprep.subr.mxu0 0.0
    %1940 = vmatpush1.msra.mxu0 0.0
    %1941 = vmatprep.subr.mxu0 0.0
    %1942 = vmatpush1.msra.mxu0 0.0
    %1943 = vmatprep.subr.mxu0 0.0
    %1944 = vmatpush1.msra.mxu0 0.0
    %1945 = vmatprep.subr.mxu0 0.0
    %1946 = vmatpush1.msra.mxu0 0.0
    %1947 = vmatprep.subr.mxu0 0.0
    %1948 = vmatpush1.msra.mxu0 0.0
    %1949 = vmatprep.subr.mxu0 0.0
    %1950 = vmatpush1.msra.mxu0 0.0
    %1951 = vmatprep.subr.mxu0 0.0
    %1952 = vmatpush1.msra.mxu0 0.0
    %1953 = vmatprep.subr.mxu0 0.0
    %1954 = vmatpush1.msra.mxu0 0.0
    %1955 = vmatprep.subr.mxu0 0.0
    %1956 = vmatpush1.msra.mxu0 %v1916
    %1957 = vmatprep.subr.mxu0 0.0
    %1958 = vmatpush1.msra.mxu0 %v1914
    %1959 = vmatprep.subr.mxu0 0.0
    %1960 = vmatpush2.msra.mxu0 0.0
    %1961 = vmatprep.subr.mxu0 0.0
    %1962 = vmatpush2.msra.mxu0 0.0
    %1963 = vmatprep.subr.mxu0 0.0
    %1964 = vmatpush2.msra.mxu0 0.0
    %1965 = vmatprep.subr.mxu0 0.0
    %1966 = vmatpush2.msra.mxu0 0.0
    %1967 = vmatprep.subr.mxu0 0.0
    %1968 = vmatpush2.msra.mxu0 0.0
    %1969 = vmatprep.subr.mxu0 0.0
    %1970 = vmatpush2.msra.mxu0 0.0
    %1971 = vmatprep.subr.mxu0 0.0
    %1972 = vmatpush2.msra.mxu0 0.0
    %1973 = vmatprep.subr.mxu0 0.0
    %1974 = vmatpush2.msra.mxu0 0.0
    %1975 = vmatprep.subr.mxu0 0.0
    %1976 = vmatpush2.msra.mxu0 0.0
    %1977 = vmatprep.subr.mxu0 0.0
    %1978 = vmatpush2.msra.mxu0 0.0
    %1979 = vmatprep.subr.mxu0 0.0
    %1980 = vmatpush2.msra.mxu0 0.0
    %1981 = vmatprep.subr.mxu0 0.0
    %1982 = vmatpush2.msra.mxu0 0.0
    %1983 = vmatprep.subr.mxu0 0.0
    %1984 = vmatpush2.msra.mxu0 0.0
    %1985 = vmatprep.subr.mxu0 0.0
    %1986 = vmatpush2.msra.mxu0 0.0
    %1987 = vmatprep.subr.mxu0 0.0
    %1988 = vmatpush2.msra.mxu0 0.0
    %1989 = vmatprep.subr.mxu0 0.0
    %1990 = vmatpush2.msra.mxu0 0.0
    %1991 = vmatprep.mubr.f32.mxu0 0.0
    %1992 = vmatmul.mubr.f32.gmra.mxu0 %v1919
    %v1993 = vpop.f32.mrf.mxu0
    %v1994 = vadd.f32 0.0, %v1993
    %v1995 = vpop.f32.mrf.mxu0
    %1996 = vmatprep.mubr.f32.mxu0 0.0
    %1997 = vmatmul.mubr.f32.gmra.mxu0 %v1921
    %v1998 = vpop.f32.mrf.mxu0
    %v1999 = vadd.f32 0.0, %v1998
    %v2000 = vpop.f32.mrf.mxu0
    %2001 = vmatprep.mubr.f32.mxu0 0.0
    %2002 = vmatmul.mubr.f32.gmra.mxu0 %v1923
    %v2003 = vpop.f32.mrf.mxu0
    %v2004 = vadd.f32 0.0, %v2003
    %v2005 = vpop.f32.mrf.mxu0
    %2006 = vmatprep.mubr.f32.mxu0 0.0
    %2007 = vmatmul.mubr.f32.gmra.mxu0 %v1925
    %v2008 = vpop.f32.mrf.mxu0
    %v2009 = vadd.f32 0.0, %v2008
    %v2010 = vpop.f32.mrf.mxu0
    %2011 = vdwg.mxu0
    %2012 = vrot.lane.b32.xlu0 %v144, 96
    %v2013 = vpop.permute.xlu0 %2012
    %2014 = vrot.lane.b32.xlu0 %v150, 96
    %v2015 = vpop.permute.xlu0 %2014
    %2016 = vrot.lane.b32.xlu0 %v156, 96
    %v2017 = vpop.permute.xlu0 %2016
    %2018 = vrot.lane.b32.xlu0 %v162, 96
    %v2019 = vpop.permute.xlu0 %2018
    %2020 = vrot.lane.b32.xlu0 %v1802, 96
    %v2021 = vpop.permute.xlu0 %2020
    %2022 = vrot.lane.b32.xlu0 %v1804, 96
    %v2023 = vpop.permute.xlu0 %2022
    %v2026 = vsel %vm166, %v2013, 0
    %v2028 = vsel %vm166, %v2015, 0
    %v2030 = vsel %vm166, %v2017, 0
    %v2032 = vsel %vm166, %v2019, 0
    %2034 = vmatprep.subr.mxu0 0.0
    %2035 = vmatpush1.msra.mxu0 0.0
    %2036 = vmatprep.subr.mxu0 0.0
    %2037 = vmatpush1.msra.mxu0 0.0
    %2038 = vmatprep.subr.mxu0 0.0
    %2039 = vmatpush1.msra.mxu0 0.0
    %2040 = vmatprep.subr.mxu0 0.0
    %2041 = vmatpush1.msra.mxu0 0.0
    %2042 = vmatprep.subr.mxu0 0.0
    %2043 = vmatpush1.msra.mxu0 0.0
    %2044 = vmatprep.subr.mxu0 0.0
    %2045 = vmatpush1.msra.mxu0 0.0
    %2046 = vmatprep.subr.mxu0 0.0
    %2047 = vmatpush1.msra.mxu0 0.0
    %2048 = vmatprep.subr.mxu0 0.0
    %2049 = vmatpush1.msra.mxu0 0.0
    %2050 = vmatprep.subr.mxu0 0.0
    %2051 = vmatpush1.msra.mxu0 0.0
    %2052 = vmatprep.subr.mxu0 0.0
    %2053 = vmatpush1.msra.mxu0 0.0
    %2054 = vmatprep.subr.mxu0 0.0
    %2055 = vmatpush1.msra.mxu0 0.0
    %2056 = vmatprep.subr.mxu0 0.0
    %2057 = vmatpush1.msra.mxu0 0.0
    %2058 = vmatprep.subr.mxu0 0.0
    %2059 = vmatpush1.msra.mxu0 0.0
    %2060 = vmatprep.subr.mxu0 0.0
    %2061 = vmatpush1.msra.mxu0 0.0
    %2062 = vmatprep.subr.mxu0 0.0
    %2063 = vmatpush1.msra.mxu0 %v2023
    %2064 = vmatprep.subr.mxu0 0.0
    %2065 = vmatpush1.msra.mxu0 %v2021
    %2066 = vmatprep.subr.mxu0 0.0
    %2067 = vmatpush2.msra.mxu0 0.0
    %2068 = vmatprep.subr.mxu0 0.0
    %2069 = vmatpush2.msra.mxu0 0.0
    %2070 = vmatprep.subr.mxu0 0.0
    %2071 = vmatpush2.msra.mxu0 0.0
    %2072 = vmatprep.subr.mxu0 0.0
    %2073 = vmatpush2.msra.mxu0 0.0
    %2074 = vmatprep.subr.mxu0 0.0
    %2075 = vmatpush2.msra.mxu0 0.0
    %2076 = vmatprep.subr.mxu0 0.0
    %2077 = vmatpush2.msra.mxu0 0.0
    %2078 = vmatprep.subr.mxu0 0.0
    %2079 = vmatpush2.msra.mxu0 0.0
    %2080 = vmatprep.subr.mxu0 0.0
    %2081 = vmatpush2.msra.mxu0 0.0
    %2082 = vmatprep.subr.mxu0 0.0
    %2083 = vmatpush2.msra.mxu0 0.0
    %2084 = vmatprep.subr.mxu0 0.0
    %2085 = vmatpush2.msra.mxu0 0.0
    %2086 = vmatprep.subr.mxu0 0.0
    %2087 = vmatpush2.msra.mxu0 0.0
    %2088 = vmatprep.subr.mxu0 0.0
    %2089 = vmatpush2.msra.mxu0 0.0
    %2090 = vmatprep.subr.mxu0 0.0
    %2091 = vmatpush2.msra.mxu0 0.0
    %2092 = vmatprep.subr.mxu0 0.0
    %2093 = vmatpush2.msra.mxu0 0.0
    %2094 = vmatprep.subr.mxu0 0.0
    %2095 = vmatpush2.msra.mxu0 0.0
    %2096 = vmatprep.subr.mxu0 0.0
    %2097 = vmatpush2.msra.mxu0 0.0
    %2098 = vmatprep.mubr.f32.mxu0 0.0
    %2099 = vmatmul.mubr.f32.gmra.mxu0 %v2026
    %v2100 = vpop.f32.mrf.mxu0
    %v2101 = vadd.f32 0.0, %v2100
    %v2102 = vpop.f32.mrf.mxu0
    %2103 = vmatprep.mubr.f32.mxu0 0.0
    %2104 = vmatmul.mubr.f32.gmra.mxu0 %v2028
    %v2105 = vpop.f32.mrf.mxu0
    %v2106 = vadd.f32 0.0, %v2105
    %v2107 = vpop.f32.mrf.mxu0
    %2108 = vmatprep.mubr.f32.mxu0 0.0
    %2109 = vmatmul.mubr.f32.gmra.mxu0 %v2030
    %v2110 = vpop.f32.mrf.mxu0
    %v2111 = vadd.f32 0.0, %v2110
    %v2112 = vpop.f32.mrf.mxu0
    %2113 = vmatprep.mubr.f32.mxu0 0.0
    %2114 = vmatmul.mubr.f32.gmra.mxu0 %v2032
    %v2115 = vpop.f32.mrf.mxu0
    %v2116 = vadd.f32 0.0, %v2115
    %v2117 = vpop.f32.mrf.mxu0
    %2118 = vdwg.mxu0
    %2119 = vrot.lane.b32.xlu0 %v144, 80
    %v2120 = vpop.permute.xlu0 %2119
    %2121 = vrot.lane.b32.xlu0 %v150, 80
    %v2122 = vpop.permute.xlu0 %2121
    %2123 = vrot.lane.b32.xlu0 %v156, 80
    %v2124 = vpop.permute.xlu0 %2123
    %2125 = vrot.lane.b32.xlu0 %v162, 80
    %v2126 = vpop.permute.xlu0 %2125
    %2127 = vrot.lane.b32.xlu0 %v1802, 80
    %v2128 = vpop.permute.xlu0 %2127
    %2129 = vrot.lane.b32.xlu0 %v1804, 80
    %v2130 = vpop.permute.xlu0 %2129
    %v2133 = vsel %vm166, %v2120, 0
    %v2135 = vsel %vm166, %v2122, 0
    %v2137 = vsel %vm166, %v2124, 0
    %v2139 = vsel %vm166, %v2126, 0
    %2141 = vmatprep.subr.mxu0 0.0
    %2142 = vmatpush1.msra.mxu0 0.0
    %2143 = vmatprep.subr.mxu0 0.0
    %2144 = vmatpush1.msra.mxu0 0.0
    %2145 = vmatprep.subr.mxu0 0.0
    %2146 = vmatpush1.msra.mxu0 0.0
    %2147 = vmatprep.subr.mxu0 0.0
    %2148 = vmatpush1.msra.mxu0 0.0
    %2149 = vmatprep.subr.mxu0 0.0
    %2150 = vmatpush1.msra.mxu0 0.0
    %2151 = vmatprep.subr.mxu0 0.0
    %2152 = vmatpush1.msra.mxu0 0.0
    %2153 = vmatprep.subr.mxu0 0.0
    %2154 = vmatpush1.msra.mxu0 0.0
    %2155 = vmatprep.subr.mxu0 0.0
    %2156 = vmatpush1.msra.mxu0 0.0
    %2157 = vmatprep.subr.mxu0 0.0
    %2158 = vmatpush1.msra.mxu0 0.0
    %2159 = vmatprep.subr.mxu0 0.0
    %2160 = vmatpush1.msra.mxu0 0.0
    %2161 = vmatprep.subr.mxu0 0.0
    %2162 = vmatpush1.msra.mxu0 0.0
    %2163 = vmatprep.subr.mxu0 0.0
    %2164 = vmatpush1.msra.mxu0 0.0
    %2165 = vmatprep.subr.mxu0 0.0
    %2166 = vmatpush1.msra.mxu0 0.0
    %2167 = vmatprep.subr.mxu0 0.0
    %2168 = vmatpush1.msra.mxu0 0.0
    %2169 = vmatprep.subr.mxu0 0.0
    %2170 = vmatpush1.msra.mxu0 %v2130
    %2171 = vmatprep.subr.mxu0 0.0
    %2172 = vmatpush1.msra.mxu0 %v2128
    %2173 = vmatprep.subr.mxu0 0.0
    %2174 = vmatpush2.msra.mxu0 0.0
    %2175 = vmatprep.subr.mxu0 0.0
    %2176 = vmatpush2.msra.mxu0 0.0
    %2177 = vmatprep.subr.mxu0 0.0
    %2178 = vmatpush2.msra.mxu0 0.0
    %2179 = vmatprep.subr.mxu0 0.0
    %2180 = vmatpush2.msra.mxu0 0.0
    %2181 = vmatprep.subr.mxu0 0.0
    %2182 = vmatpush2.msra.mxu0 0.0
    %2183 = vmatprep.subr.mxu0 0.0
    %2184 = vmatpush2.msra.mxu0 0.0
    %2185 = vmatprep.subr.mxu0 0.0
    %2186 = vmatpush2.msra.mxu0 0.0
    %2187 = vmatprep.subr.mxu0 0.0
    %2188 = vmatpush2.msra.mxu0 0.0
    %2189 = vmatprep.subr.mxu0 0.0
    %2190 = vmatpush2.msra.mxu0 0.0
    %2191 = vmatprep.subr.mxu0 0.0
    %2192 = vmatpush2.msra.mxu0 0.0
    %2193 = vmatprep.subr.mxu0 0.0
    %2194 = vmatpush2.msra.mxu0 0.0
    %2195 = vmatprep.subr.mxu0 0.0
    %2196 = vmatpush2.msra.mxu0 0.0
    %2197 = vmatprep.subr.mxu0 0.0
    %2198 = vmatpush2.msra.mxu0 0.0
    %2199 = vmatprep.subr.mxu0 0.0
    %2200 = vmatpush2.msra.mxu0 0.0
    %2201 = vmatprep.subr.mxu0 0.0
    %2202 = vmatpush2.msra.mxu0 0.0
    %2203 = vmatprep.subr.mxu0 0.0
    %2204 = vmatpush2.msra.mxu0 0.0
    %2205 = vmatprep.mubr.f32.mxu0 0.0
    %2206 = vmatmul.mubr.f32.gmra.mxu0 %v2133
    %v2207 = vpop.f32.mrf.mxu0
    %v2208 = vadd.f32 0.0, %v2207
    %v2209 = vpop.f32.mrf.mxu0
    %2210 = vmatprep.mubr.f32.mxu0 0.0
    %2211 = vmatmul.mubr.f32.gmra.mxu0 %v2135
    %v2212 = vpop.f32.mrf.mxu0
    %v2213 = vadd.f32 0.0, %v2212
    %v2214 = vpop.f32.mrf.mxu0
    %2215 = vmatprep.mubr.f32.mxu0 0.0
    %2216 = vmatmul.mubr.f32.gmra.mxu0 %v2137
    %v2217 = vpop.f32.mrf.mxu0
    %v2218 = vadd.f32 0.0, %v2217
    %v2219 = vpop.f32.mrf.mxu0
    %2220 = vmatprep.mubr.f32.mxu0 0.0
    %2221 = vmatmul.mubr.f32.gmra.mxu0 %v2139
    %v2222 = vpop.f32.mrf.mxu0
    %v2223 = vadd.f32 0.0, %v2222
    %v2224 = vpop.f32.mrf.mxu0
    %2225 = vdwg.mxu0
    %2226 = vrot.lane.b32.xlu0 %v144, 64
    %v2227 = vpop.permute.xlu0 %2226
    %2228 = vrot.lane.b32.xlu0 %v150, 64
    %v2229 = vpop.permute.xlu0 %2228
    %2230 = vrot.lane.b32.xlu0 %v156, 64
    %v2231 = vpop.permute.xlu0 %2230
    %2232 = vrot.lane.b32.xlu0 %v162, 64
    %v2233 = vpop.permute.xlu0 %2232
    %2234 = vrot.lane.b32.xlu0 %v1802, 64
    %v2235 = vpop.permute.xlu0 %2234
    %2236 = vrot.lane.b32.xlu0 %v1804, 64
    %v2237 = vpop.permute.xlu0 %2236
    %v2240 = vsel %vm166, %v2227, 0
    %v2242 = vsel %vm166, %v2229, 0
    %v2244 = vsel %vm166, %v2231, 0
    %v2246 = vsel %vm166, %v2233, 0
    %2248 = vmatprep.subr.mxu0 0.0
    %2249 = vmatpush1.msra.mxu0 0.0
    %2250 = vmatprep.subr.mxu0 0.0
    %2251 = vmatpush1.msra.mxu0 0.0
    %2252 = vmatprep.subr.mxu0 0.0
    %2253 = vmatpush1.msra.mxu0 0.0
    %2254 = vmatprep.subr.mxu0 0.0
    %2255 = vmatpush1.msra.mxu0 0.0
    %2256 = vmatprep.subr.mxu0 0.0
    %2257 = vmatpush1.msra.mxu0 0.0
    %2258 = vmatprep.subr.mxu0 0.0
    %2259 = vmatpush1.msra.mxu0 0.0
    %2260 = vmatprep.subr.mxu0 0.0
    %2261 = vmatpush1.msra.mxu0 0.0
    %2262 = vmatprep.subr.mxu0 0.0
    %2263 = vmatpush1.msra.mxu0 0.0
    %2264 = vmatprep.subr.mxu0 0.0
    %2265 = vmatpush1.msra.mxu0 0.0
    %2266 = vmatprep.subr.mxu0 0.0
    %2267 = vmatpush1.msra.mxu0 0.0
    %2268 = vmatprep.subr.mxu0 0.0
    %2269 = vmatpush1.msra.mxu0 0.0
    %2270 = vmatprep.subr.mxu0 0.0
    %2271 = vmatpush1.msra.mxu0 0.0
    %2272 = vmatprep.subr.mxu0 0.0
    %2273 = vmatpush1.msra.mxu0 0.0
    %2274 = vmatprep.subr.mxu0 0.0
    %2275 = vmatpush1.msra.mxu0 0.0
    %2276 = vmatprep.subr.mxu0 0.0
    %2277 = vmatpush1.msra.mxu0 %v2237
    %2278 = vmatprep.subr.mxu0 0.0
    %2279 = vmatpush1.msra.mxu0 %v2235
    %2280 = vmatprep.subr.mxu0 0.0
    %2281 = vmatpush2.msra.mxu0 0.0
    %2282 = vmatprep.subr.mxu0 0.0
    %2283 = vmatpush2.msra.mxu0 0.0
    %2284 = vmatprep.subr.mxu0 0.0
    %2285 = vmatpush2.msra.mxu0 0.0
    %2286 = vmatprep.subr.mxu0 0.0
    %2287 = vmatpush2.msra.mxu0 0.0
    %2288 = vmatprep.subr.mxu0 0.0
    %2289 = vmatpush2.msra.mxu0 0.0
    %2290 = vmatprep.subr.mxu0 0.0
    %2291 = vmatpush2.msra.mxu0 0.0
    %2292 = vmatprep.subr.mxu0 0.0
    %2293 = vmatpush2.msra.mxu0 0.0
    %2294 = vmatprep.subr.mxu0 0.0
    %2295 = vmatpush2.msra.mxu0 0.0
    %2296 = vmatprep.subr.mxu0 0.0
    %2297 = vmatpush2.msra.mxu0 0.0
    %2298 = vmatprep.subr.mxu0 0.0
    %2299 = vmatpush2.msra.mxu0 0.0
    %2300 = vmatprep.subr.mxu0 0.0
    %2301 = vmatpush2.msra.mxu0 0.0
    %2302 = vmatprep.subr.mxu0 0.0
    %2303 = vmatpush2.msra.mxu0 0.0
    %2304 = vmatprep.subr.mxu0 0.0
    %2305 = vmatpush2.msra.mxu0 0.0
    %2306 = vmatprep.subr.mxu0 0.0
    %2307 = vmatpush2.msra.mxu0 0.0
    %2308 = vmatprep.subr.mxu0 0.0
    %2309 = vmatpush2.msra.mxu0 0.0
    %2310 = vmatprep.subr.mxu0 0.0
    %2311 = vmatpush2.msra.mxu0 0.0
    %2312 = vmatprep.mubr.f32.mxu0 0.0
    %2313 = vmatmul.mubr.f32.gmra.mxu0 %v2240
    %v2314 = vpop.f32.mrf.mxu0
    %v2315 = vadd.f32 0.0, %v2314
    %v2316 = vpop.f32.mrf.mxu0
    %2317 = vmatprep.mubr.f32.mxu0 0.0
    %2318 = vmatmul.mubr.f32.gmra.mxu0 %v2242
    %v2319 = vpop.f32.mrf.mxu0
    %v2320 = vadd.f32 0.0, %v2319
    %v2321 = vpop.f32.mrf.mxu0
    %2322 = vmatprep.mubr.f32.mxu0 0.0
    %2323 = vmatmul.mubr.f32.gmra.mxu0 %v2244
    %v2324 = vpop.f32.mrf.mxu0
    %v2325 = vadd.f32 0.0, %v2324
    %v2326 = vpop.f32.mrf.mxu0
    %2327 = vmatprep.mubr.f32.mxu0 0.0
    %2328 = vmatmul.mubr.f32.gmra.mxu0 %v2246
    %v2329 = vpop.f32.mrf.mxu0
    %v2330 = vadd.f32 0.0, %v2329
    %v2331 = vpop.f32.mrf.mxu0
    %2332 = vdwg.mxu0
    %2333 = vrot.lane.b32.xlu0 %v144, 48
    %v2334 = vpop.permute.xlu0 %2333
    %2335 = vrot.lane.b32.xlu0 %v150, 48
    %v2336 = vpop.permute.xlu0 %2335
    %2337 = vrot.lane.b32.xlu0 %v156, 48
    %v2338 = vpop.permute.xlu0 %2337
    %2339 = vrot.lane.b32.xlu0 %v162, 48
    %v2340 = vpop.permute.xlu0 %2339
    %2341 = vrot.lane.b32.xlu0 %v1802, 48
    %v2342 = vpop.permute.xlu0 %2341
    %2343 = vrot.lane.b32.xlu0 %v1804, 48
    %v2344 = vpop.permute.xlu0 %2343
    %v2347 = vsel %vm166, %v2334, 0
    %v2349 = vsel %vm166, %v2336, 0
    %v2351 = vsel %vm166, %v2338, 0
    %v2353 = vsel %vm166, %v2340, 0
    %2355 = vmatprep.subr.mxu0 0.0
    %2356 = vmatpush1.msra.mxu0 0.0
    %2357 = vmatprep.subr.mxu0 0.0
    %2358 = vmatpush1.msra.mxu0 0.0
    %2359 = vmatprep.subr.mxu0 0.0
    %2360 = vmatpush1.msra.mxu0 0.0
    %2361 = vmatprep.subr.mxu0 0.0
    %2362 = vmatpush1.msra.mxu0 0.0
    %2363 = vmatprep.subr.mxu0 0.0
    %2364 = vmatpush1.msra.mxu0 0.0
    %2365 = vmatprep.subr.mxu0 0.0
    %2366 = vmatpush1.msra.mxu0 0.0
    %2367 = vmatprep.subr.mxu0 0.0
    %2368 = vmatpush1.msra.mxu0 0.0
    %2369 = vmatprep.subr.mxu0 0.0
    %2370 = vmatpush1.msra.mxu0 0.0
    %2371 = vmatprep.subr.mxu0 0.0
    %2372 = vmatpush1.msra.mxu0 0.0
    %2373 = vmatprep.subr.mxu0 0.0
    %2374 = vmatpush1.msra.mxu0 0.0
    %2375 = vmatprep.subr.mxu0 0.0
    %2376 = vmatpush1.msra.mxu0 0.0
    %2377 = vmatprep.subr.mxu0 0.0
    %2378 = vmatpush1.msra.mxu0 0.0
    %2379 = vmatprep.subr.mxu0 0.0
    %2380 = vmatpush1.msra.mxu0 0.0
    %2381 = vmatprep.subr.mxu0 0.0
    %2382 = vmatpush1.msra.mxu0 0.0
    %2383 = vmatprep.subr.mxu0 0.0
    %2384 = vmatpush1.msra.mxu0 %v2344
    %2385 = vmatprep.subr.mxu0 0.0
    %2386 = vmatpush1.msra.mxu0 %v2342
    %2387 = vmatprep.subr.mxu0 0.0
    %2388 = vmatpush2.msra.mxu0 0.0
    %2389 = vmatprep.subr.mxu0 0.0
    %2390 = vmatpush2.msra.mxu0 0.0
    %2391 = vmatprep.subr.mxu0 0.0
    %2392 = vmatpush2.msra.mxu0 0.0
    %2393 = vmatprep.subr.mxu0 0.0
    %2394 = vmatpush2.msra.mxu0 0.0
    %2395 = vmatprep.subr.mxu0 0.0
    %2396 = vmatpush2.msra.mxu0 0.0
    %2397 = vmatprep.subr.mxu0 0.0
    %2398 = vmatpush2.msra.mxu0 0.0
    %2399 = vmatprep.subr.mxu0 0.0
    %2400 = vmatpush2.msra.mxu0 0.0
    %2401 = vmatprep.subr.mxu0 0.0
    %2402 = vmatpush2.msra.mxu0 0.0
    %2403 = vmatprep.subr.mxu0 0.0
    %2404 = vmatpush2.msra.mxu0 0.0
    %2405 = vmatprep.subr.mxu0 0.0
    %2406 = vmatpush2.msra.mxu0 0.0
    %2407 = vmatprep.subr.mxu0 0.0
    %2408 = vmatpush2.msra.mxu0 0.0
    %2409 = vmatprep.subr.mxu0 0.0
    %2410 = vmatpush2.msra.mxu0 0.0
    %2411 = vmatprep.subr.mxu0 0.0
    %2412 = vmatpush2.msra.mxu0 0.0
    %2413 = vmatprep.subr.mxu0 0.0
    %2414 = vmatpush2.msra.mxu0 0.0
    %2415 = vmatprep.subr.mxu0 0.0
    %2416 = vmatpush2.msra.mxu0 0.0
    %2417 = vmatprep.subr.mxu0 0.0
    %2418 = vmatpush2.msra.mxu0 0.0
    %2419 = vmatprep.mubr.f32.mxu0 0.0
    %2420 = vmatmul.mubr.f32.gmra.mxu0 %v2347
    %v2421 = vpop.f32.mrf.mxu0
    %v2422 = vadd.f32 0.0, %v2421
    %v2423 = vpop.f32.mrf.mxu0
    %2424 = vmatprep.mubr.f32.mxu0 0.0
    %2425 = vmatmul.mubr.f32.gmra.mxu0 %v2349
    %v2426 = vpop.f32.mrf.mxu0
    %v2427 = vadd.f32 0.0, %v2426
    %v2428 = vpop.f32.mrf.mxu0
    %2429 = vmatprep.mubr.f32.mxu0 0.0
    %2430 = vmatmul.mubr.f32.gmra.mxu0 %v2351
    %v2431 = vpop.f32.mrf.mxu0
    %v2432 = vadd.f32 0.0, %v2431
    %v2433 = vpop.f32.mrf.mxu0
    %2434 = vmatprep.mubr.f32.mxu0 0.0
    %2435 = vmatmul.mubr.f32.gmra.mxu0 %v2353
    %v2436 = vpop.f32.mrf.mxu0
    %v2437 = vadd.f32 0.0, %v2436
    %v2438 = vpop.f32.mrf.mxu0
    %2439 = vdwg.mxu0
    %2440 = vrot.lane.b32.xlu0 %v144, 32
    %v2441 = vpop.permute.xlu0 %2440
    %2442 = vrot.lane.b32.xlu0 %v150, 32
    %v2443 = vpop.permute.xlu0 %2442
    %2444 = vrot.lane.b32.xlu0 %v156, 32
    %v2445 = vpop.permute.xlu0 %2444
    %2446 = vrot.lane.b32.xlu0 %v162, 32
    %v2447 = vpop.permute.xlu0 %2446
    %2448 = vrot.lane.b32.xlu0 %v1802, 32
    %v2449 = vpop.permute.xlu0 %2448
    %2450 = vrot.lane.b32.xlu0 %v1804, 32
    %v2451 = vpop.permute.xlu0 %2450
    %v2454 = vsel %vm166, %v2441, 0
    %v2456 = vsel %vm166, %v2443, 0
    %v2458 = vsel %vm166, %v2445, 0
    %v2460 = vsel %vm166, %v2447, 0
    %2462 = vmatprep.subr.mxu0 0.0
    %2463 = vmatpush1.msra.mxu0 0.0
    %2464 = vmatprep.subr.mxu0 0.0
    %2465 = vmatpush1.msra.mxu0 0.0
    %2466 = vmatprep.subr.mxu0 0.0
    %2467 = vmatpush1.msra.mxu0 0.0
    %2468 = vmatprep.subr.mxu0 0.0
    %2469 = vmatpush1.msra.mxu0 0.0
    %2470 = vmatprep.subr.mxu0 0.0
    %2471 = vmatpush1.msra.mxu0 0.0
    %2472 = vmatprep.subr.mxu0 0.0
    %2473 = vmatpush1.msra.mxu0 0.0
    %2474 = vmatprep.subr.mxu0 0.0
    %2475 = vmatpush1.msra.mxu0 0.0
    %2476 = vmatprep.subr.mxu0 0.0
    %2477 = vmatpush1.msra.mxu0 0.0
    %2478 = vmatprep.subr.mxu0 0.0
    %2479 = vmatpush1.msra.mxu0 0.0
    %2480 = vmatprep.subr.mxu0 0.0
    %2481 = vmatpush1.msra.mxu0 0.0
    %2482 = vmatprep.subr.mxu0 0.0
    %2483 = vmatpush1.msra.mxu0 0.0
    %2484 = vmatprep.subr.mxu0 0.0
    %2485 = vmatpush1.msra.mxu0 0.0
    %2486 = vmatprep.subr.mxu0 0.0
    %2487 = vmatpush1.msra.mxu0 0.0
    %2488 = vmatprep.subr.mxu0 0.0
    %2489 = vmatpush1.msra.mxu0 0.0
    %2490 = vmatprep.subr.mxu0 0.0
    %2491 = vmatpush1.msra.mxu0 %v2451
    %2492 = vmatprep.subr.mxu0 0.0
    %2493 = vmatpush1.msra.mxu0 %v2449
    %2494 = vmatprep.subr.mxu0 0.0
    %2495 = vmatpush2.msra.mxu0 0.0
    %2496 = vmatprep.subr.mxu0 0.0
    %2497 = vmatpush2.msra.mxu0 0.0
    %2498 = vmatprep.subr.mxu0 0.0
    %2499 = vmatpush2.msra.mxu0 0.0
    %2500 = vmatprep.subr.mxu0 0.0
    %2501 = vmatpush2.msra.mxu0 0.0
    %2502 = vmatprep.subr.mxu0 0.0
    %2503 = vmatpush2.msra.mxu0 0.0
    %2504 = vmatprep.subr.mxu0 0.0
    %2505 = vmatpush2.msra.mxu0 0.0
    %2506 = vmatprep.subr.mxu0 0.0
    %2507 = vmatpush2.msra.mxu0 0.0
    %2508 = vmatprep.subr.mxu0 0.0
    %2509 = vmatpush2.msra.mxu0 0.0
    %2510 = vmatprep.subr.mxu0 0.0
    %2511 = vmatpush2.msra.mxu0 0.0
    %2512 = vmatprep.subr.mxu0 0.0
    %2513 = vmatpush2.msra.mxu0 0.0
    %2514 = vmatprep.subr.mxu0 0.0
    %2515 = vmatpush2.msra.mxu0 0.0
    %2516 = vmatprep.subr.mxu0 0.0
    %2517 = vmatpush2.msra.mxu0 0.0
    %2518 = vmatprep.subr.mxu0 0.0
    %2519 = vmatpush2.msra.mxu0 0.0
    %2520 = vmatprep.subr.mxu0 0.0
    %2521 = vmatpush2.msra.mxu0 0.0
    %2522 = vmatprep.subr.mxu0 0.0
    %2523 = vmatpush2.msra.mxu0 0.0
    %2524 = vmatprep.subr.mxu0 0.0
    %2525 = vmatpush2.msra.mxu0 0.0
    %2526 = vmatprep.mubr.f32.mxu0 0.0
    %2527 = vmatmul.mubr.f32.gmra.mxu0 %v2454
    %v2528 = vpop.f32.mrf.mxu0
    %v2529 = vadd.f32 0.0, %v2528
    %v2530 = vpop.f32.mrf.mxu0
    %2531 = vmatprep.mubr.f32.mxu0 0.0
    %2532 = vmatmul.mubr.f32.gmra.mxu0 %v2456
    %v2533 = vpop.f32.mrf.mxu0
    %v2534 = vadd.f32 0.0, %v2533
    %v2535 = vpop.f32.mrf.mxu0
    %2536 = vmatprep.mubr.f32.mxu0 0.0
    %2537 = vmatmul.mubr.f32.gmra.mxu0 %v2458
    %v2538 = vpop.f32.mrf.mxu0
    %v2539 = vadd.f32 0.0, %v2538
    %v2540 = vpop.f32.mrf.mxu0
    %2541 = vmatprep.mubr.f32.mxu0 0.0
    %2542 = vmatmul.mubr.f32.gmra.mxu0 %v2460
    %v2543 = vpop.f32.mrf.mxu0
    %v2544 = vadd.f32 0.0, %v2543
    %v2545 = vpop.f32.mrf.mxu0
    %2546 = vdwg.mxu0
    %2547 = vrot.lane.b32.xlu0 %v144, 16
    %v2548 = vpop.permute.xlu0 %2547
    %2549 = vrot.lane.b32.xlu0 %v150, 16
    %v2550 = vpop.permute.xlu0 %2549
    %2551 = vrot.lane.b32.xlu0 %v156, 16
    %v2552 = vpop.permute.xlu0 %2551
    %2553 = vrot.lane.b32.xlu0 %v162, 16
    %v2554 = vpop.permute.xlu0 %2553
    %2555 = vrot.lane.b32.xlu0 %v1802, 16
    %v2556 = vpop.permute.xlu0 %2555
    %2557 = vrot.lane.b32.xlu0 %v1804, 16
    %v2558 = vpop.permute.xlu0 %2557
    %v2561 = vsel %vm166, %v2548, 0
    %v2563 = vsel %vm166, %v2550, 0
    %v2565 = vsel %vm166, %v2552, 0
    %v2567 = vsel %vm166, %v2554, 0
    %2569 = vmatprep.subr.mxu0 0.0
    %2570 = vmatpush1.msra.mxu0 0.0
    %2571 = vmatprep.subr.mxu0 0.0
    %2572 = vmatpush1.msra.mxu0 0.0
    %2573 = vmatprep.subr.mxu0 0.0
    %2574 = vmatpush1.msra.mxu0 0.0
    %2575 = vmatprep.subr.mxu0 0.0
    %2576 = vmatpush1.msra.mxu0 0.0
    %2577 = vmatprep.subr.mxu0 0.0
    %2578 = vmatpush1.msra.mxu0 0.0
    %2579 = vmatprep.subr.mxu0 0.0
    %2580 = vmatpush1.msra.mxu0 0.0
    %2581 = vmatprep.subr.mxu0 0.0
    %2582 = vmatpush1.msra.mxu0 0.0
    %2583 = vmatprep.subr.mxu0 0.0
    %2584 = vmatpush1.msra.mxu0 0.0
    %2585 = vmatprep.subr.mxu0 0.0
    %2586 = vmatpush1.msra.mxu0 0.0
    %2587 = vmatprep.subr.mxu0 0.0
    %2588 = vmatpush1.msra.mxu0 0.0
    %2589 = vmatprep.subr.mxu0 0.0
    %2590 = vmatpush1.msra.mxu0 0.0
    %2591 = vmatprep.subr.mxu0 0.0
    %2592 = vmatpush1.msra.mxu0 0.0
    %2593 = vmatprep.subr.mxu0 0.0
    %2594 = vmatpush1.msra.mxu0 0.0
    %2595 = vmatprep.subr.mxu0 0.0
    %2596 = vmatpush1.msra.mxu0 0.0
    %2597 = vmatprep.subr.mxu0 0.0
    %2598 = vmatpush1.msra.mxu0 %v2558
    %2599 = vmatprep.subr.mxu0 0.0
    %2600 = vmatpush1.msra.mxu0 %v2556
    %2601 = vmatprep.subr.mxu0 0.0
    %2602 = vmatpush2.msra.mxu0 0.0
    %2603 = vmatprep.subr.mxu0 0.0
    %2604 = vmatpush2.msra.mxu0 0.0
    %2605 = vmatprep.subr.mxu0 0.0
    %2606 = vmatpush2.msra.mxu0 0.0
    %2607 = vmatprep.subr.mxu0 0.0
    %2608 = vmatpush2.msra.mxu0 0.0
    %2609 = vmatprep.subr.mxu0 0.0
    %2610 = vmatpush2.msra.mxu0 0.0
    %2611 = vmatprep.subr.mxu0 0.0
    %2612 = vmatpush2.msra.mxu0 0.0
    %2613 = vmatprep.subr.mxu0 0.0
    %2614 = vmatpush2.msra.mxu0 0.0
    %2615 = vmatprep.subr.mxu0 0.0
    %2616 = vmatpush2.msra.mxu0 0.0
    %2617 = vmatprep.subr.mxu0 0.0
    %2618 = vmatpush2.msra.mxu0 0.0
    %2619 = vmatprep.subr.mxu0 0.0
    %2620 = vmatpush2.msra.mxu0 0.0
    %2621 = vmatprep.subr.mxu0 0.0
    %2622 = vmatpush2.msra.mxu0 0.0
    %2623 = vmatprep.subr.mxu0 0.0
    %2624 = vmatpush2.msra.mxu0 0.0
    %2625 = vmatprep.subr.mxu0 0.0
    %2626 = vmatpush2.msra.mxu0 0.0
    %2627 = vmatprep.subr.mxu0 0.0
    %2628 = vmatpush2.msra.mxu0 0.0
    %2629 = vmatprep.subr.mxu0 0.0
    %2630 = vmatpush2.msra.mxu0 0.0
    %2631 = vmatprep.subr.mxu0 0.0
    %2632 = vmatpush2.msra.mxu0 0.0
    %2633 = vmatprep.mubr.f32.mxu0 0.0
    %2634 = vmatmul.mubr.f32.gmra.mxu0 %v2561
    %v2635 = vpop.f32.mrf.mxu0
    %v2636 = vadd.f32 0.0, %v2635
    %v2637 = vpop.f32.mrf.mxu0
    %2638 = vmatprep.mubr.f32.mxu0 0.0
    %2639 = vmatmul.mubr.f32.gmra.mxu0 %v2563
    %v2640 = vpop.f32.mrf.mxu0
    %v2641 = vadd.f32 0.0, %v2640
    %v2642 = vpop.f32.mrf.mxu0
    %2643 = vmatprep.mubr.f32.mxu0 0.0
    %2644 = vmatmul.mubr.f32.gmra.mxu0 %v2565
    %v2645 = vpop.f32.mrf.mxu0
    %v2646 = vadd.f32 0.0, %v2645
    %v2647 = vpop.f32.mrf.mxu0
    %2648 = vmatprep.mubr.f32.mxu0 0.0
    %2649 = vmatmul.mubr.f32.gmra.mxu0 %v2567
    %v2650 = vpop.f32.mrf.mxu0
    %v2651 = vadd.f32 0.0, %v2650
    %v2652 = vpop.f32.mrf.mxu0
    %2653 = vdwg.mxu0
    %v2655 = vsel %vm166, %v146, 0
    %v2658 = vsel %vm166, %v152, 0
    %v2661 = vsel %vm166, %v158, 0
    %v2664 = vsel %vm166, %v164, 0
    %2666 = vmatprep.subr.mxu0 0.0
    %2667 = vmatpush1.msra.mxu0 0.0
    %2668 = vmatprep.subr.mxu0 0.0
    %2669 = vmatpush1.msra.mxu0 0.0
    %2670 = vmatprep.subr.mxu0 0.0
    %2671 = vmatpush1.msra.mxu0 0.0
    %2672 = vmatprep.subr.mxu0 0.0
    %2673 = vmatpush1.msra.mxu0 0.0
    %2674 = vmatprep.subr.mxu0 0.0
    %2675 = vmatpush1.msra.mxu0 0.0
    %2676 = vmatprep.subr.mxu0 0.0
    %2677 = vmatpush1.msra.mxu0 0.0
    %2678 = vmatprep.subr.mxu0 0.0
    %2679 = vmatpush1.msra.mxu0 0.0
    %2680 = vmatprep.subr.mxu0 0.0
    %2681 = vmatpush1.msra.mxu0 0.0
    %2682 = vmatprep.subr.mxu0 0.0
    %2683 = vmatpush1.msra.mxu0 0.0
    %2684 = vmatprep.subr.mxu0 0.0
    %2685 = vmatpush1.msra.mxu0 0.0
    %2686 = vmatprep.subr.mxu0 0.0
    %2687 = vmatpush1.msra.mxu0 0.0
    %2688 = vmatprep.subr.mxu0 0.0
    %2689 = vmatpush1.msra.mxu0 0.0
    %2690 = vmatprep.subr.mxu0 0.0
    %2691 = vmatpush1.msra.mxu0 0.0
    %2692 = vmatprep.subr.mxu0 0.0
    %2693 = vmatpush1.msra.mxu0 0.0
    %2694 = vmatprep.subr.mxu0 0.0
    %2695 = vmatpush1.msra.mxu0 %v1805
    %2696 = vmatprep.subr.mxu0 0.0
    %2697 = vmatpush1.msra.mxu0 %v1803
    %2698 = vmatprep.subr.mxu0 0.0
    %2699 = vmatpush2.msra.mxu0 0.0
    %2700 = vmatprep.subr.mxu0 0.0
    %2701 = vmatpush2.msra.mxu0 0.0
    %2702 = vmatprep.subr.mxu0 0.0
    %2703 = vmatpush2.msra.mxu0 0.0
    %2704 = vmatprep.subr.mxu0 0.0
    %2705 = vmatpush2.msra.mxu0 0.0
    %2706 = vmatprep.subr.mxu0 0.0
    %2707 = vmatpush2.msra.mxu0 0.0
    %2708 = vmatprep.subr.mxu0 0.0
    %2709 = vmatpush2.msra.mxu0 0.0
    %2710 = vmatprep.subr.mxu0 0.0
    %2711 = vmatpush2.msra.mxu0 0.0
    %2712 = vmatprep.subr.mxu0 0.0
    %2713 = vmatpush2.msra.mxu0 0.0
    %2714 = vmatprep.subr.mxu0 0.0
    %2715 = vmatpush2.msra.mxu0 0.0
    %2716 = vmatprep.subr.mxu0 0.0
    %2717 = vmatpush2.msra.mxu0 0.0
    %2718 = vmatprep.subr.mxu0 0.0
    %2719 = vmatpush2.msra.mxu0 0.0
    %2720 = vmatprep.subr.mxu0 0.0
    %2721 = vmatpush2.msra.mxu0 0.0
    %2722 = vmatprep.subr.mxu0 0.0
    %2723 = vmatpush2.msra.mxu0 0.0
    %2724 = vmatprep.subr.mxu0 0.0
    %2725 = vmatpush2.msra.mxu0 0.0
    %2726 = vmatprep.subr.mxu0 0.0
    %2727 = vmatpush2.msra.mxu0 0.0
    %2728 = vmatprep.subr.mxu0 0.0
    %2729 = vmatpush2.msra.mxu0 0.0
    %2730 = vmatprep.mubr.f32.mxu0 0.0
    %2731 = vmatmul.mubr.f32.gmra.mxu0 %v2655
    %v2732 = vpop.f32.mrf.mxu0
    %v2733 = vadd.f32 0.0, %v2732
    %v2734 = vpop.f32.mrf.mxu0
    %2735 = vmatprep.mubr.f32.mxu0 0.0
    %2736 = vmatmul.mubr.f32.gmra.mxu0 %v2658
    %v2737 = vpop.f32.mrf.mxu0
    %v2738 = vadd.f32 0.0, %v2737
    %v2739 = vpop.f32.mrf.mxu0
    %2740 = vmatprep.mubr.f32.mxu0 0.0
    %2741 = vmatmul.mubr.f32.gmra.mxu0 %v2661
    %v2742 = vpop.f32.mrf.mxu0
    %v2743 = vadd.f32 0.0, %v2742
    %v2744 = vpop.f32.mrf.mxu0
    %2745 = vmatprep.mubr.f32.mxu0 0.0
    %2746 = vmatmul.mubr.f32.gmra.mxu0 %v2664
    %v2747 = vpop.f32.mrf.mxu0
    %v2748 = vadd.f32 0.0, %v2747
    %v2749 = vpop.f32.mrf.mxu0
    %2750 = vdwg.mxu0
    %2751 = vrot.lane.b32.xlu0 %v146, 112
    %v2752 = vpop.permute.xlu0 %2751
    %2753 = vrot.lane.b32.xlu0 %v152, 112
    %v2754 = vpop.permute.xlu0 %2753
    %2755 = vrot.lane.b32.xlu0 %v158, 112
    %v2756 = vpop.permute.xlu0 %2755
    %2757 = vrot.lane.b32.xlu0 %v164, 112
    %v2758 = vpop.permute.xlu0 %2757
    %2761 = vrot.lane.b32.xlu0 %v1803, 112
    %v2762 = vpop.permute.xlu0 %2761
    %2763 = vrot.lane.b32.xlu0 %v1805, 112
    %v2764 = vpop.permute.xlu0 %2763
    %v2767 = vsel %vm166, %v2752, 0
    %v2769 = vsel %vm166, %v2754, 0
    %v2771 = vsel %vm166, %v2756, 0
    %v2773 = vsel %vm166, %v2758, 0
    %2775 = vmatprep.subr.mxu0 0.0
    %2776 = vmatpush1.msra.mxu0 0.0
    %2777 = vmatprep.subr.mxu0 0.0
    %2778 = vmatpush1.msra.mxu0 0.0
    %2779 = vmatprep.subr.mxu0 0.0
    %2780 = vmatpush1.msra.mxu0 0.0
    %2781 = vmatprep.subr.mxu0 0.0
    %2782 = vmatpush1.msra.mxu0 0.0
    %2783 = vmatprep.subr.mxu0 0.0
    %2784 = vmatpush1.msra.mxu0 0.0
    %2785 = vmatprep.subr.mxu0 0.0
    %2786 = vmatpush1.msra.mxu0 0.0
    %2787 = vmatprep.subr.mxu0 0.0
    %2788 = vmatpush1.msra.mxu0 0.0
    %2789 = vmatprep.subr.mxu0 0.0
    %2790 = vmatpush1.msra.mxu0 0.0
    %2791 = vmatprep.subr.mxu0 0.0
    %2792 = vmatpush1.msra.mxu0 0.0
    %2793 = vmatprep.subr.mxu0 0.0
    %2794 = vmatpush1.msra.mxu0 0.0
    %2795 = vmatprep.subr.mxu0 0.0
    %2796 = vmatpush1.msra.mxu0 0.0
    %2797 = vmatprep.subr.mxu0 0.0
    %2798 = vmatpush1.msra.mxu0 0.0
    %2799 = vmatprep.subr.mxu0 0.0
    %2800 = vmatpush1.msra.mxu0 0.0
    %2801 = vmatprep.subr.mxu0 0.0
    %2802 = vmatpush1.msra.mxu0 0.0
    %2803 = vmatprep.subr.mxu0 0.0
    %2804 = vmatpush1.msra.mxu0 %v2764
    %2805 = vmatprep.subr.mxu0 0.0
    %2806 = vmatpush1.msra.mxu0 %v2762
    %2807 = vmatprep.subr.mxu0 0.0
    %2808 = vmatpush2.msra.mxu0 0.0
    %2809 = vmatprep.subr.mxu0 0.0
    %2810 = vmatpush2.msra.mxu0 0.0
    %2811 = vmatprep.subr.mxu0 0.0
    %2812 = vmatpush2.msra.mxu0 0.0
    %2813 = vmatprep.subr.mxu0 0.0
    %2814 = vmatpush2.msra.mxu0 0.0
    %2815 = vmatprep.subr.mxu0 0.0
    %2816 = vmatpush2.msra.mxu0 0.0
    %2817 = vmatprep.subr.mxu0 0.0
    %2818 = vmatpush2.msra.mxu0 0.0
    %2819 = vmatprep.subr.mxu0 0.0
    %2820 = vmatpush2.msra.mxu0 0.0
    %2821 = vmatprep.subr.mxu0 0.0
    %2822 = vmatpush2.msra.mxu0 0.0
    %2823 = vmatprep.subr.mxu0 0.0
    %2824 = vmatpush2.msra.mxu0 0.0
    %2825 = vmatprep.subr.mxu0 0.0
    %2826 = vmatpush2.msra.mxu0 0.0
    %2827 = vmatprep.subr.mxu0 0.0
    %2828 = vmatpush2.msra.mxu0 0.0
    %2829 = vmatprep.subr.mxu0 0.0
    %2830 = vmatpush2.msra.mxu0 0.0
    %2831 = vmatprep.subr.mxu0 0.0
    %2832 = vmatpush2.msra.mxu0 0.0
    %2833 = vmatprep.subr.mxu0 0.0
    %2834 = vmatpush2.msra.mxu0 0.0
    %2835 = vmatprep.subr.mxu0 0.0
    %2836 = vmatpush2.msra.mxu0 0.0
    %2837 = vmatprep.subr.mxu0 0.0
    %2838 = vmatpush2.msra.mxu0 0.0
    %2839 = vmatprep.mubr.f32.mxu0 0.0
    %2840 = vmatmul.mubr.f32.gmra.mxu0 %v2767
    %v2841 = vpop.f32.mrf.mxu0
    %v2842 = vadd.f32 0.0, %v2841
    %v2843 = vpop.f32.mrf.mxu0
    %2844 = vmatprep.mubr.f32.mxu0 0.0
    %2845 = vmatmul.mubr.f32.gmra.mxu0 %v2769
    %v2846 = vpop.f32.mrf.mxu0
    %v2847 = vadd.f32 0.0, %v2846
    %v2848 = vpop.f32.mrf.mxu0
    %2849 = vmatprep.mubr.f32.mxu0 0.0
    %2850 = vmatmul.mubr.f32.gmra.mxu0 %v2771
    %v2851 = vpop.f32.mrf.mxu0
    %v2852 = vadd.f32 0.0, %v2851
    %v2853 = vpop.f32.mrf.mxu0
    %2854 = vmatprep.mubr.f32.mxu0 0.0
    %2855 = vmatmul.mubr.f32.gmra.mxu0 %v2773
    %v2856 = vpop.f32.mrf.mxu0
    %v2857 = vadd.f32 0.0, %v2856
    %v2858 = vpop.f32.mrf.mxu0
    %2859 = vdwg.mxu0
    %2860 = vrot.lane.b32.xlu0 %v146, 96
    %v2861 = vpop.permute.xlu0 %2860
    %2862 = vrot.lane.b32.xlu0 %v152, 96
    %v2863 = vpop.permute.xlu0 %2862
    %2864 = vrot.lane.b32.xlu0 %v158, 96
    %v2865 = vpop.permute.xlu0 %2864
    %2866 = vrot.lane.b32.xlu0 %v164, 96
    %v2867 = vpop.permute.xlu0 %2866
    %2868 = vrot.lane.b32.xlu0 %v1803, 96
    %v2869 = vpop.permute.xlu0 %2868
    %2870 = vrot.lane.b32.xlu0 %v1805, 96
    %v2871 = vpop.permute.xlu0 %2870
    %v2874 = vsel %vm166, %v2861, 0
    %v2876 = vsel %vm166, %v2863, 0
    %v2878 = vsel %vm166, %v2865, 0
    %v2880 = vsel %vm166, %v2867, 0
    %2882 = vmatprep.subr.mxu0 0.0
    %2883 = vmatpush1.msra.mxu0 0.0
    %2884 = vmatprep.subr.mxu0 0.0
    %2885 = vmatpush1.msra.mxu0 0.0
    %2886 = vmatprep.subr.mxu0 0.0
    %2887 = vmatpush1.msra.mxu0 0.0
    %2888 = vmatprep.subr.mxu0 0.0
    %2889 = vmatpush1.msra.mxu0 0.0
    %2890 = vmatprep.subr.mxu0 0.0
    %2891 = vmatpush1.msra.mxu0 0.0
    %2892 = vmatprep.subr.mxu0 0.0
    %2893 = vmatpush1.msra.mxu0 0.0
    %2894 = vmatprep.subr.mxu0 0.0
    %2895 = vmatpush1.msra.mxu0 0.0
    %2896 = vmatprep.subr.mxu0 0.0
    %2897 = vmatpush1.msra.mxu0 0.0
    %2898 = vmatprep.subr.mxu0 0.0
    %2899 = vmatpush1.msra.mxu0 0.0
    %2900 = vmatprep.subr.mxu0 0.0
    %2901 = vmatpush1.msra.mxu0 0.0
    %2902 = vmatprep.subr.mxu0 0.0
    %2903 = vmatpush1.msra.mxu0 0.0
    %2904 = vmatprep.subr.mxu0 0.0
    %2905 = vmatpush1.msra.mxu0 0.0
    %2906 = vmatprep.subr.mxu0 0.0
    %2907 = vmatpush1.msra.mxu0 0.0
    %2908 = vmatprep.subr.mxu0 0.0
    %2909 = vmatpush1.msra.mxu0 0.0
    %2910 = vmatprep.subr.mxu0 0.0
    %2911 = vmatpush1.msra.mxu0 %v2871
    %2912 = vmatprep.subr.mxu0 0.0
    %2913 = vmatpush1.msra.mxu0 %v2869
    %2914 = vmatprep.subr.mxu0 0.0
    %2915 = vmatpush2.msra.mxu0 0.0
    %2916 = vmatprep.subr.mxu0 0.0
    %2917 = vmatpush2.msra.mxu0 0.0
    %2918 = vmatprep.subr.mxu0 0.0
    %2919 = vmatpush2.msra.mxu0 0.0
    %2920 = vmatprep.subr.mxu0 0.0
    %2921 = vmatpush2.msra.mxu0 0.0
    %2922 = vmatprep.subr.mxu0 0.0
    %2923 = vmatpush2.msra.mxu0 0.0
    %2924 = vmatprep.subr.mxu0 0.0
    %2925 = vmatpush2.msra.mxu0 0.0
    %2926 = vmatprep.subr.mxu0 0.0
    %2927 = vmatpush2.msra.mxu0 0.0
    %2928 = vmatprep.subr.mxu0 0.0
    %2929 = vmatpush2.msra.mxu0 0.0
    %2930 = vmatprep.subr.mxu0 0.0
    %2931 = vmatpush2.msra.mxu0 0.0
    %2932 = vmatprep.subr.mxu0 0.0
    %2933 = vmatpush2.msra.mxu0 0.0
    %2934 = vmatprep.subr.mxu0 0.0
    %2935 = vmatpush2.msra.mxu0 0.0
    %2936 = vmatprep.subr.mxu0 0.0
    %2937 = vmatpush2.msra.mxu0 0.0
    %2938 = vmatprep.subr.mxu0 0.0
    %2939 = vmatpush2.msra.mxu0 0.0
    %2940 = vmatprep.subr.mxu0 0.0
    %2941 = vmatpush2.msra.mxu0 0.0
    %2942 = vmatprep.subr.mxu0 0.0
    %2943 = vmatpush2.msra.mxu0 0.0
    %2944 = vmatprep.subr.mxu0 0.0
    %2945 = vmatpush2.msra.mxu0 0.0
    %2946 = vmatprep.mubr.f32.mxu0 0.0
    %2947 = vmatmul.mubr.f32.gmra.mxu0 %v2874
    %v2948 = vpop.f32.mrf.mxu0
    %v2949 = vadd.f32 0.0, %v2948
    %v2950 = vpop.f32.mrf.mxu0
    %2951 = vmatprep.mubr.f32.mxu0 0.0
    %2952 = vmatmul.mubr.f32.gmra.mxu0 %v2876
    %v2953 = vpop.f32.mrf.mxu0
    %v2954 = vadd.f32 0.0, %v2953
    %v2955 = vpop.f32.mrf.mxu0
    %2956 = vmatprep.mubr.f32.mxu0 0.0
    %2957 = vmatmul.mubr.f32.gmra.mxu0 %v2878
    %v2958 = vpop.f32.mrf.mxu0
    %v2959 = vadd.f32 0.0, %v2958
    %v2960 = vpop.f32.mrf.mxu0
    %2961 = vmatprep.mubr.f32.mxu0 0.0
    %2962 = vmatmul.mubr.f32.gmra.mxu0 %v2880
    %v2963 = vpop.f32.mrf.mxu0
    %v2964 = vadd.f32 0.0, %v2963
    %v2965 = vpop.f32.mrf.mxu0
    %2966 = vdwg.mxu0
    %2967 = vrot.lane.b32.xlu0 %v146, 80
    %v2968 = vpop.permute.xlu0 %2967
    %2969 = vrot.lane.b32.xlu0 %v152, 80
    %v2970 = vpop.permute.xlu0 %2969
    %2971 = vrot.lane.b32.xlu0 %v158, 80
    %v2972 = vpop.permute.xlu0 %2971
    %2973 = vrot.lane.b32.xlu0 %v164, 80
    %v2974 = vpop.permute.xlu0 %2973
    %2975 = vrot.lane.b32.xlu0 %v1803, 80
    %v2976 = vpop.permute.xlu0 %2975
    %2977 = vrot.lane.b32.xlu0 %v1805, 80
    %v2978 = vpop.permute.xlu0 %2977
    %v2981 = vsel %vm166, %v2968, 0
    %v2983 = vsel %vm166, %v2970, 0
    %v2985 = vsel %vm166, %v2972, 0
    %v2987 = vsel %vm166, %v2974, 0
    %2989 = vmatprep.subr.mxu0 0.0
    %2990 = vmatpush1.msra.mxu0 0.0
    %2991 = vmatprep.subr.mxu0 0.0
    %2992 = vmatpush1.msra.mxu0 0.0
    %2993 = vmatprep.subr.mxu0 0.0
    %2994 = vmatpush1.msra.mxu0 0.0
    %2995 = vmatprep.subr.mxu0 0.0
    %2996 = vmatpush1.msra.mxu0 0.0
    %2997 = vmatprep.subr.mxu0 0.0
    %2998 = vmatpush1.msra.mxu0 0.0
    %2999 = vmatprep.subr.mxu0 0.0
    %3000 = vmatpush1.msra.mxu0 0.0
    %3001 = vmatprep.subr.mxu0 0.0
    %3002 = vmatpush1.msra.mxu0 0.0
    %3003 = vmatprep.subr.mxu0 0.0
    %3004 = vmatpush1.msra.mxu0 0.0
    %3005 = vmatprep.subr.mxu0 0.0
    %3006 = vmatpush1.msra.mxu0 0.0
    %3007 = vmatprep.subr.mxu0 0.0
    %3008 = vmatpush1.msra.mxu0 0.0
    %3009 = vmatprep.subr.mxu0 0.0
    %3010 = vmatpush1.msra.mxu0 0.0
    %3011 = vmatprep.subr.mxu0 0.0
    %3012 = vmatpush1.msra.mxu0 0.0
    %3013 = vmatprep.subr.mxu0 0.0
    %3014 = vmatpush1.msra.mxu0 0.0
    %3015 = vmatprep.subr.mxu0 0.0
    %3016 = vmatpush1.msra.mxu0 0.0
    %3017 = vmatprep.subr.mxu0 0.0
    %3018 = vmatpush1.msra.mxu0 %v2978
    %3019 = vmatprep.subr.mxu0 0.0
    %3020 = vmatpush1.msra.mxu0 %v2976
    %3021 = vmatprep.subr.mxu0 0.0
    %3022 = vmatpush2.msra.mxu0 0.0
    %3023 = vmatprep.subr.mxu0 0.0
    %3024 = vmatpush2.msra.mxu0 0.0
    %3025 = vmatprep.subr.mxu0 0.0
    %3026 = vmatpush2.msra.mxu0 0.0
    %3027 = vmatprep.subr.mxu0 0.0
    %3028 = vmatpush2.msra.mxu0 0.0
    %3029 = vmatprep.subr.mxu0 0.0
    %3030 = vmatpush2.msra.mxu0 0.0
    %3031 = vmatprep.subr.mxu0 0.0
    %3032 = vmatpush2.msra.mxu0 0.0
    %3033 = vmatprep.subr.mxu0 0.0
    %3034 = vmatpush2.msra.mxu0 0.0
    %3035 = vmatprep.subr.mxu0 0.0
    %3036 = vmatpush2.msra.mxu0 0.0
    %3037 = vmatprep.subr.mxu0 0.0
    %3038 = vmatpush2.msra.mxu0 0.0
    %3039 = vmatprep.subr.mxu0 0.0
    %3040 = vmatpush2.msra.mxu0 0.0
    %3041 = vmatprep.subr.mxu0 0.0
    %3042 = vmatpush2.msra.mxu0 0.0
    %3043 = vmatprep.subr.mxu0 0.0
    %3044 = vmatpush2.msra.mxu0 0.0
    %3045 = vmatprep.subr.mxu0 0.0
    %3046 = vmatpush2.msra.mxu0 0.0
    %3047 = vmatprep.subr.mxu0 0.0
    %3048 = vmatpush2.msra.mxu0 0.0
    %3049 = vmatprep.subr.mxu0 0.0
    %3050 = vmatpush2.msra.mxu0 0.0
    %3051 = vmatprep.subr.mxu0 0.0
    %3052 = vmatpush2.msra.mxu0 0.0
    %3053 = vmatprep.mubr.f32.mxu0 0.0
    %3054 = vmatmul.mubr.f32.gmra.mxu0 %v2981
    %v3055 = vpop.f32.mrf.mxu0
    %v3056 = vadd.f32 0.0, %v3055
    %v3057 = vpop.f32.mrf.mxu0
    %3058 = vmatprep.mubr.f32.mxu0 0.0
    %3059 = vmatmul.mubr.f32.gmra.mxu0 %v2983
    %v3060 = vpop.f32.mrf.mxu0
    %v3061 = vadd.f32 0.0, %v3060
    %v3062 = vpop.f32.mrf.mxu0
    %3063 = vmatprep.mubr.f32.mxu0 0.0
    %3064 = vmatmul.mubr.f32.gmra.mxu0 %v2985
    %v3065 = vpop.f32.mrf.mxu0
    %v3066 = vadd.f32 0.0, %v3065
    %v3067 = vpop.f32.mrf.mxu0
    %3068 = vmatprep.mubr.f32.mxu0 0.0
    %3069 = vmatmul.mubr.f32.gmra.mxu0 %v2987
    %v3070 = vpop.f32.mrf.mxu0
    %v3071 = vadd.f32 0.0, %v3070
    %v3072 = vpop.f32.mrf.mxu0
    %3073 = vdwg.mxu0
    %3074 = vrot.lane.b32.xlu0 %v146, 64
    %v3075 = vpop.permute.xlu0 %3074
    %3076 = vrot.lane.b32.xlu0 %v152, 64
    %v3077 = vpop.permute.xlu0 %3076
    %3078 = vrot.lane.b32.xlu0 %v158, 64
    %v3079 = vpop.permute.xlu0 %3078
    %3080 = vrot.lane.b32.xlu0 %v164, 64
    %v3081 = vpop.permute.xlu0 %3080
    %3082 = vrot.lane.b32.xlu0 %v1803, 64
    %v3083 = vpop.permute.xlu0 %3082
    %3084 = vrot.lane.b32.xlu0 %v1805, 64
    %v3085 = vpop.permute.xlu0 %3084
    %v3088 = vsel %vm166, %v3075, 0
    %v3090 = vsel %vm166, %v3077, 0
    %v3092 = vsel %vm166, %v3079, 0
    %v3094 = vsel %vm166, %v3081, 0
    %3096 = vmatprep.subr.mxu0 0.0
    %3097 = vmatpush1.msra.mxu0 0.0
    %3098 = vmatprep.subr.mxu0 0.0
    %3099 = vmatpush1.msra.mxu0 0.0
    %3100 = vmatprep.subr.mxu0 0.0
    %3101 = vmatpush1.msra.mxu0 0.0
    %3102 = vmatprep.subr.mxu0 0.0
    %3103 = vmatpush1.msra.mxu0 0.0
    %3104 = vmatprep.subr.mxu0 0.0
    %3105 = vmatpush1.msra.mxu0 0.0
    %3106 = vmatprep.subr.mxu0 0.0
    %3107 = vmatpush1.msra.mxu0 0.0
    %3108 = vmatprep.subr.mxu0 0.0
    %3109 = vmatpush1.msra.mxu0 0.0
    %3110 = vmatprep.subr.mxu0 0.0
    %3111 = vmatpush1.msra.mxu0 0.0
    %3112 = vmatprep.subr.mxu0 0.0
    %3113 = vmatpush1.msra.mxu0 0.0
    %3114 = vmatprep.subr.mxu0 0.0
    %3115 = vmatpush1.msra.mxu0 0.0
    %3116 = vmatprep.subr.mxu0 0.0
    %3117 = vmatpush1.msra.mxu0 0.0
    %3118 = vmatprep.subr.mxu0 0.0
    %3119 = vmatpush1.msra.mxu0 0.0
    %3120 = vmatprep.subr.mxu0 0.0
    %3121 = vmatpush1.msra.mxu0 0.0
    %3122 = vmatprep.subr.mxu0 0.0
    %3123 = vmatpush1.msra.mxu0 0.0
    %3124 = vmatprep.subr.mxu0 0.0
    %3125 = vmatpush1.msra.mxu0 %v3085
    %3126 = vmatprep.subr.mxu0 0.0
    %3127 = vmatpush1.msra.mxu0 %v3083
    %3128 = vmatprep.subr.mxu0 0.0
    %3129 = vmatpush2.msra.mxu0 0.0
    %3130 = vmatprep.subr.mxu0 0.0
    %3131 = vmatpush2.msra.mxu0 0.0
    %3132 = vmatprep.subr.mxu0 0.0
    %3133 = vmatpush2.msra.mxu0 0.0
    %3134 = vmatprep.subr.mxu0 0.0
    %3135 = vmatpush2.msra.mxu0 0.0
    %3136 = vmatprep.subr.mxu0 0.0
    %3137 = vmatpush2.msra.mxu0 0.0
    %3138 = vmatprep.subr.mxu0 0.0
    %3139 = vmatpush2.msra.mxu0 0.0
    %3140 = vmatprep.subr.mxu0 0.0
    %3141 = vmatpush2.msra.mxu0 0.0
    %3142 = vmatprep.subr.mxu0 0.0
    %3143 = vmatpush2.msra.mxu0 0.0
    %3144 = vmatprep.subr.mxu0 0.0
    %3145 = vmatpush2.msra.mxu0 0.0
    %3146 = vmatprep.subr.mxu0 0.0
    %3147 = vmatpush2.msra.mxu0 0.0
    %3148 = vmatprep.subr.mxu0 0.0
    %3149 = vmatpush2.msra.mxu0 0.0
    %3150 = vmatprep.subr.mxu0 0.0
    %3151 = vmatpush2.msra.mxu0 0.0
    %3152 = vmatprep.subr.mxu0 0.0
    %3153 = vmatpush2.msra.mxu0 0.0
    %3154 = vmatprep.subr.mxu0 0.0
    %3155 = vmatpush2.msra.mxu0 0.0
    %3156 = vmatprep.subr.mxu0 0.0
    %3157 = vmatpush2.msra.mxu0 0.0
    %3158 = vmatprep.subr.mxu0 0.0
    %3159 = vmatpush2.msra.mxu0 0.0
    %3160 = vmatprep.mubr.f32.mxu0 0.0
    %3161 = vmatmul.mubr.f32.gmra.mxu0 %v3088
    %v3162 = vpop.f32.mrf.mxu0
    %v3163 = vadd.f32 0.0, %v3162
    %v3164 = vpop.f32.mrf.mxu0
    %3165 = vmatprep.mubr.f32.mxu0 0.0
    %3166 = vmatmul.mubr.f32.gmra.mxu0 %v3090
    %v3167 = vpop.f32.mrf.mxu0
    %v3168 = vadd.f32 0.0, %v3167
    %v3169 = vpop.f32.mrf.mxu0
    %3170 = vmatprep.mubr.f32.mxu0 0.0
    %3171 = vmatmul.mubr.f32.gmra.mxu0 %v3092
    %v3172 = vpop.f32.mrf.mxu0
    %v3173 = vadd.f32 0.0, %v3172
    %v3174 = vpop.f32.mrf.mxu0
    %3175 = vmatprep.mubr.f32.mxu0 0.0
    %3176 = vmatmul.mubr.f32.gmra.mxu0 %v3094
    %v3177 = vpop.f32.mrf.mxu0
    %v3178 = vadd.f32 0.0, %v3177
    %v3179 = vpop.f32.mrf.mxu0
    %3180 = vdwg.mxu0
    %3181 = vrot.lane.b32.xlu0 %v146, 48
    %v3182 = vpop.permute.xlu0 %3181
    %3183 = vrot.lane.b32.xlu0 %v152, 48
    %v3184 = vpop.permute.xlu0 %3183
    %3185 = vrot.lane.b32.xlu0 %v158, 48
    %v3186 = vpop.permute.xlu0 %3185
    %3187 = vrot.lane.b32.xlu0 %v164, 48
    %v3188 = vpop.permute.xlu0 %3187
    %3189 = vrot.lane.b32.xlu0 %v1803, 48
    %v3190 = vpop.permute.xlu0 %3189
    %3191 = vrot.lane.b32.xlu0 %v1805, 48
    %v3192 = vpop.permute.xlu0 %3191
    %v3195 = vsel %vm166, %v3182, 0
    %v3197 = vsel %vm166, %v3184, 0
    %v3199 = vsel %vm166, %v3186, 0
    %v3201 = vsel %vm166, %v3188, 0
    %3203 = vmatprep.subr.mxu0 0.0
    %3204 = vmatpush1.msra.mxu0 0.0
    %3205 = vmatprep.subr.mxu0 0.0
    %3206 = vmatpush1.msra.mxu0 0.0
    %3207 = vmatprep.subr.mxu0 0.0
    %3208 = vmatpush1.msra.mxu0 0.0
    %3209 = vmatprep.subr.mxu0 0.0
    %3210 = vmatpush1.msra.mxu0 0.0
    %3211 = vmatprep.subr.mxu0 0.0
    %3212 = vmatpush1.msra.mxu0 0.0
    %3213 = vmatprep.subr.mxu0 0.0
    %3214 = vmatpush1.msra.mxu0 0.0
    %3215 = vmatprep.subr.mxu0 0.0
    %3216 = vmatpush1.msra.mxu0 0.0
    %3217 = vmatprep.subr.mxu0 0.0
    %3218 = vmatpush1.msra.mxu0 0.0
    %3219 = vmatprep.subr.mxu0 0.0
    %3220 = vmatpush1.msra.mxu0 0.0
    %3221 = vmatprep.subr.mxu0 0.0
    %3222 = vmatpush1.msra.mxu0 0.0
    %3223 = vmatprep.subr.mxu0 0.0
    %3224 = vmatpush1.msra.mxu0 0.0
    %3225 = vmatprep.subr.mxu0 0.0
    %3226 = vmatpush1.msra.mxu0 0.0
    %3227 = vmatprep.subr.mxu0 0.0
    %3228 = vmatpush1.msra.mxu0 0.0
    %3229 = vmatprep.subr.mxu0 0.0
    %3230 = vmatpush1.msra.mxu0 0.0
    %3231 = vmatprep.subr.mxu0 0.0
    %3232 = vmatpush1.msra.mxu0 %v3192
    %3233 = vmatprep.subr.mxu0 0.0
    %3234 = vmatpush1.msra.mxu0 %v3190
    %3235 = vmatprep.subr.mxu0 0.0
    %3236 = vmatpush2.msra.mxu0 0.0
    %3237 = vmatprep.subr.mxu0 0.0
    %3238 = vmatpush2.msra.mxu0 0.0
    %3239 = vmatprep.subr.mxu0 0.0
    %3240 = vmatpush2.msra.mxu0 0.0
    %3241 = vmatprep.subr.mxu0 0.0
    %3242 = vmatpush2.msra.mxu0 0.0
    %3243 = vmatprep.subr.mxu0 0.0
    %3244 = vmatpush2.msra.mxu0 0.0
    %3245 = vmatprep.subr.mxu0 0.0
    %3246 = vmatpush2.msra.mxu0 0.0
    %3247 = vmatprep.subr.mxu0 0.0
    %3248 = vmatpush2.msra.mxu0 0.0
    %3249 = vmatprep.subr.mxu0 0.0
    %3250 = vmatpush2.msra.mxu0 0.0
    %3251 = vmatprep.subr.mxu0 0.0
    %3252 = vmatpush2.msra.mxu0 0.0
    %3253 = vmatprep.subr.mxu0 0.0
    %3254 = vmatpush2.msra.mxu0 0.0
    %3255 = vmatprep.subr.mxu0 0.0
    %3256 = vmatpush2.msra.mxu0 0.0
    %3257 = vmatprep.subr.mxu0 0.0
    %3258 = vmatpush2.msra.mxu0 0.0
    %3259 = vmatprep.subr.mxu0 0.0
    %3260 = vmatpush2.msra.mxu0 0.0
    %3261 = vmatprep.subr.mxu0 0.0
    %3262 = vmatpush2.msra.mxu0 0.0
    %3263 = vmatprep.subr.mxu0 0.0
    %3264 = vmatpush2.msra.mxu0 0.0
    %3265 = vmatprep.subr.mxu0 0.0
    %3266 = vmatpush2.msra.mxu0 0.0
    %3267 = vmatprep.mubr.f32.mxu0 0.0
    %3268 = vmatmul.mubr.f32.gmra.mxu0 %v3195
    %v3269 = vpop.f32.mrf.mxu0
    %v3270 = vadd.f32 0.0, %v3269
    %v3271 = vpop.f32.mrf.mxu0
    %3272 = vmatprep.mubr.f32.mxu0 0.0
    %3273 = vmatmul.mubr.f32.gmra.mxu0 %v3197
    %v3274 = vpop.f32.mrf.mxu0
    %v3275 = vadd.f32 0.0, %v3274
    %v3276 = vpop.f32.mrf.mxu0
    %3277 = vmatprep.mubr.f32.mxu0 0.0
    %3278 = vmatmul.mubr.f32.gmra.mxu0 %v3199
    %v3279 = vpop.f32.mrf.mxu0
    %v3280 = vadd.f32 0.0, %v3279
    %v3281 = vpop.f32.mrf.mxu0
    %3282 = vmatprep.mubr.f32.mxu0 0.0
    %3283 = vmatmul.mubr.f32.gmra.mxu0 %v3201
    %v3284 = vpop.f32.mrf.mxu0
    %v3285 = vadd.f32 0.0, %v3284
    %v3286 = vpop.f32.mrf.mxu0
    %3287 = vdwg.mxu0
    %3288 = vrot.lane.b32.xlu0 %v146, 32
    %v3289 = vpop.permute.xlu0 %3288
    %3290 = vrot.lane.b32.xlu0 %v152, 32
    %v3291 = vpop.permute.xlu0 %3290
    %3292 = vrot.lane.b32.xlu0 %v158, 32
    %v3293 = vpop.permute.xlu0 %3292
    %3294 = vrot.lane.b32.xlu0 %v164, 32
    %v3295 = vpop.permute.xlu0 %3294
    %3296 = vrot.lane.b32.xlu0 %v1803, 32
    %v3297 = vpop.permute.xlu0 %3296
    %3298 = vrot.lane.b32.xlu0 %v1805, 32
    %v3299 = vpop.permute.xlu0 %3298
    %v3302 = vsel %vm166, %v3289, 0
    %v3304 = vsel %vm166, %v3291, 0
    %v3306 = vsel %vm166, %v3293, 0
    %v3308 = vsel %vm166, %v3295, 0
    %3310 = vmatprep.subr.mxu0 0.0
    %3311 = vmatpush1.msra.mxu0 0.0
    %3312 = vmatprep.subr.mxu0 0.0
    %3313 = vmatpush1.msra.mxu0 0.0
    %3314 = vmatprep.subr.mxu0 0.0
    %3315 = vmatpush1.msra.mxu0 0.0
    %3316 = vmatprep.subr.mxu0 0.0
    %3317 = vmatpush1.msra.mxu0 0.0
    %3318 = vmatprep.subr.mxu0 0.0
    %3319 = vmatpush1.msra.mxu0 0.0
    %3320 = vmatprep.subr.mxu0 0.0
    %3321 = vmatpush1.msra.mxu0 0.0
    %3322 = vmatprep.subr.mxu0 0.0
    %3323 = vmatpush1.msra.mxu0 0.0
    %3324 = vmatprep.subr.mxu0 0.0
    %3325 = vmatpush1.msra.mxu0 0.0
    %3326 = vmatprep.subr.mxu0 0.0
    %3327 = vmatpush1.msra.mxu0 0.0
    %3328 = vmatprep.subr.mxu0 0.0
    %3329 = vmatpush1.msra.mxu0 0.0
    %3330 = vmatprep.subr.mxu0 0.0
    %3331 = vmatpush1.msra.mxu0 0.0
    %3332 = vmatprep.subr.mxu0 0.0
    %3333 = vmatpush1.msra.mxu0 0.0
    %3334 = vmatprep.subr.mxu0 0.0
    %3335 = vmatpush1.msra.mxu0 0.0
    %3336 = vmatprep.subr.mxu0 0.0
    %3337 = vmatpush1.msra.mxu0 0.0
    %3338 = vmatprep.subr.mxu0 0.0
    %3339 = vmatpush1.msra.mxu0 %v3299
    %3340 = vmatprep.subr.mxu0 0.0
    %3341 = vmatpush1.msra.mxu0 %v3297
    %3342 = vmatprep.subr.mxu0 0.0
    %3343 = vmatpush2.msra.mxu0 0.0
    %3344 = vmatprep.subr.mxu0 0.0
    %3345 = vmatpush2.msra.mxu0 0.0
    %3346 = vmatprep.subr.mxu0 0.0
    %3347 = vmatpush2.msra.mxu0 0.0
    %3348 = vmatprep.subr.mxu0 0.0
    %3349 = vmatpush2.msra.mxu0 0.0
    %3350 = vmatprep.subr.mxu0 0.0
    %3351 = vmatpush2.msra.mxu0 0.0
    %3352 = vmatprep.subr.mxu0 0.0
    %3353 = vmatpush2.msra.mxu0 0.0
    %3354 = vmatprep.subr.mxu0 0.0
    %3355 = vmatpush2.msra.mxu0 0.0
    %3356 = vmatprep.subr.mxu0 0.0
    %3357 = vmatpush2.msra.mxu0 0.0
    %3358 = vmatprep.subr.mxu0 0.0
    %3359 = vmatpush2.msra.mxu0 0.0
    %3360 = vmatprep.subr.mxu0 0.0
    %3361 = vmatpush2.msra.mxu0 0.0
    %3362 = vmatprep.subr.mxu0 0.0
    %3363 = vmatpush2.msra.mxu0 0.0
    %3364 = vmatprep.subr.mxu0 0.0
    %3365 = vmatpush2.msra.mxu0 0.0
    %3366 = vmatprep.subr.mxu0 0.0
    %3367 = vmatpush2.msra.mxu0 0.0
    %3368 = vmatprep.subr.mxu0 0.0
    %3369 = vmatpush2.msra.mxu0 0.0
    %3370 = vmatprep.subr.mxu0 0.0
    %3371 = vmatpush2.msra.mxu0 0.0
    %3372 = vmatprep.subr.mxu0 0.0
    %3373 = vmatpush2.msra.mxu0 0.0
    %3374 = vmatprep.mubr.f32.mxu0 0.0
    %3375 = vmatmul.mubr.f32.gmra.mxu0 %v3302
    %v3376 = vpop.f32.mrf.mxu0
    %v3377 = vadd.f32 0.0, %v3376
    %v3378 = vpop.f32.mrf.mxu0
    %3379 = vmatprep.mubr.f32.mxu0 0.0
    %3380 = vmatmul.mubr.f32.gmra.mxu0 %v3304
    %v3381 = vpop.f32.mrf.mxu0
    %v3382 = vadd.f32 0.0, %v3381
    %v3383 = vpop.f32.mrf.mxu0
    %3384 = vmatprep.mubr.f32.mxu0 0.0
    %3385 = vmatmul.mubr.f32.gmra.mxu0 %v3306
    %v3386 = vpop.f32.mrf.mxu0
    %v3387 = vadd.f32 0.0, %v3386
    %v3388 = vpop.f32.mrf.mxu0
    %3389 = vmatprep.mubr.f32.mxu0 0.0
    %3390 = vmatmul.mubr.f32.gmra.mxu0 %v3308
    %v3391 = vpop.f32.mrf.mxu0
    %v3392 = vadd.f32 0.0, %v3391
    %v3393 = vpop.f32.mrf.mxu0
    %3394 = vdwg.mxu0
    %3395 = vrot.lane.b32.xlu0 %v146, 16
    %v3396 = vpop.permute.xlu0 %3395
    %3397 = vrot.lane.b32.xlu0 %v152, 16
    %v3398 = vpop.permute.xlu0 %3397
    %3399 = vrot.lane.b32.xlu0 %v158, 16
    %v3400 = vpop.permute.xlu0 %3399
    %3401 = vrot.lane.b32.xlu0 %v164, 16
    %v3402 = vpop.permute.xlu0 %3401
    %3403 = vrot.lane.b32.xlu0 %v1803, 16
    %v3404 = vpop.permute.xlu0 %3403
    %3405 = vrot.lane.b32.xlu0 %v1805, 16
    %v3406 = vpop.permute.xlu0 %3405
    %v3409 = vsel %vm166, %v3396, 0
    %v3411 = vsel %vm166, %v3398, 0
    %v3413 = vsel %vm166, %v3400, 0
    %v3415 = vsel %vm166, %v3402, 0
    %3417 = vmatprep.subr.mxu0 0.0
    %3418 = vmatpush1.msra.mxu0 0.0
    %3419 = vmatprep.subr.mxu0 0.0
    %3420 = vmatpush1.msra.mxu0 0.0
    %3421 = vmatprep.subr.mxu0 0.0
    %3422 = vmatpush1.msra.mxu0 0.0
    %3423 = vmatprep.subr.mxu0 0.0
    %3424 = vmatpush1.msra.mxu0 0.0
    %3425 = vmatprep.subr.mxu0 0.0
    %3426 = vmatpush1.msra.mxu0 0.0
    %3427 = vmatprep.subr.mxu0 0.0
    %3428 = vmatpush1.msra.mxu0 0.0
    %3429 = vmatprep.subr.mxu0 0.0
    %3430 = vmatpush1.msra.mxu0 0.0
    %3431 = vmatprep.subr.mxu0 0.0
    %3432 = vmatpush1.msra.mxu0 0.0
    %3433 = vmatprep.subr.mxu0 0.0
    %3434 = vmatpush1.msra.mxu0 0.0
    %3435 = vmatprep.subr.mxu0 0.0
    %3436 = vmatpush1.msra.mxu0 0.0
    %3437 = vmatprep.subr.mxu0 0.0
    %3438 = vmatpush1.msra.mxu0 0.0
    %3439 = vmatprep.subr.mxu0 0.0
    %3440 = vmatpush1.msra.mxu0 0.0
    %3441 = vmatprep.subr.mxu0 0.0
    %3442 = vmatpush1.msra.mxu0 0.0
    %3443 = vmatprep.subr.mxu0 0.0
    %3444 = vmatpush1.msra.mxu0 0.0
    %3445 = vmatprep.subr.mxu0 0.0
    %3446 = vmatpush1.msra.mxu0 %v3406
    %3447 = vmatprep.subr.mxu0 0.0
    %3448 = vmatpush1.msra.mxu0 %v3404
    %3449 = vmatprep.subr.mxu0 0.0
    %3450 = vmatpush2.msra.mxu0 0.0
    %3451 = vmatprep.subr.mxu0 0.0
    %3452 = vmatpush2.msra.mxu0 0.0
    %3453 = vmatprep.subr.mxu0 0.0
    %3454 = vmatpush2.msra.mxu0 0.0
    %3455 = vmatprep.subr.mxu0 0.0
    %3456 = vmatpush2.msra.mxu0 0.0
    %3457 = vmatprep.subr.mxu0 0.0
    %3458 = vmatpush2.msra.mxu0 0.0
    %3459 = vmatprep.subr.mxu0 0.0
    %3460 = vmatpush2.msra.mxu0 0.0
    %3461 = vmatprep.subr.mxu0 0.0
    %3462 = vmatpush2.msra.mxu0 0.0
    %3463 = vmatprep.subr.mxu0 0.0
    %3464 = vmatpush2.msra.mxu0 0.0
    %3465 = vmatprep.subr.mxu0 0.0
    %3466 = vmatpush2.msra.mxu0 0.0
    %3467 = vmatprep.subr.mxu0 0.0
    %3468 = vmatpush2.msra.mxu0 0.0
    %3469 = vmatprep.subr.mxu0 0.0
    %3470 = vmatpush2.msra.mxu0 0.0
    %3471 = vmatprep.subr.mxu0 0.0
    %3472 = vmatpush2.msra.mxu0 0.0
    %3473 = vmatprep.subr.mxu0 0.0
    %3474 = vmatpush2.msra.mxu0 0.0
    %3475 = vmatprep.subr.mxu0 0.0
    %3476 = vmatpush2.msra.mxu0 0.0
    %3477 = vmatprep.subr.mxu0 0.0
    %3478 = vmatpush2.msra.mxu0 0.0
    %3479 = vmatprep.subr.mxu0 0.0
    %3480 = vmatpush2.msra.mxu0 0.0
    %3481 = vmatprep.mubr.f32.mxu0 0.0
    %3482 = vmatmul.mubr.f32.gmra.mxu0 %v3409
    %v3483 = vpop.f32.mrf.mxu0
    %v3484 = vadd.f32 0.0, %v3483
    %v3485 = vpop.f32.mrf.mxu0
    %3486 = vmatprep.mubr.f32.mxu0 0.0
    %3487 = vmatmul.mubr.f32.gmra.mxu0 %v3411
    %v3488 = vpop.f32.mrf.mxu0
    %v3489 = vadd.f32 0.0, %v3488
    %v3490 = vpop.f32.mrf.mxu0
    %3491 = vmatprep.mubr.f32.mxu0 0.0
    %3492 = vmatmul.mubr.f32.gmra.mxu0 %v3413
    %v3493 = vpop.f32.mrf.mxu0
    %v3494 = vadd.f32 0.0, %v3493
    %v3495 = vpop.f32.mrf.mxu0
    %3496 = vmatprep.mubr.f32.mxu0 0.0
    %3497 = vmatmul.mubr.f32.gmra.mxu0 %v3415
    %v3498 = vpop.f32.mrf.mxu0
    %v3499 = vadd.f32 0.0, %v3498
    %v3500 = vpop.f32.mrf.mxu0
    %3501 = vdwg.mxu0
    %3506 = vrot.lane.b32.xlu0 %v1994, 16
    %v3507 = vpop.permute.xlu0 %3506
    %3508 = vrot.lane.b32.xlu0 %v1999, 16
    %v3509 = vpop.permute.xlu0 %3508
    %3510 = vrot.lane.b32.xlu0 %v2004, 16
    %v3511 = vpop.permute.xlu0 %3510
    %3512 = vrot.lane.b32.xlu0 %v2009, 16
    %v3513 = vpop.permute.xlu0 %3512
    %3522 = vrot.lane.b32.xlu0 %v2101, 32
    %v3523 = vpop.permute.xlu0 %3522
    %3524 = vrot.lane.b32.xlu0 %v2106, 32
    %v3525 = vpop.permute.xlu0 %3524
    %3526 = vrot.lane.b32.xlu0 %v2111, 32
    %v3527 = vpop.permute.xlu0 %3526
    %3528 = vrot.lane.b32.xlu0 %v2116, 32
    %v3529 = vpop.permute.xlu0 %3528
    %3538 = vrot.lane.b32.xlu0 %v2208, 48
    %v3539 = vpop.permute.xlu0 %3538
    %3540 = vrot.lane.b32.xlu0 %v2213, 48
    %v3541 = vpop.permute.xlu0 %3540
    %3542 = vrot.lane.b32.xlu0 %v2218, 48
    %v3543 = vpop.permute.xlu0 %3542
    %3544 = vrot.lane.b32.xlu0 %v2223, 48
    %v3545 = vpop.permute.xlu0 %3544
    %3554 = vrot.lane.b32.xlu0 %v2315, 64
    %v3555 = vpop.permute.xlu0 %3554
    %3556 = vrot.lane.b32.xlu0 %v2320, 64
    %v3557 = vpop.permute.xlu0 %3556
    %3558 = vrot.lane.b32.xlu0 %v2325, 64
    %v3559 = vpop.permute.xlu0 %3558
    %3560 = vrot.lane.b32.xlu0 %v2330, 64
    %v3561 = vpop.permute.xlu0 %3560
    %3570 = vrot.lane.b32.xlu0 %v2422, 80
    %v3571 = vpop.permute.xlu0 %3570
    %3572 = vrot.lane.b32.xlu0 %v2427, 80
    %v3573 = vpop.permute.xlu0 %3572
    %3574 = vrot.lane.b32.xlu0 %v2432, 80
    %v3575 = vpop.permute.xlu0 %3574
    %3576 = vrot.lane.b32.xlu0 %v2437, 80
    %v3577 = vpop.permute.xlu0 %3576
    %3586 = vrot.lane.b32.xlu0 %v2529, 96
    %v3587 = vpop.permute.xlu0 %3586
    %3588 = vrot.lane.b32.xlu0 %v2534, 96
    %v3589 = vpop.permute.xlu0 %3588
    %3590 = vrot.lane.b32.xlu0 %v2539, 96
    %v3591 = vpop.permute.xlu0 %3590
    %3592 = vrot.lane.b32.xlu0 %v2544, 96
    %v3593 = vpop.permute.xlu0 %3592
    %3602 = vrot.lane.b32.xlu0 %v2636, 112
    %v3603 = vpop.permute.xlu0 %3602
    %3604 = vrot.lane.b32.xlu0 %v2641, 112
    %v3605 = vpop.permute.xlu0 %3604
    %3606 = vrot.lane.b32.xlu0 %v2646, 112
    %v3607 = vpop.permute.xlu0 %3606
    %3608 = vrot.lane.b32.xlu0 %v2651, 112
    %v3609 = vpop.permute.xlu0 %3608
    %3618 = vrot.lane.b32.xlu0 %v2842, 16
    %v3619 = vpop.permute.xlu0 %3618
    %3620 = vrot.lane.b32.xlu0 %v2847, 16
    %v3621 = vpop.permute.xlu0 %3620
    %3622 = vrot.lane.b32.xlu0 %v2852, 16
    %v3623 = vpop.permute.xlu0 %3622
    %3624 = vrot.lane.b32.xlu0 %v2857, 16
    %v3625 = vpop.permute.xlu0 %3624
    %3634 = vrot.lane.b32.xlu0 %v2949, 32
    %v3635 = vpop.permute.xlu0 %3634
    %3636 = vrot.lane.b32.xlu0 %v2954, 32
    %v3637 = vpop.permute.xlu0 %3636
    %3638 = vrot.lane.b32.xlu0 %v2959, 32
    %v3639 = vpop.permute.xlu0 %3638
    %3640 = vrot.lane.b32.xlu0 %v2964, 32
    %v3641 = vpop.permute.xlu0 %3640
    %3650 = vrot.lane.b32.xlu0 %v3056, 48
    %v3651 = vpop.permute.xlu0 %3650
    %3652 = vrot.lane.b32.xlu0 %v3061, 48
    %v3653 = vpop.permute.xlu0 %3652
    %3654 = vrot.lane.b32.xlu0 %v3066, 48
    %v3655 = vpop.permute.xlu0 %3654
    %3656 = vrot.lane.b32.xlu0 %v3071, 48
    %v3657 = vpop.permute.xlu0 %3656
    %3666 = vrot.lane.b32.xlu0 %v3163, 64
    %v3667 = vpop.permute.xlu0 %3666
    %3668 = vrot.lane.b32.xlu0 %v3168, 64
    %v3669 = vpop.permute.xlu0 %3668
    %3670 = vrot.lane.b32.xlu0 %v3173, 64
    %v3671 = vpop.permute.xlu0 %3670
    %3672 = vrot.lane.b32.xlu0 %v3178, 64
    %v3673 = vpop.permute.xlu0 %3672
    %3682 = vrot.lane.b32.xlu0 %v3270, 80
    %v3683 = vpop.permute.xlu0 %3682
    %3684 = vrot.lane.b32.xlu0 %v3275, 80
    %v3685 = vpop.permute.xlu0 %3684
    %3686 = vrot.lane.b32.xlu0 %v3280, 80
    %v3687 = vpop.permute.xlu0 %3686
    %3688 = vrot.lane.b32.xlu0 %v3285, 80
    %v3689 = vpop.permute.xlu0 %3688
    %3698 = vrot.lane.b32.xlu0 %v3377, 96
    %v3699 = vpop.permute.xlu0 %3698
    %3700 = vrot.lane.b32.xlu0 %v3382, 96
    %v3701 = vpop.permute.xlu0 %3700
    %3702 = vrot.lane.b32.xlu0 %v3387, 96
    %v3703 = vpop.permute.xlu0 %3702
    %3704 = vrot.lane.b32.xlu0 %v3392, 96
    %v3705 = vpop.permute.xlu0 %3704
    %3714 = vrot.lane.b32.xlu0 %v3484, 112
    %v3715 = vpop.permute.xlu0 %3714
    %3716 = vrot.lane.b32.xlu0 %v3489, 112
    %v3717 = vpop.permute.xlu0 %3716
    %3718 = vrot.lane.b32.xlu0 %v3494, 112
    %v3719 = vpop.permute.xlu0 %3718
    %3720 = vrot.lane.b32.xlu0 %v3499, 112
    %v3721 = vpop.permute.xlu0 %3720
    %v3726 = vsel %vm166, %v1885, %v3507
    %v3727 = vsel %vm166, %v1890, %v3509
    %v3728 = vsel %vm166, %v1895, %v3511
    %v3729 = vsel %vm166, %v1900, %v3513
    %v3730 = vsel %vm28, %v3726, %v3523
    %v3731 = vsel %vm28, %v3727, %v3525
    %v3732 = vsel %vm28, %v3728, %v3527
    %v3733 = vsel %vm28, %v3729, %v3529
    %v3734 = vsel %vm1731, %v3730, %v3539
    %v3735 = vsel %vm1731, %v3731, %v3541
    %v3736 = vsel %vm1731, %v3732, %v3543
    %v3737 = vsel %vm1731, %v3733, %v3545
    %v3738 = vsel %vm1734, %v3734, %v3555
    %v3739 = vsel %vm1734, %v3735, %v3557
    %v3740 = vsel %vm1734, %v3736, %v3559
    %v3741 = vsel %vm1734, %v3737, %v3561
    %v3742 = vsel %vm1737, %v3738, %v3571
    %v3743 = vsel %vm1737, %v3739, %v3573
    %v3744 = vsel %vm1737, %v3740, %v3575
    %v3745 = vsel %vm1737, %v3741, %v3577
    %v3746 = vsel %vm1740, %v3742, %v3587
    %v3747 = vsel %vm1740, %v3743, %v3589
    %v3748 = vsel %vm1740, %v3744, %v3591
    %v3749 = vsel %vm1740, %v3745, %v3593
    %v3750 = vsel %vm1743, %v3746, %v3603
    %v3751 = vsel %vm1743, %v3747, %v3605
    %v3752 = vsel %vm1743, %v3748, %v3607
    %v3753 = vsel %vm1743, %v3749, %v3609
    %v3754 = vsel %vm166, %v2733, %v3619
    %v3755 = vsel %vm166, %v2738, %v3621
    %v3756 = vsel %vm166, %v2743, %v3623
    %v3757 = vsel %vm166, %v2748, %v3625
    %v3758 = vsel %vm28, %v3754, %v3635
    %v3759 = vsel %vm28, %v3755, %v3637
    %v3760 = vsel %vm28, %v3756, %v3639
    %v3761 = vsel %vm28, %v3757, %v3641
    %v3762 = vsel %vm1731, %v3758, %v3651
    %v3763 = vsel %vm1731, %v3759, %v3653
    %v3764 = vsel %vm1731, %v3760, %v3655
    %v3765 = vsel %vm1731, %v3761, %v3657
    %v3766 = vsel %vm1734, %v3762, %v3667
    %v3767 = vsel %vm1734, %v3763, %v3669
    %v3768 = vsel %vm1734, %v3764, %v3671
    %v3769 = vsel %vm1734, %v3765, %v3673
    %v3770 = vsel %vm1737, %v3766, %v3683
    %v3771 = vsel %vm1737, %v3767, %v3685
    %v3772 = vsel %vm1737, %v3768, %v3687
    %v3773 = vsel %vm1737, %v3769, %v3689
    %v3774 = vsel %vm1740, %v3770, %v3699
    %v3775 = vsel %vm1740, %v3771, %v3701
    %v3776 = vsel %vm1740, %v3772, %v3703
    %v3777 = vsel %vm1740, %v3773, %v3705
    %v3778 = vsel %vm1743, %v3774, %v3715
    %v3779 = vsel %vm1743, %v3775, %v3717
    %v3780 = vsel %vm1743, %v3776, %v3719
    %v3781 = vsel %vm1743, %v3777, %v3721
    %3782 = vst [vmem:[#allocation2] sm:$0xff] %v3750
    %3783 = vst [vmem:[#allocation2 + $0x8] sm:$0xff] %v3778
    %3784 = vst [vmem:[#allocation2 + $0x10] sm:$0xff] %v3751
    %3785 = vst [vmem:[#allocation2 + $0x18] sm:$0xff] %v3779
    %3786 = vst [vmem:[#allocation2 + $0x20] sm:$0xff] %v3752
    %3787 = vst [vmem:[#allocation2 + $0x28] sm:$0xff] %v3780
    %3788 = vst [vmem:[#allocation2 + $0x30] sm:$0xff] %v3753
    %3789 = vst [vmem:[#allocation2 + $0x38] sm:$0xff] %v3781
    // Predicated region
    $region10: #{tpu_custom_call.1} parent=1 // pred_check
      _
    $region11: #{tpu_custom_call.1} parent=1 // pred_check_branch
      %3791 = sbr.rel (0) target = $region13
    $region12: #{tpu_custom_call.1} parent=1 // pred_region
      %s3793 = ssub.s32 1024, 1024
      %3794 = vsyncadd [#allocation3], %s3793
      %s3795 = sshll.u32 [#allocation2], 4
      %s3796 = int_to_ptr.vmem [resolvable:$true] %s3795
      %3801 = dma.vmem_to_hbm [thread:$0]  %s3796, 1024, %s2, [#allocation3], 256, 256, 16
    $region13: #{tpu_custom_call.1} parent=1 // pred_fallthru
      _
    // Predicated region
    $region14: #{tpu_custom_call.1} parent=1 // pred_check
      _
    $region15: #{tpu_custom_call.1} parent=1 // pred_check_branch
      %3803 = sbr.rel (0) target = $region17
    $region16: #{tpu_custom_call.1} parent=1 // pred_region
      %3804 = dma.done [#allocation3], 1024
    $region17: #{tpu_custom_call.1} parent=1 // pred_fallthru
      _
    %3805 = vsyncpa [#allocation3], 1

</llo_original>
